<compile_context>
chip_gen: v7x
topology: tpu7x:2x2x1
jax: 0.10.0
libtpu: 0.0.40
codegen_flags: <defaults>
</compile_context>

<pallas_src>
import jax
import jax.numpy as jnp
from jax.experimental import pallas as pl
from jax.experimental.pallas import tpu as pltpu


def single_layer_kernel(scale_ref, bias_ref, x_ref, w_ref, out_ref, yp_ref):
    """Single grid step over the whole (small) batch.

    scale_ref, bias_ref : [1, 1, C] f32     folded BatchNorm affine
    x_ref               : [N, H, W, C]
    w_ref               : [9*C, G]          im2col-reshaped conv weight
    out_ref             : [N, H, W, C+G]
    yp_ref   (scratch)  : [N, H+2, W+2, C]  padded post-BN/ReLU activations
    """
    N, H, W, C = x_ref.shape
    G = w_ref.shape[1]

    x = x_ref[...]                                               # [N, H, W, C]

    # Folded BatchNorm + ReLU in f32 on the VPU.
    y = jnp.maximum(x.astype(jnp.float32) * scale_ref[...] + bias_ref[...], 0.0)

    # Persistent VMEM scratch for zero-padding: zero only the halo rows/cols,
    # write the interior exactly once (cast to the matmul dtype here).
    cdt = yp_ref.dtype
    yp_ref[:, 0:1, :, :] = jnp.zeros((N, 1, W + 2, C), dtype=cdt)
    yp_ref[:, H + 1:H + 2, :, :] = jnp.zeros((N, 1, W + 2, C), dtype=cdt)
    yp_ref[:, :, 0:1, :] = jnp.zeros((N, H + 2, 1, C), dtype=cdt)
    yp_ref[:, :, W + 1:W + 2, :] = jnp.zeros((N, H + 2, 1, C), dtype=cdt)
    yp_ref[:, 1:H + 1, 1:W + 1, :] = y.astype(cdt)

    # im2col: 9 shifted [N, H, W, C] views concatenated along channels, then a
    # single MXU matmul against the [9C, G] weight with f32 accumulation.
    taps = [yp_ref[:, dy:dy + H, dx:dx + W, :]
            for dy in range(3) for dx in range(3)]
    patches = jnp.concatenate(taps, axis=-1).reshape(N * H * W, 9 * C)
    acc = jnp.dot(patches, w_ref[...], preferred_element_type=jnp.float32)
    conv = acc.reshape(N, H, W, G).astype(out_ref.dtype)

    # Channel concat without a materialized temporary: two sub-slice stores.
    out_ref[:, :, :, :C] = x
    out_ref[:, :, :, C:] = conv


def single_layer(x_nchw, gamma, beta, w_oihw, eps=1e-5, *,
                 matmul_dtype=jnp.float32):
    """Pallas SingleLayer.forward (training-mode BN, biased batch variance)."""
    N, C, H, W = x_nchw.shape
    G = w_oihw.shape[0]

    # One NCHW -> NHWC transpose; BN batch stats computed on the NHWC tensor
    # (reduce over axes (0,1,2)), folded to scale/bias in f32.
    x = jnp.transpose(x_nchw, (0, 2, 3, 1))                      # [N, H, W, C]
    xf = x.astype(jnp.float32)
    mean = jnp.mean(xf, axis=(0, 1, 2))
    var = jnp.mean(jnp.square(xf - mean), axis=(0, 1, 2))        # biased var
    inv = gamma.astype(jnp.float32) * jax.lax.rsqrt(var + eps)
    scale = inv.reshape(1, 1, C)
    bias = (beta.astype(jnp.float32) - mean * inv).reshape(1, 1, C)

    # OIHW -> (ky, kx, C, G) -> [9C, G]: im2col weight, reshaped HBM-side.
    w = jnp.transpose(w_oihw, (2, 3, 1, 0)).reshape(9 * C, G).astype(matmul_dtype)

    out_dtype = x.dtype
    cost = pl.CostEstimate(
        flops=2 * N * H * W * 9 * C * G,
        transcendentals=0,
        bytes_accessed=(x.size * x.dtype.itemsize
                        + w.size * w.dtype.itemsize
                        + 2 * C * 4
                        + N * H * W * (C + G) * jnp.dtype(out_dtype).itemsize),
    )

    out_nhwc = pl.pallas_call(
        single_layer_kernel,
        out_shape=jax.ShapeDtypeStruct((N, H, W, C + G), out_dtype),
        grid_spec=pltpu.PrefetchScalarGridSpec(
            num_scalar_prefetch=0,
            grid=(1,),                                  # whole batch, one step
            in_specs=[
                pl.BlockSpec((1, 1, C), lambda i: (0, 0, 0)),          # scale
                pl.BlockSpec((1, 1, C), lambda i: (0, 0, 0)),          # bias
                pl.BlockSpec((N, H, W, C), lambda i: (0, 0, 0, 0)),    # x
                pl.BlockSpec((9 * C, G), lambda i: (0, 0)),            # weight
            ],
            out_specs=pl.BlockSpec((N, H, W, C + G), lambda i: (0, 0, 0, 0)),
            scratch_shapes=[pltpu.VMEM((N, H + 2, W + 2, C), matmul_dtype)],
        ),
        compiler_params=pltpu.CompilerParams(
            dimension_semantics=("arbitrary",),
            vmem_limit_bytes=32 * 1024 * 1024,
        ),
        cost_estimate=cost,
    )(scale, bias, x, w)

    # TODO(synk): for production DenseNet shapes (H=W>=112, C>=64) tile the grid
    # over H with a +2-row halo and re-budget vmem_limit_bytes for v7x (64 MiB
    # VMEM); in a full DenseNet stack, return (x, new_features) and keep NHWC
    # end-to-end to drop the transposes and the re-written concat prefix.
    return jnp.transpose(out_nhwc, (0, 3, 1, 2))                 # NHWC -> NCHW


def reference(x, gamma, beta, w, eps=1e-5):
    """Pure-JAX reference mirroring the PyTorch forward (training-mode BN)."""
    mean = jnp.mean(x, axis=(0, 2, 3), keepdims=True)
    var = jnp.mean((x - mean) ** 2, axis=(0, 2, 3), keepdims=True)
    xhat = (x - mean) / jnp.sqrt(var + eps)
    y = jax.nn.relu(xhat * gamma[None, :, None, None] + beta[None, :, None, None])
    conv = jax.lax.conv_general_dilated(
        y, w, window_strides=(1, 1), padding=((1, 1), (1, 1)),
        dimension_numbers=("NCHW", "OIHW", "NCHW"))
    return jnp.concatenate([x, conv], axis=1)


if __name__ == "__main__":
    # Small, deterministic problem: nChannels=4, growthRate=8, batch=2, 16x16.
    N, C, H, W, G = 2, 4, 16, 16, 8

    key = jax.random.PRNGKey(0)
    kx, kg, kb, kw = jax.random.split(key, 4)
    x = jax.random.normal(kx, (N, C, H, W), dtype=jnp.float32)
    gamma = 1.0 + 0.1 * jax.random.normal(kg, (C,), dtype=jnp.float32)
    beta = 0.1 * jax.random.normal(kb, (C,), dtype=jnp.float32)
    # conv1 weight: [growthRate, nChannels, 3, 3], no bias.
    w = jax.random.normal(kw, (G, C, 3, 3), dtype=jnp.float32) * (
        1.0 / jnp.sqrt(9.0 * C))

    ref = jax.block_until_ready(reference(x, gamma, beta, w))

    # f32 MXU path: exact to reference.
    out = jax.block_until_ready(single_layer(x, gamma, beta, w))
    assert out.shape == (N, C + G, H, W), out.shape
    assert jnp.allclose(out, ref, atol=1e-4, rtol=1e-4), (
        float(jnp.max(jnp.abs(out - ref))))

    # bf16 MXU inputs (v6e/v7x fast path), f32 accumulation: relaxed tolerance.
    out_bf16 = jax.block_until_ready(
        single_layer(x, gamma, beta, w, matmul_dtype=jnp.bfloat16))
    assert out_bf16.shape == (N, C + G, H, W), out_bf16.shape
    assert jnp.allclose(out_bf16, ref, atol=5e-2, rtol=5e-2), (
        float(jnp.max(jnp.abs(out_bf16 - ref))))

    print("KERNEL_OK")
</pallas_src>

<mosaic_0001>
module attributes {stable_mosaic.version = 11 : i64} {
  func.func @single_layer_kernel(%arg0: i32, %arg1: memref<1x1x4xf32, #tpu.memory_space<vmem>>, %arg2: memref<1x1x4xf32, #tpu.memory_space<vmem>>, %arg3: memref<2x16x16x4xf32, #tpu.memory_space<vmem>>, %arg4: memref<36x8xf32, #tpu.memory_space<vmem>>, %arg5: memref<2x16x16x12xf32, #tpu.memory_space<vmem>>, %arg6: memref<2x18x18x4xf32, #tpu.memory_space<vmem>>) attributes {dimension_semantics = [#tpu.dimension_semantics<arbitrary>], iteration_bounds = array<i64: 1>, scalar_prefetch = 0 : i64, scratch_operands = 1 : i64, tpu.core_type = #tpu.core_type<tc>, window_params = [{pipeline_mode = #tpu.pipeline_mode<synchronous>, transform_indices = @transform_0, window_bounds = array<i64: 1, 1, 4>}, {pipeline_mode = #tpu.pipeline_mode<synchronous>, transform_indices = @transform_1, window_bounds = array<i64: 1, 1, 4>}, {pipeline_mode = #tpu.pipeline_mode<synchronous>, transform_indices = @transform_2, window_bounds = array<i64: 2, 16, 16, 4>}, {pipeline_mode = #tpu.pipeline_mode<synchronous>, transform_indices = @transform_3, window_bounds = array<i64: 36, 8>}, {pipeline_mode = #tpu.pipeline_mode<synchronous>, transform_indices = @transform_4, window_bounds = array<i64: 2, 16, 16, 12>}]} {
    %c0 = arith.constant 0 : index
    %c0_0 = arith.constant 0 : index
    %c0_1 = arith.constant 0 : index
    %c0_2 = arith.constant 0 : index
    %0 = vector.load %arg3[%c0, %c0_0, %c0_1, %c0_2] : memref<2x16x16x4xf32, #tpu.memory_space<vmem>>, vector<2x16x16x4xf32>
    %c0_3 = arith.constant 0 : index
    %c0_4 = arith.constant 0 : index
    %c0_5 = arith.constant 0 : index
    %1 = vector.load %arg1[%c0_3, %c0_4, %c0_5] : memref<1x1x4xf32, #tpu.memory_space<vmem>>, vector<1x1x4xf32>
    %2 = vector.shape_cast %1 : vector<1x1x4xf32> to vector<1x1x1x4xf32>
    %3 = vector.broadcast %2 : vector<1x1x1x4xf32> to vector<2x16x16x4xf32>
    %4 = arith.mulf %0, %3 : vector<2x16x16x4xf32>
    %c0_6 = arith.constant 0 : index
    %c0_7 = arith.constant 0 : index
    %c0_8 = arith.constant 0 : index
    %5 = vector.load %arg2[%c0_6, %c0_7, %c0_8] : memref<1x1x4xf32, #tpu.memory_space<vmem>>, vector<1x1x4xf32>
    %6 = vector.shape_cast %5 : vector<1x1x4xf32> to vector<1x1x1x4xf32>
    %7 = vector.broadcast %6 : vector<1x1x1x4xf32> to vector<2x16x16x4xf32>
    %8 = arith.addf %4, %7 : vector<2x16x16x4xf32>
    %cst = arith.constant 0.000000e+00 : f32
    %9 = vector.broadcast %cst : f32 to vector<2x16x16x4xf32>
    %10 = arith.maximumf %8, %9 : vector<2x16x16x4xf32>
    %cst_9 = arith.constant 0.000000e+00 : f32
    %11 = vector.broadcast %cst_9 : f32 to vector<2x1x18x4xf32>
    %c0_10 = arith.constant 0 : index
    %c0_11 = arith.constant 0 : index
    %c0_12 = arith.constant 0 : index
    %c0_13 = arith.constant 0 : index
    %12 = vector.load %arg6[%c0_10, %c0_11, %c0_12, %c0_13] : memref<2x18x18x4xf32, #tpu.memory_space<vmem>>, vector<2x1x18x4xf32>
    tpu.vector_store %arg6[%c0_10, %c0_11, %c0_12, %c0_13], %11 {strides = array<i32>} : memref<2x18x18x4xf32, #tpu.memory_space<vmem>>, vector<2x1x18x4xf32>,
    %cst_14 = arith.constant 0.000000e+00 : f32
    %13 = vector.broadcast %cst_14 : f32 to vector<2x1x18x4xf32>
    %c0_15 = arith.constant 0 : index
    %c17 = arith.constant 17 : index
    %c0_16 = arith.constant 0 : index
    %c0_17 = arith.constant 0 : index
    %14 = vector.load %arg6[%c0_15, %c17, %c0_16, %c0_17] : memref<2x18x18x4xf32, #tpu.memory_space<vmem>>, vector<2x1x18x4xf32>
    tpu.vector_store %arg6[%c0_15, %c17, %c0_16, %c0_17], %13 {strides = array<i32>} : memref<2x18x18x4xf32, #tpu.memory_space<vmem>>, vector<2x1x18x4xf32>,
    %cst_18 = arith.constant 0.000000e+00 : f32
    %15 = vector.broadcast %cst_18 : f32 to vector<2x18x1x4xf32>
    %c0_19 = arith.constant 0 : index
    %c0_20 = arith.constant 0 : index
    %c0_21 = arith.constant 0 : index
    %c0_22 = arith.constant 0 : index
    %16 = vector.load %arg6[%c0_19, %c0_20, %c0_21, %c0_22] : memref<2x18x18x4xf32, #tpu.memory_space<vmem>>, vector<2x18x1x4xf32>
    tpu.vector_store %arg6[%c0_19, %c0_20, %c0_21, %c0_22], %15 {strides = array<i32>} : memref<2x18x18x4xf32, #tpu.memory_space<vmem>>, vector<2x18x1x4xf32>,
    %cst_23 = arith.constant 0.000000e+00 : f32
    %17 = vector.broadcast %cst_23 : f32 to vector<2x18x1x4xf32>
    %c0_24 = arith.constant 0 : index
    %c0_25 = arith.constant 0 : index
    %c17_26 = arith.constant 17 : index
    %c0_27 = arith.constant 0 : index
    %18 = vector.load %arg6[%c0_24, %c0_25, %c17_26, %c0_27] : memref<2x18x18x4xf32, #tpu.memory_space<vmem>>, vector<2x18x1x4xf32>
    tpu.vector_store %arg6[%c0_24, %c0_25, %c17_26, %c0_27], %17 {strides = array<i32>} : memref<2x18x18x4xf32, #tpu.memory_space<vmem>>, vector<2x18x1x4xf32>,
    %c0_28 = arith.constant 0 : index
    %c1 = arith.constant 1 : index
    %c1_29 = arith.constant 1 : index
    %c0_30 = arith.constant 0 : index
    %19 = vector.load %arg6[%c0_28, %c1, %c1_29, %c0_30] : memref<2x18x18x4xf32, #tpu.memory_space<vmem>>, vector<2x16x16x4xf32>
    tpu.vector_store %arg6[%c0_28, %c1, %c1_29, %c0_30], %10 {strides = array<i32>} : memref<2x18x18x4xf32, #tpu.memory_space<vmem>>, vector<2x16x16x4xf32>,
    %c0_31 = arith.constant 0 : index
    %c0_32 = arith.constant 0 : index
    %c0_33 = arith.constant 0 : index
    %c0_34 = arith.constant 0 : index
    %20 = vector.load %arg6[%c0_31, %c0_32, %c0_33, %c0_34] : memref<2x18x18x4xf32, #tpu.memory_space<vmem>>, vector<2x16x16x4xf32>
    %c0_35 = arith.constant 0 : index
    %c0_36 = arith.constant 0 : index
    %c1_37 = arith.constant 1 : index
    %c0_38 = arith.constant 0 : index
    %21 = vector.load %arg6[%c0_35, %c0_36, %c1_37, %c0_38] : memref<2x18x18x4xf32, #tpu.memory_space<vmem>>, vector<2x16x16x4xf32>
    %c0_39 = arith.constant 0 : index
    %c0_40 = arith.constant 0 : index
    %c2 = arith.constant 2 : index
    %c0_41 = arith.constant 0 : index
    %22 = vector.load %arg6[%c0_39, %c0_40, %c2, %c0_41] : memref<2x18x18x4xf32, #tpu.memory_space<vmem>>, vector<2x16x16x4xf32>
    %c0_42 = arith.constant 0 : index
    %c1_43 = arith.constant 1 : index
    %c0_44 = arith.constant 0 : index
    %c0_45 = arith.constant 0 : index
    %23 = vector.load %arg6[%c0_42, %c1_43, %c0_44, %c0_45] : memref<2x18x18x4xf32, #tpu.memory_space<vmem>>, vector<2x16x16x4xf32>
    %c0_46 = arith.constant 0 : index
    %c1_47 = arith.constant 1 : index
    %c1_48 = arith.constant 1 : index
    %c0_49 = arith.constant 0 : index
    %24 = vector.load %arg6[%c0_46, %c1_47, %c1_48, %c0_49] : memref<2x18x18x4xf32, #tpu.memory_space<vmem>>, vector<2x16x16x4xf32>
    %c0_50 = arith.constant 0 : index
    %c1_51 = arith.constant 1 : index
    %c2_52 = arith.constant 2 : index
    %c0_53 = arith.constant 0 : index
    %25 = vector.load %arg6[%c0_50, %c1_51, %c2_52, %c0_53] : memref<2x18x18x4xf32, #tpu.memory_space<vmem>>, vector<2x16x16x4xf32>
    %c0_54 = arith.constant 0 : index
    %c2_55 = arith.constant 2 : index
    %c0_56 = arith.constant 0 : index
    %c0_57 = arith.constant 0 : index
    %26 = vector.load %arg6[%c0_54, %c2_55, %c0_56, %c0_57] : memref<2x18x18x4xf32, #tpu.memory_space<vmem>>, vector<2x16x16x4xf32>
    %c0_58 = arith.constant 0 : index
    %c2_59 = arith.constant 2 : index
    %c1_60 = arith.constant 1 : index
    %c0_61 = arith.constant 0 : index
    %27 = vector.load %arg6[%c0_58, %c2_59, %c1_60, %c0_61] : memref<2x18x18x4xf32, #tpu.memory_space<vmem>>, vector<2x16x16x4xf32>
    %c0_62 = arith.constant 0 : index
    %c2_63 = arith.constant 2 : index
    %c2_64 = arith.constant 2 : index
    %c0_65 = arith.constant 0 : index
    %28 = vector.load %arg6[%c0_62, %c2_63, %c2_64, %c0_65] : memref<2x18x18x4xf32, #tpu.memory_space<vmem>>, vector<2x16x16x4xf32>
    %29 = tpu.concatenate %20, %21, %22, %23, %24, %25, %26, %27, %28 in 3 : vector<2x16x16x4xf32>, vector<2x16x16x4xf32>, vector<2x16x16x4xf32>, vector<2x16x16x4xf32>, vector<2x16x16x4xf32>, vector<2x16x16x4xf32>, vector<2x16x16x4xf32>, vector<2x16x16x4xf32>, vector<2x16x16x4xf32> -> vector<2x16x16x36xf32>
    %30 = vector.shape_cast %29 : vector<2x16x16x36xf32> to vector<512x36xf32>
    %c0_66 = arith.constant 0 : index
    %c0_67 = arith.constant 0 : index
    %31 = vector.load %arg4[%c0_66, %c0_67] : memref<36x8xf32, #tpu.memory_space<vmem>>, vector<36x8xf32>
    %cst_68 = arith.constant dense<0.000000e+00> : vector<512x8xf32>
    %32 = tpu.matmul %30, %31, %cst_68 {dimension_numbers = #tpu.dot_dimension_numbers<[1], [0], [0], [1], [0, 0, 1, 1], [], []>} : vector<512x36xf32>, vector<36x8xf32>, vector<512x8xf32> -> vector<512x8xf32>
    %33 = vector.shape_cast %32 : vector<512x8xf32> to vector<2x16x16x8xf32>
    %c0_69 = arith.constant 0 : index
    %c0_70 = arith.constant 0 : index
    %c0_71 = arith.constant 0 : index
    %c0_72 = arith.constant 0 : index
    %34 = vector.load %arg5[%c0_69, %c0_70, %c0_71, %c0_72] : memref<2x16x16x12xf32, #tpu.memory_space<vmem>>, vector<2x16x16x4xf32>
    tpu.vector_store %arg5[%c0_69, %c0_70, %c0_71, %c0_72], %0 {strides = array<i32>} : memref<2x16x16x12xf32, #tpu.memory_space<vmem>>, vector<2x16x16x4xf32>,
    %c0_73 = arith.constant 0 : index
    %c0_74 = arith.constant 0 : index
    %c0_75 = arith.constant 0 : index
    %c4 = arith.constant 4 : index
    %35 = vector.load %arg5[%c0_73, %c0_74, %c0_75, %c4] : memref<2x16x16x12xf32, #tpu.memory_space<vmem>>, vector<2x16x16x8xf32>
    tpu.vector_store %arg5[%c0_73, %c0_74, %c0_75, %c4], %33 {strides = array<i32>} : memref<2x16x16x12xf32, #tpu.memory_space<vmem>>, vector<2x16x16x8xf32>,
    return
  }
  func.func @transform_0(%arg0: i32) -> (i32, i32, i32) {
    %c0_i32 = arith.constant 0 : i32
    %c0_i32_0 = arith.constant 0 : i32
    %c0_i32_1 = arith.constant 0 : i32
    %c0_i32_2 = arith.constant 0 : i32
    return %c0_i32, %c0_i32_0, %c0_i32_1 : i32, i32, i32
  }
  func.func @transform_1(%arg0: i32) -> (i32, i32, i32) {
    %c0_i32 = arith.constant 0 : i32
    %c0_i32_0 = arith.constant 0 : i32
    %c0_i32_1 = arith.constant 0 : i32
    %c0_i32_2 = arith.constant 0 : i32
    return %c0_i32, %c0_i32_0, %c0_i32_1 : i32, i32, i32
  }
  func.func @transform_2(%arg0: i32) -> (i32, i32, i32, i32) {
    %c0_i32 = arith.constant 0 : i32
    %c0_i32_0 = arith.constant 0 : i32
    %c0_i32_1 = arith.constant 0 : i32
    %c0_i32_2 = arith.constant 0 : i32
    %c0_i32_3 = arith.constant 0 : i32
    return %c0_i32, %c0_i32_0, %c0_i32_1, %c0_i32_2 : i32, i32, i32, i32
  }
  func.func @transform_3(%arg0: i32) -> (i32, i32) {
    %c0_i32 = arith.constant 0 : i32
    %c0_i32_0 = arith.constant 0 : i32
    %c0_i32_1 = arith.constant 0 : i32
    return %c0_i32, %c0_i32_0 : i32, i32
  }
  func.func @transform_4(%arg0: i32) -> (i32, i32, i32, i32) {
    %c0_i32 = arith.constant 0 : i32
    %c0_i32_0 = arith.constant 0 : i32
    %c0_i32_1 = arith.constant 0 : i32
    %c0_i32_2 = arith.constant 0 : i32
    %c0_i32_3 = arith.constant 0 : i32
    return %c0_i32, %c0_i32_0, %c0_i32_1, %c0_i32_2 : i32, i32, i32, i32
  }
}

</mosaic_0001>

<llo_original>
// kernel: tpu_custom_call.1
$region0: #{tpu_custom_call.1}
  #allocation0 [shape = 'u32[]', space=smem, size = 0x4, offset = 0x4, fixed_abs, tag = 'smem constant byte address 0x4 - core index']
  #allocation1 [shape = 'u32[144,128]{1,0:T(1,128)}', space=vmem, size = 0x12000, scoped, tag = 'internal scratch']
  #allocation2 [shape = 'f32[2,18,18,4]{3,2,1,0:T(8,128)}', space=vmem, size = 0x6c000, scoped, tag = 'scratch operand']
  %s0 = inlined_call_operand.vmem [shape: f32[1,1,4], index: 0, kind: input, shape index: {}]
  %s1 = inlined_call_operand.vmem [shape: f32[1,1,4], index: 1, kind: input, shape index: {}]
  %s2 = inlined_call_operand.vmem [shape: f32[2,16,16,4], index: 2, kind: input, shape index: {}]
  %s3 = inlined_call_operand.vmem [shape: f32[36,8], index: 3, kind: input, shape index: {}]
  %s4 = inlined_call_operand.vmem [shape: f32[2,16,16,12], index: 4, kind: output, shape index: {}]
  %s5 = sld [smem:[#allocation0]]
  $region26: #{tpu_custom_call.1} parent=0
    _
  %s7 = ssub.s32 1, %s5
  %s8 = scalar_select 0, %s7, %s5
  // Predicated region
  $region2: #{tpu_custom_call.1} parent=0 // pred_check
    _
  $region3: #{tpu_custom_call.1} parent=0 // pred_check_branch
    %10 = sbr.rel (0) target = $region5
  $region4: #{tpu_custom_call.1} parent=0 // pred_region
    _
  $region5: #{tpu_custom_call.1} parent=0 // pred_fallthru
    _
  // Predicated region
  $region6: #{tpu_custom_call.1} parent=0 // pred_check
    _
  $region7: #{tpu_custom_call.1} parent=0 // pred_check_branch
    %12 = sbr.rel (0) target = $region9
  $region8: #{tpu_custom_call.1} parent=0 // pred_region
    _
  $region9: #{tpu_custom_call.1} parent=0 // pred_fallthru
    _
  // Predicated region
  $region10: #{tpu_custom_call.1} parent=0 // pred_check
    _
  $region11: #{tpu_custom_call.1} parent=0 // pred_check_branch
    %14 = sbr.rel (0) target = $region13
  $region12: #{tpu_custom_call.1} parent=0 // pred_region
    _
  $region13: #{tpu_custom_call.1} parent=0 // pred_fallthru
    _
  // Predicated region
  $region14: #{tpu_custom_call.1} parent=0 // pred_check
    _
  $region15: #{tpu_custom_call.1} parent=0 // pred_check_branch
    %16 = sbr.rel (0) target = $region17
  $region16: #{tpu_custom_call.1} parent=0 // pred_region
    _
  $region17: #{tpu_custom_call.1} parent=0 // pred_fallthru
    _
  %v17 = vld [vmem:[%s2] sm:$0xff]
  %v18 = vld [vmem:[%s2 + $0x8] sm:$0xff]
  %v19 = vld [vmem:[%s2 + $0x10] sm:$0xff]
  %v20 = vld [vmem:[%s2 + $0x18] sm:$0xff]
  %v21 = vld [vmem:[%s2 + $0x20] sm:$0xff]
  %v22 = vld [vmem:[%s2 + $0x28] sm:$0xff]
  %v23 = vld [vmem:[%s2 + $0x30] sm:$0xff]
  %v24 = vld [vmem:[%s2 + $0x38] sm:$0xff]
  %v25 = vld [vmem:[%s2 + $0x40] sm:$0xff]
  %v26 = vld [vmem:[%s2 + $0x48] sm:$0xff]
  %v27 = vld [vmem:[%s2 + $0x50] sm:$0xff]
  %v28 = vld [vmem:[%s2 + $0x58] sm:$0xff]
  %v29 = vld [vmem:[%s2 + $0x60] sm:$0xff]
  %v30 = vld [vmem:[%s2 + $0x68] sm:$0xff]
  %v31 = vld [vmem:[%s2 + $0x70] sm:$0xff]
  %v32 = vld [vmem:[%s2 + $0x78] sm:$0xff]
  %v33 = vld [vmem:[%s2 + $0x80] sm:$0xff]
  %v34 = vld [vmem:[%s2 + $0x88] sm:$0xff]
  %v35 = vld [vmem:[%s2 + $0x90] sm:$0xff]
  %v36 = vld [vmem:[%s2 + $0x98] sm:$0xff]
  %v37 = vld [vmem:[%s2 + $0xa0] sm:$0xff]
  %v38 = vld [vmem:[%s2 + $0xa8] sm:$0xff]
  %v39 = vld [vmem:[%s2 + $0xb0] sm:$0xff]
  %v40 = vld [vmem:[%s2 + $0xb8] sm:$0xff]
  %v41 = vld [vmem:[%s2 + $0xc0] sm:$0xff]
  %v42 = vld [vmem:[%s2 + $0xc8] sm:$0xff]
  %v43 = vld [vmem:[%s2 + $0xd0] sm:$0xff]
  %v44 = vld [vmem:[%s2 + $0xd8] sm:$0xff]
  %v45 = vld [vmem:[%s2 + $0xe0] sm:$0xff]
  %v46 = vld [vmem:[%s2 + $0xe8] sm:$0xff]
  %v47 = vld [vmem:[%s2 + $0xf0] sm:$0xff]
  %v48 = vld [vmem:[%s2 + $0xf8] sm:$0xff]
  %v49 = vld [vmem:[%s2 + $0x100] sm:$0xff]
  %v50 = vld [vmem:[%s2 + $0x108] sm:$0xff]
  %v51 = vld [vmem:[%s2 + $0x110] sm:$0xff]
  %v52 = vld [vmem:[%s2 + $0x118] sm:$0xff]
  %v53 = vld [vmem:[%s2 + $0x120] sm:$0xff]
  %v54 = vld [vmem:[%s2 + $0x128] sm:$0xff]
  %v55 = vld [vmem:[%s2 + $0x130] sm:$0xff]
  %v56 = vld [vmem:[%s2 + $0x138] sm:$0xff]
  %v57 = vld [vmem:[%s2 + $0x140] sm:$0xff]
  %v58 = vld [vmem:[%s2 + $0x148] sm:$0xff]
  %v59 = vld [vmem:[%s2 + $0x150] sm:$0xff]
  %v60 = vld [vmem:[%s2 + $0x158] sm:$0xff]
  %v61 = vld [vmem:[%s2 + $0x160] sm:$0xff]
  %v62 = vld [vmem:[%s2 + $0x168] sm:$0xff]
  %v63 = vld [vmem:[%s2 + $0x170] sm:$0xff]
  %v64 = vld [vmem:[%s2 + $0x178] sm:$0xff]
  %v65 = vld [vmem:[%s2 + $0x180] sm:$0xff]
  %v66 = vld [vmem:[%s2 + $0x188] sm:$0xff]
  %v67 = vld [vmem:[%s2 + $0x190] sm:$0xff]
  %v68 = vld [vmem:[%s2 + $0x198] sm:$0xff]
  %v69 = vld [vmem:[%s2 + $0x1a0] sm:$0xff]
  %v70 = vld [vmem:[%s2 + $0x1a8] sm:$0xff]
  %v71 = vld [vmem:[%s2 + $0x1b0] sm:$0xff]
  %v72 = vld [vmem:[%s2 + $0x1b8] sm:$0xff]
  %v73 = vld [vmem:[%s2 + $0x1c0] sm:$0xff]
  %v74 = vld [vmem:[%s2 + $0x1c8] sm:$0xff]
  %v75 = vld [vmem:[%s2 + $0x1d0] sm:$0xff]
  %v76 = vld [vmem:[%s2 + $0x1d8] sm:$0xff]
  %v77 = vld [vmem:[%s2 + $0x1e0] sm:$0xff]
  %v78 = vld [vmem:[%s2 + $0x1e8] sm:$0xff]
  %v79 = vld [vmem:[%s2 + $0x1f0] sm:$0xff]
  %v80 = vld [vmem:[%s2 + $0x1f8] sm:$0xff]
  %v81 = vld [vmem:[%s0] sm:$0x1]
  %v83 = vlaneseq
  %v84 = vshrl.u32 %v83, 7
  %v85 = vsub.s32 0, %v84
  %v86 = vrot.slane %v81, %v85
  %v88 = vmul.f32 %v17, %v86
  %v89 = vmul.f32 %v18, %v86
  %v90 = vmul.f32 %v19, %v86
  %v91 = vmul.f32 %v20, %v86
  %v92 = vmul.f32 %v21, %v86
  %v93 = vmul.f32 %v22, %v86
  %v94 = vmul.f32 %v23, %v86
  %v95 = vmul.f32 %v24, %v86
  %v96 = vmul.f32 %v25, %v86
  %v97 = vmul.f32 %v26, %v86
  %v98 = vmul.f32 %v27, %v86
  %v99 = vmul.f32 %v28, %v86
  %v100 = vmul.f32 %v29, %v86
  %v101 = vmul.f32 %v30, %v86
  %v102 = vmul.f32 %v31, %v86
  %v103 = vmul.f32 %v32, %v86
  %v104 = vmul.f32 %v33, %v86
  %v105 = vmul.f32 %v34, %v86
  %v106 = vmul.f32 %v35, %v86
  %v107 = vmul.f32 %v36, %v86
  %v108 = vmul.f32 %v37, %v86
  %v109 = vmul.f32 %v38, %v86
  %v110 = vmul.f32 %v39, %v86
  %v111 = vmul.f32 %v40, %v86
  %v112 = vmul.f32 %v41, %v86
  %v113 = vmul.f32 %v42, %v86
  %v114 = vmul.f32 %v43, %v86
  %v115 = vmul.f32 %v44, %v86
  %v116 = vmul.f32 %v45, %v86
  %v117 = vmul.f32 %v46, %v86
  %v118 = vmul.f32 %v47, %v86
  %v119 = vmul.f32 %v48, %v86
  %v120 = vmul.f32 %v49, %v86
  %v121 = vmul.f32 %v50, %v86
  %v122 = vmul.f32 %v51, %v86
  %v123 = vmul.f32 %v52, %v86
  %v124 = vmul.f32 %v53, %v86
  %v125 = vmul.f32 %v54, %v86
  %v126 = vmul.f32 %v55, %v86
  %v127 = vmul.f32 %v56, %v86
  %v128 = vmul.f32 %v57, %v86
  %v129 = vmul.f32 %v58, %v86
  %v130 = vmul.f32 %v59, %v86
  %v131 = vmul.f32 %v60, %v86
  %v132 = vmul.f32 %v61, %v86
  %v133 = vmul.f32 %v62, %v86
  %v134 = vmul.f32 %v63, %v86
  %v135 = vmul.f32 %v64, %v86
  %v136 = vmul.f32 %v65, %v86
  %v137 = vmul.f32 %v66, %v86
  %v138 = vmul.f32 %v67, %v86
  %v139 = vmul.f32 %v68, %v86
  %v140 = vmul.f32 %v69, %v86
  %v141 = vmul.f32 %v70, %v86
  %v142 = vmul.f32 %v71, %v86
  %v143 = vmul.f32 %v72, %v86
  %v144 = vmul.f32 %v73, %v86
  %v145 = vmul.f32 %v74, %v86
  %v146 = vmul.f32 %v75, %v86
  %v147 = vmul.f32 %v76, %v86
  %v148 = vmul.f32 %v77, %v86
  %v149 = vmul.f32 %v78, %v86
  %v150 = vmul.f32 %v79, %v86
  %v151 = vmul.f32 %v80, %v86
  %v152 = vld [vmem:[%s1] sm:$0x1]
  %v154 = vlaneseq
  %v155 = vshrl.u32 %v154, 7
  %v156 = vsub.s32 0, %v155
  %v157 = vrot.slane %v152, %v156
  %v159 = vadd.f32 %v88, %v157
  %v160 = vadd.f32 %v89, %v157
  %v161 = vadd.f32 %v90, %v157
  %v162 = vadd.f32 %v91, %v157
  %v163 = vadd.f32 %v92, %v157
  %v164 = vadd.f32 %v93, %v157
  %v165 = vadd.f32 %v94, %v157
  %v166 = vadd.f32 %v95, %v157
  %v167 = vadd.f32 %v96, %v157
  %v168 = vadd.f32 %v97, %v157
  %v169 = vadd.f32 %v98, %v157
  %v170 = vadd.f32 %v99, %v157
  %v171 = vadd.f32 %v100, %v157
  %v172 = vadd.f32 %v101, %v157
  %v173 = vadd.f32 %v102, %v157
  %v174 = vadd.f32 %v103, %v157
  %v175 = vadd.f32 %v104, %v157
  %v176 = vadd.f32 %v105, %v157
  %v177 = vadd.f32 %v106, %v157
  %v178 = vadd.f32 %v107, %v157
  %v179 = vadd.f32 %v108, %v157
  %v180 = vadd.f32 %v109, %v157
  %v181 = vadd.f32 %v110, %v157
  %v182 = vadd.f32 %v111, %v157
  %v183 = vadd.f32 %v112, %v157
  %v184 = vadd.f32 %v113, %v157
  %v185 = vadd.f32 %v114, %v157
  %v186 = vadd.f32 %v115, %v157
  %v187 = vadd.f32 %v116, %v157
  %v188 = vadd.f32 %v117, %v157
  %v189 = vadd.f32 %v118, %v157
  %v190 = vadd.f32 %v119, %v157
  %v191 = vadd.f32 %v120, %v157
  %v192 = vadd.f32 %v121, %v157
  %v193 = vadd.f32 %v122, %v157
  %v194 = vadd.f32 %v123, %v157
  %v195 = vadd.f32 %v124, %v157
  %v196 = vadd.f32 %v125, %v157
  %v197 = vadd.f32 %v126, %v157
  %v198 = vadd.f32 %v127, %v157
  %v199 = vadd.f32 %v128, %v157
  %v200 = vadd.f32 %v129, %v157
  %v201 = vadd.f32 %v130, %v157
  %v202 = vadd.f32 %v131, %v157
  %v203 = vadd.f32 %v132, %v157
  %v204 = vadd.f32 %v133, %v157
  %v205 = vadd.f32 %v134, %v157
  %v206 = vadd.f32 %v135, %v157
  %v207 = vadd.f32 %v136, %v157
  %v208 = vadd.f32 %v137, %v157
  %v209 = vadd.f32 %v138, %v157
  %v210 = vadd.f32 %v139, %v157
  %v211 = vadd.f32 %v140, %v157
  %v212 = vadd.f32 %v141, %v157
  %v213 = vadd.f32 %v142, %v157
  %v214 = vadd.f32 %v143, %v157
  %v215 = vadd.f32 %v144, %v157
  %v216 = vadd.f32 %v145, %v157
  %v217 = vadd.f32 %v146, %v157
  %v218 = vadd.f32 %v147, %v157
  %v219 = vadd.f32 %v148, %v157
  %v220 = vadd.f32 %v149, %v157
  %v221 = vadd.f32 %v150, %v157
  %v222 = vadd.f32 %v151, %v157
  %v223 = vmax.f32 %v159, 0.0
  %v224 = vmax.f32 %v160, 0.0
  %v225 = vmax.f32 %v161, 0.0
  %v226 = vmax.f32 %v162, 0.0
  %v227 = vmax.f32 %v163, 0.0
  %v228 = vmax.f32 %v164, 0.0
  %v229 = vmax.f32 %v165, 0.0
  %v230 = vmax.f32 %v166, 0.0
  %v231 = vmax.f32 %v167, 0.0
  %v232 = vmax.f32 %v168, 0.0
  %v233 = vmax.f32 %v169, 0.0
  %v234 = vmax.f32 %v170, 0.0
  %v235 = vmax.f32 %v171, 0.0
  %v236 = vmax.f32 %v172, 0.0
  %v237 = vmax.f32 %v173, 0.0
  %v238 = vmax.f32 %v174, 0.0
  %v239 = vmax.f32 %v175, 0.0
  %v240 = vmax.f32 %v176, 0.0
  %v241 = vmax.f32 %v177, 0.0
  %v242 = vmax.f32 %v178, 0.0
  %v243 = vmax.f32 %v179, 0.0
  %v244 = vmax.f32 %v180, 0.0
  %v245 = vmax.f32 %v181, 0.0
  %v246 = vmax.f32 %v182, 0.0
  %v247 = vmax.f32 %v183, 0.0
  %v248 = vmax.f32 %v184, 0.0
  %v249 = vmax.f32 %v185, 0.0
  %v250 = vmax.f32 %v186, 0.0
  %v251 = vmax.f32 %v187, 0.0
  %v252 = vmax.f32 %v188, 0.0
  %v253 = vmax.f32 %v189, 0.0
  %v254 = vmax.f32 %v190, 0.0
  %v255 = vmax.f32 %v191, 0.0
  %v256 = vmax.f32 %v192, 0.0
  %v257 = vmax.f32 %v193, 0.0
  %v258 = vmax.f32 %v194, 0.0
  %v259 = vmax.f32 %v195, 0.0
  %v260 = vmax.f32 %v196, 0.0
  %v261 = vmax.f32 %v197, 0.0
  %v262 = vmax.f32 %v198, 0.0
  %v263 = vmax.f32 %v199, 0.0
  %v264 = vmax.f32 %v200, 0.0
  %v265 = vmax.f32 %v201, 0.0
  %v266 = vmax.f32 %v202, 0.0
  %v267 = vmax.f32 %v203, 0.0
  %v268 = vmax.f32 %v204, 0.0
  %v269 = vmax.f32 %v205, 0.0
  %v270 = vmax.f32 %v206, 0.0
  %v271 = vmax.f32 %v207, 0.0
  %v272 = vmax.f32 %v208, 0.0
  %v273 = vmax.f32 %v209, 0.0
  %v274 = vmax.f32 %v210, 0.0
  %v275 = vmax.f32 %v211, 0.0
  %v276 = vmax.f32 %v212, 0.0
  %v277 = vmax.f32 %v213, 0.0
  %v278 = vmax.f32 %v214, 0.0
  %v279 = vmax.f32 %v215, 0.0
  %v280 = vmax.f32 %v216, 0.0
  %v281 = vmax.f32 %v217, 0.0
  %v282 = vmax.f32 %v218, 0.0
  %v283 = vmax.f32 %v219, 0.0
  %v284 = vmax.f32 %v220, 0.0
  %v285 = vmax.f32 %v221, 0.0
  %v286 = vmax.f32 %v222, 0.0
  %vm287 = vcmask 31744
  %288 = vst.msk [vmem:[#allocation2] sm:$0xff] %vm287, 0.0
  %289 = vst.msk [vmem:[#allocation2 + $0x8] sm:$0xff] %vm287, 0.0
  %vm290 = vcmask 25600
  %291 = vst.msk [vmem:[#allocation2 + $0x10] sm:$0x3] %vm290, 0.0
  %292 = vst.msk [vmem:[#allocation2 + $0x1b0] sm:$0xff] %vm287, 0.0
  %293 = vst.msk [vmem:[#allocation2 + $0x1b8] sm:$0xff] %vm287, 0.0
  %294 = vst.msk [vmem:[#allocation2 + $0x1c0] sm:$0x3] %vm290, 0.0
  %s295 = scalar_lea.vmem [#allocation2], 408
  %296 = vst.msk [vmem:[%s295] sm:$0xff] %vm287, 0.0
  %297 = vst.msk [vmem:[%s295 + $0x8] sm:$0xff] %vm287, 0.0
  %298 = vst.msk [vmem:[%s295 + $0x10] sm:$0x3] %vm290, 0.0
  %299 = vst.msk [vmem:[%s295 + $0x1b0] sm:$0xff] %vm287, 0.0
  %300 = vst.msk [vmem:[%s295 + $0x1b8] sm:$0xff] %vm287, 0.0
  %301 = vst.msk [vmem:[%s295 + $0x1c0] sm:$0x3] %vm290, 0.0
  %vm302 = vcmask 24576
  %303 = vst.msk [vmem:[#allocation2] sm:$0x1] %vm302, 0.0
  %304 = vst.msk [vmem:[#allocation2 + $0x18] sm:$0x1] %vm302, 0.0
  %305 = vst.msk [vmem:[#allocation2 + $0x30] sm:$0x1] %vm302, 0.0
  %306 = vst.msk [vmem:[#allocation2 + $0x48] sm:$0x1] %vm302, 0.0
  %307 = vst.msk [vmem:[#allocation2 + $0x60] sm:$0x1] %vm302, 0.0
  %308 = vst.msk [vmem:[#allocation2 + $0x78] sm:$0x1] %vm302, 0.0
  %309 = vst.msk [vmem:[#allocation2 + $0x90] sm:$0x1] %vm302, 0.0
  %310 = vst.msk [vmem:[#allocation2 + $0xa8] sm:$0x1] %vm302, 0.0
  %311 = vst.msk [vmem:[#allocation2 + $0xc0] sm:$0x1] %vm302, 0.0
  %312 = vst.msk [vmem:[#allocation2 + $0xd8] sm:$0x1] %vm302, 0.0
  %313 = vst.msk [vmem:[#allocation2 + $0xf0] sm:$0x1] %vm302, 0.0
  %314 = vst.msk [vmem:[#allocation2 + $0x108] sm:$0x1] %vm302, 0.0
  %315 = vst.msk [vmem:[#allocation2 + $0x120] sm:$0x1] %vm302, 0.0
  %316 = vst.msk [vmem:[#allocation2 + $0x138] sm:$0x1] %vm302, 0.0
  %317 = vst.msk [vmem:[#allocation2 + $0x150] sm:$0x1] %vm302, 0.0
  %318 = vst.msk [vmem:[#allocation2 + $0x168] sm:$0x1] %vm302, 0.0
  %319 = vst.msk [vmem:[#allocation2 + $0x180] sm:$0x1] %vm302, 0.0
  %320 = vst.msk [vmem:[#allocation2 + $0x198] sm:$0x1] %vm302, 0.0
  %321 = vst.msk [vmem:[#allocation2 + $0x1b0] sm:$0x1] %vm302, 0.0
  %322 = vst.msk [vmem:[#allocation2 + $0x1c8] sm:$0x1] %vm302, 0.0
  %323 = vst.msk [vmem:[#allocation2 + $0x1e0] sm:$0x1] %vm302, 0.0
  %324 = vst.msk [vmem:[#allocation2 + $0x1f8] sm:$0x1] %vm302, 0.0
  %325 = vst.msk [vmem:[#allocation2 + $0x210] sm:$0x1] %vm302, 0.0
  %326 = vst.msk [vmem:[#allocation2 + $0x228] sm:$0x1] %vm302, 0.0
  %327 = vst.msk [vmem:[#allocation2 + $0x240] sm:$0x1] %vm302, 0.0
  %328 = vst.msk [vmem:[#allocation2 + $0x258] sm:$0x1] %vm302, 0.0
  %329 = vst.msk [vmem:[#allocation2 + $0x270] sm:$0x1] %vm302, 0.0
  %330 = vst.msk [vmem:[#allocation2 + $0x288] sm:$0x1] %vm302, 0.0
  %331 = vst.msk [vmem:[#allocation2 + $0x2a0] sm:$0x1] %vm302, 0.0
  %332 = vst.msk [vmem:[#allocation2 + $0x2b8] sm:$0x1] %vm302, 0.0
  %333 = vst.msk [vmem:[#allocation2 + $0x2d0] sm:$0x1] %vm302, 0.0
  %334 = vst.msk [vmem:[#allocation2 + $0x2e8] sm:$0x1] %vm302, 0.0
  %335 = vst.msk [vmem:[#allocation2 + $0x300] sm:$0x1] %vm302, 0.0
  %336 = vst.msk [vmem:[#allocation2 + $0x318] sm:$0x1] %vm302, 0.0
  %337 = vst.msk [vmem:[#allocation2 + $0x330] sm:$0x1] %vm302, 0.0
  %338 = vst.msk [vmem:[#allocation2 + $0x348] sm:$0x1] %vm302, 0.0
  %339 = vst.msk [vmem:[#allocation2 + $0x11] sm:$0x1] %vm302, 0.0
  %340 = vst.msk [vmem:[#allocation2 + $0x29] sm:$0x1] %vm302, 0.0
  %341 = vst.msk [vmem:[#allocation2 + $0x41] sm:$0x1] %vm302, 0.0
  %342 = vst.msk [vmem:[#allocation2 + $0x59] sm:$0x1] %vm302, 0.0
  %343 = vst.msk [vmem:[#allocation2 + $0x71] sm:$0x1] %vm302, 0.0
  %344 = vst.msk [vmem:[#allocation2 + $0x89] sm:$0x1] %vm302, 0.0
  %345 = vst.msk [vmem:[#allocation2 + $0xa1] sm:$0x1] %vm302, 0.0
  %346 = vst.msk [vmem:[#allocation2 + $0xb9] sm:$0x1] %vm302, 0.0
  %347 = vst.msk [vmem:[#allocation2 + $0xd1] sm:$0x1] %vm302, 0.0
  %348 = vst.msk [vmem:[#allocation2 + $0xe9] sm:$0x1] %vm302, 0.0
  %349 = vst.msk [vmem:[#allocation2 + $0x101] sm:$0x1] %vm302, 0.0
  %350 = vst.msk [vmem:[#allocation2 + $0x119] sm:$0x1] %vm302, 0.0
  %351 = vst.msk [vmem:[#allocation2 + $0x131] sm:$0x1] %vm302, 0.0
  %352 = vst.msk [vmem:[#allocation2 + $0x149] sm:$0x1] %vm302, 0.0
  %353 = vst.msk [vmem:[#allocation2 + $0x161] sm:$0x1] %vm302, 0.0
  %354 = vst.msk [vmem:[#allocation2 + $0x179] sm:$0x1] %vm302, 0.0
  %355 = vst.msk [vmem:[#allocation2 + $0x191] sm:$0x1] %vm302, 0.0
  %356 = vst.msk [vmem:[#allocation2 + $0x1a9] sm:$0x1] %vm302, 0.0
  %357 = vst.msk [vmem:[#allocation2 + $0x1c1] sm:$0x1] %vm302, 0.0
  %358 = vst.msk [vmem:[#allocation2 + $0x1d9] sm:$0x1] %vm302, 0.0
  %359 = vst.msk [vmem:[#allocation2 + $0x1f1] sm:$0x1] %vm302, 0.0
  %360 = vst.msk [vmem:[#allocation2 + $0x209] sm:$0x1] %vm302, 0.0
  %361 = vst.msk [vmem:[#allocation2 + $0x221] sm:$0x1] %vm302, 0.0
  %362 = vst.msk [vmem:[#allocation2 + $0x239] sm:$0x1] %vm302, 0.0
  %363 = vst.msk [vmem:[#allocation2 + $0x251] sm:$0x1] %vm302, 0.0
  %364 = vst.msk [vmem:[#allocation2 + $0x269] sm:$0x1] %vm302, 0.0
  %365 = vst.msk [vmem:[#allocation2 + $0x281] sm:$0x1] %vm302, 0.0
  %366 = vst.msk [vmem:[#allocation2 + $0x299] sm:$0x1] %vm302, 0.0
  %367 = vst.msk [vmem:[#allocation2 + $0x2b1] sm:$0x1] %vm302, 0.0
  %368 = vst.msk [vmem:[#allocation2 + $0x2c9] sm:$0x1] %vm302, 0.0
  %369 = vst.msk [vmem:[#allocation2 + $0x2e1] sm:$0x1] %vm302, 0.0
  %370 = vst.msk [vmem:[#allocation2 + $0x2f9] sm:$0x1] %vm302, 0.0
  %371 = vst.msk [vmem:[#allocation2 + $0x311] sm:$0x1] %vm302, 0.0
  %372 = vst.msk [vmem:[#allocation2 + $0x329] sm:$0x1] %vm302, 0.0
  %373 = vst.msk [vmem:[#allocation2 + $0x341] sm:$0x1] %vm302, 0.0
  %374 = vst.msk [vmem:[#allocation2 + $0x359] sm:$0x1] %vm302, 0.0
  %s375 = scalar_lea.vmem [#allocation2], 24
  %376 = vst.msk [vmem:[%s375 + $0x1] sm:$0xff] %vm287, %v223
  %377 = vst.msk [vmem:[%s375 + $0x9] sm:$0xff] %vm287, %v224
  %378 = vst.msk [vmem:[%s375 + $0x19] sm:$0xff] %vm287, %v225
  %379 = vst.msk [vmem:[%s375 + $0x21] sm:$0xff] %vm287, %v226
  %380 = vst.msk [vmem:[%s375 + $0x31] sm:$0xff] %vm287, %v227
  %381 = vst.msk [vmem:[%s375 + $0x39] sm:$0xff] %vm287, %v228
  %382 = vst.msk [vmem:[%s375 + $0x49] sm:$0xff] %vm287, %v229
  %383 = vst.msk [vmem:[%s375 + $0x51] sm:$0xff] %vm287, %v230
  %384 = vst.msk [vmem:[%s375 + $0x61] sm:$0xff] %vm287, %v231
  %385 = vst.msk [vmem:[%s375 + $0x69] sm:$0xff] %vm287, %v232
  %386 = vst.msk [vmem:[%s375 + $0x79] sm:$0xff] %vm287, %v233
  %387 = vst.msk [vmem:[%s375 + $0x81] sm:$0xff] %vm287, %v234
  %388 = vst.msk [vmem:[%s375 + $0x91] sm:$0xff] %vm287, %v235
  %389 = vst.msk [vmem:[%s375 + $0x99] sm:$0xff] %vm287, %v236
  %390 = vst.msk [vmem:[%s375 + $0xa9] sm:$0xff] %vm287, %v237
  %391 = vst.msk [vmem:[%s375 + $0xb1] sm:$0xff] %vm287, %v238
  %392 = vst.msk [vmem:[%s375 + $0xc1] sm:$0xff] %vm287, %v239
  %393 = vst.msk [vmem:[%s375 + $0xc9] sm:$0xff] %vm287, %v240
  %394 = vst.msk [vmem:[%s375 + $0xd9] sm:$0xff] %vm287, %v241
  %395 = vst.msk [vmem:[%s375 + $0xe1] sm:$0xff] %vm287, %v242
  %396 = vst.msk [vmem:[%s375 + $0xf1] sm:$0xff] %vm287, %v243
  %397 = vst.msk [vmem:[%s375 + $0xf9] sm:$0xff] %vm287, %v244
  %398 = vst.msk [vmem:[%s375 + $0x109] sm:$0xff] %vm287, %v245
  %399 = vst.msk [vmem:[%s375 + $0x111] sm:$0xff] %vm287, %v246
  %400 = vst.msk [vmem:[%s375 + $0x121] sm:$0xff] %vm287, %v247
  %401 = vst.msk [vmem:[%s375 + $0x129] sm:$0xff] %vm287, %v248
  %402 = vst.msk [vmem:[%s375 + $0x139] sm:$0xff] %vm287, %v249
  %403 = vst.msk [vmem:[%s375 + $0x141] sm:$0xff] %vm287, %v250
  %404 = vst.msk [vmem:[%s375 + $0x151] sm:$0xff] %vm287, %v251
  %405 = vst.msk [vmem:[%s375 + $0x159] sm:$0xff] %vm287, %v252
  %406 = vst.msk [vmem:[%s375 + $0x169] sm:$0xff] %vm287, %v253
  %407 = vst.msk [vmem:[%s375 + $0x171] sm:$0xff] %vm287, %v254
  %408 = vst.msk [vmem:[%s375 + $0x1b1] sm:$0xff] %vm287, %v255
  %409 = vst.msk [vmem:[%s375 + $0x1b9] sm:$0xff] %vm287, %v256
  %410 = vst.msk [vmem:[%s375 + $0x1c9] sm:$0xff] %vm287, %v257
  %411 = vst.msk [vmem:[%s375 + $0x1d1] sm:$0xff] %vm287, %v258
  %412 = vst.msk [vmem:[%s375 + $0x1e1] sm:$0xff] %vm287, %v259
  %413 = vst.msk [vmem:[%s375 + $0x1e9] sm:$0xff] %vm287, %v260
  %414 = vst.msk [vmem:[%s375 + $0x1f9] sm:$0xff] %vm287, %v261
  %415 = vst.msk [vmem:[%s375 + $0x201] sm:$0xff] %vm287, %v262
  %416 = vst.msk [vmem:[%s375 + $0x211] sm:$0xff] %vm287, %v263
  %417 = vst.msk [vmem:[%s375 + $0x219] sm:$0xff] %vm287, %v264
  %418 = vst.msk [vmem:[%s375 + $0x229] sm:$0xff] %vm287, %v265
  %419 = vst.msk [vmem:[%s375 + $0x231] sm:$0xff] %vm287, %v266
  %420 = vst.msk [vmem:[%s375 + $0x241] sm:$0xff] %vm287, %v267
  %421 = vst.msk [vmem:[%s375 + $0x249] sm:$0xff] %vm287, %v268
  %422 = vst.msk [vmem:[%s375 + $0x259] sm:$0xff] %vm287, %v269
  %423 = vst.msk [vmem:[%s375 + $0x261] sm:$0xff] %vm287, %v270
  %424 = vst.msk [vmem:[%s375 + $0x271] sm:$0xff] %vm287, %v271
  %425 = vst.msk [vmem:[%s375 + $0x279] sm:$0xff] %vm287, %v272
  %426 = vst.msk [vmem:[%s375 + $0x289] sm:$0xff] %vm287, %v273
  %427 = vst.msk [vmem:[%s375 + $0x291] sm:$0xff] %vm287, %v274
  %428 = vst.msk [vmem:[%s375 + $0x2a1] sm:$0xff] %vm287, %v275
  %429 = vst.msk [vmem:[%s375 + $0x2a9] sm:$0xff] %vm287, %v276
  %430 = vst.msk [vmem:[%s375 + $0x2b9] sm:$0xff] %vm287, %v277
  %431 = vst.msk [vmem:[%s375 + $0x2c1] sm:$0xff] %vm287, %v278
  %432 = vst.msk [vmem:[%s375 + $0x2d1] sm:$0xff] %vm287, %v279
  %433 = vst.msk [vmem:[%s375 + $0x2d9] sm:$0xff] %vm287, %v280
  %434 = vst.msk [vmem:[%s375 + $0x2e9] sm:$0xff] %vm287, %v281
  %435 = vst.msk [vmem:[%s375 + $0x2f1] sm:$0xff] %vm287, %v282
  %436 = vst.msk [vmem:[%s375 + $0x301] sm:$0xff] %vm287, %v283
  %437 = vst.msk [vmem:[%s375 + $0x309] sm:$0xff] %vm287, %v284
  %438 = vst.msk [vmem:[%s375 + $0x319] sm:$0xff] %vm287, %v285
  %439 = vst.msk [vmem:[%s375 + $0x321] sm:$0xff] %vm287, %v286
  %v440 = vld [vmem:[#allocation2] sm:$0xff]
  %v441 = vld [vmem:[#allocation2 + $0x8] sm:$0xff]
  %v442 = vld [vmem:[#allocation2 + $0x18] sm:$0xff]
  %v443 = vld [vmem:[#allocation2 + $0x20] sm:$0xff]
  %v444 = vld [vmem:[#allocation2 + $0x30] sm:$0xff]
  %v445 = vld [vmem:[#allocation2 + $0x38] sm:$0xff]
  %v446 = vld [vmem:[#allocation2 + $0x48] sm:$0xff]
  %v447 = vld [vmem:[#allocation2 + $0x50] sm:$0xff]
  %v448 = vld [vmem:[#allocation2 + $0x60] sm:$0xff]
  %v449 = vld [vmem:[#allocation2 + $0x68] sm:$0xff]
  %v450 = vld [vmem:[#allocation2 + $0x78] sm:$0xff]
  %v451 = vld [vmem:[#allocation2 + $0x80] sm:$0xff]
  %v452 = vld [vmem:[#allocation2 + $0x90] sm:$0xff]
  %v453 = vld [vmem:[#allocation2 + $0x98] sm:$0xff]
  %v454 = vld [vmem:[#allocation2 + $0xa8] sm:$0xff]
  %v455 = vld [vmem:[#allocation2 + $0xb0] sm:$0xff]
  %v456 = vld [vmem:[#allocation2 + $0xc0] sm:$0xff]
  %v457 = vld [vmem:[#allocation2 + $0xc8] sm:$0xff]
  %v458 = vld [vmem:[#allocation2 + $0xd8] sm:$0xff]
  %v459 = vld [vmem:[#allocation2 + $0xe0] sm:$0xff]
  %v460 = vld [vmem:[#allocation2 + $0xf0] sm:$0xff]
  %v461 = vld [vmem:[#allocation2 + $0xf8] sm:$0xff]
  %v462 = vld [vmem:[#allocation2 + $0x108] sm:$0xff]
  %v463 = vld [vmem:[#allocation2 + $0x110] sm:$0xff]
  %v464 = vld [vmem:[#allocation2 + $0x120] sm:$0xff]
  %v465 = vld [vmem:[#allocation2 + $0x128] sm:$0xff]
  %v466 = vld [vmem:[#allocation2 + $0x138] sm:$0xff]
  %v467 = vld [vmem:[#allocation2 + $0x140] sm:$0xff]
  %v468 = vld [vmem:[#allocation2 + $0x150] sm:$0xff]
  %v469 = vld [vmem:[#allocation2 + $0x158] sm:$0xff]
  %v470 = vld [vmem:[#allocation2 + $0x168] sm:$0xff]
  %v471 = vld [vmem:[#allocation2 + $0x170] sm:$0xff]
  %v472 = vld [vmem:[#allocation2 + $0x1b0] sm:$0xff]
  %v473 = vld [vmem:[#allocation2 + $0x1b8] sm:$0xff]
  %v474 = vld [vmem:[#allocation2 + $0x1c8] sm:$0xff]
  %v475 = vld [vmem:[#allocation2 + $0x1d0] sm:$0xff]
  %v476 = vld [vmem:[#allocation2 + $0x1e0] sm:$0xff]
  %v477 = vld [vmem:[#allocation2 + $0x1e8] sm:$0xff]
  %v478 = vld [vmem:[#allocation2 + $0x1f8] sm:$0xff]
  %v479 = vld [vmem:[#allocation2 + $0x200] sm:$0xff]
  %v480 = vld [vmem:[#allocation2 + $0x210] sm:$0xff]
  %v481 = vld [vmem:[#allocation2 + $0x218] sm:$0xff]
  %v482 = vld [vmem:[#allocation2 + $0x228] sm:$0xff]
  %v483 = vld [vmem:[#allocation2 + $0x230] sm:$0xff]
  %v484 = vld [vmem:[#allocation2 + $0x240] sm:$0xff]
  %v485 = vld [vmem:[#allocation2 + $0x248] sm:$0xff]
  %v486 = vld [vmem:[#allocation2 + $0x258] sm:$0xff]
  %v487 = vld [vmem:[#allocation2 + $0x260] sm:$0xff]
  %v488 = vld [vmem:[#allocation2 + $0x270] sm:$0xff]
  %v489 = vld [vmem:[#allocation2 + $0x278] sm:$0xff]
  %v490 = vld [vmem:[#allocation2 + $0x288] sm:$0xff]
  %v491 = vld [vmem:[#allocation2 + $0x290] sm:$0xff]
  %v492 = vld [vmem:[#allocation2 + $0x2a0] sm:$0xff]
  %v493 = vld [vmem:[#allocation2 + $0x2a8] sm:$0xff]
  %v494 = vld [vmem:[#allocation2 + $0x2b8] sm:$0xff]
  %v495 = vld [vmem:[#allocation2 + $0x2c0] sm:$0xff]
  %v496 = vld [vmem:[#allocation2 + $0x2d0] sm:$0xff]
  %v497 = vld [vmem:[#allocation2 + $0x2d8] sm:$0xff]
  %v498 = vld [vmem:[#allocation2 + $0x2e8] sm:$0xff]
  %v499 = vld [vmem:[#allocation2 + $0x2f0] sm:$0xff]
  %v500 = vld [vmem:[#allocation2 + $0x300] sm:$0xff]
  %v501 = vld [vmem:[#allocation2 + $0x308] sm:$0xff]
  %v502 = vld [vmem:[#allocation2 + $0x318] sm:$0xff]
  %v503 = vld [vmem:[#allocation2 + $0x320] sm:$0xff]
  %v504 = vld [vmem:[#allocation2 + $0x1] sm:$0xff]
  %v505 = vld [vmem:[#allocation2 + $0x9] sm:$0xff]
  %v506 = vld [vmem:[#allocation2 + $0x19] sm:$0xff]
  %v507 = vld [vmem:[#allocation2 + $0x21] sm:$0xff]
  %v508 = vld [vmem:[#allocation2 + $0x31] sm:$0xff]
  %v509 = vld [vmem:[#allocation2 + $0x39] sm:$0xff]
  %v510 = vld [vmem:[#allocation2 + $0x49] sm:$0xff]
  %v511 = vld [vmem:[#allocation2 + $0x51] sm:$0xff]
  %v512 = vld [vmem:[#allocation2 + $0x61] sm:$0xff]
  %v513 = vld [vmem:[#allocation2 + $0x69] sm:$0xff]
  %v514 = vld [vmem:[#allocation2 + $0x79] sm:$0xff]
  %v515 = vld [vmem:[#allocation2 + $0x81] sm:$0xff]
  %v516 = vld [vmem:[#allocation2 + $0x91] sm:$0xff]
  %v517 = vld [vmem:[#allocation2 + $0x99] sm:$0xff]
  %v518 = vld [vmem:[#allocation2 + $0xa9] sm:$0xff]
  %v519 = vld [vmem:[#allocation2 + $0xb1] sm:$0xff]
  %v520 = vld [vmem:[#allocation2 + $0xc1] sm:$0xff]
  %v521 = vld [vmem:[#allocation2 + $0xc9] sm:$0xff]
  %v522 = vld [vmem:[#allocation2 + $0xd9] sm:$0xff]
  %v523 = vld [vmem:[#allocation2 + $0xe1] sm:$0xff]
  %v524 = vld [vmem:[#allocation2 + $0xf1] sm:$0xff]
  %v525 = vld [vmem:[#allocation2 + $0xf9] sm:$0xff]
  %v526 = vld [vmem:[#allocation2 + $0x109] sm:$0xff]
  %v527 = vld [vmem:[#allocation2 + $0x111] sm:$0xff]
  %v528 = vld [vmem:[#allocation2 + $0x121] sm:$0xff]
  %v529 = vld [vmem:[#allocation2 + $0x129] sm:$0xff]
  %v530 = vld [vmem:[#allocation2 + $0x139] sm:$0xff]
  %v531 = vld [vmem:[#allocation2 + $0x141] sm:$0xff]
  %v532 = vld [vmem:[#allocation2 + $0x151] sm:$0xff]
  %v533 = vld [vmem:[#allocation2 + $0x159] sm:$0xff]
  %v534 = vld [vmem:[#allocation2 + $0x169] sm:$0xff]
  %v535 = vld [vmem:[#allocation2 + $0x171] sm:$0xff]
  %v536 = vld [vmem:[#allocation2 + $0x1b1] sm:$0xff]
  %v537 = vld [vmem:[#allocation2 + $0x1b9] sm:$0xff]
  %v538 = vld [vmem:[#allocation2 + $0x1c9] sm:$0xff]
  %v539 = vld [vmem:[#allocation2 + $0x1d1] sm:$0xff]
  %v540 = vld [vmem:[#allocation2 + $0x1e1] sm:$0xff]
  %v541 = vld [vmem:[#allocation2 + $0x1e9] sm:$0xff]
  %v542 = vld [vmem:[#allocation2 + $0x1f9] sm:$0xff]
  %v543 = vld [vmem:[#allocation2 + $0x201] sm:$0xff]
  %v544 = vld [vmem:[#allocation2 + $0x211] sm:$0xff]
  %v545 = vld [vmem:[#allocation2 + $0x219] sm:$0xff]
  %v546 = vld [vmem:[#allocation2 + $0x229] sm:$0xff]
  %v547 = vld [vmem:[#allocation2 + $0x231] sm:$0xff]
  %v548 = vld [vmem:[#allocation2 + $0x241] sm:$0xff]
  %v549 = vld [vmem:[#allocation2 + $0x249] sm:$0xff]
  %v550 = vld [vmem:[#allocation2 + $0x259] sm:$0xff]
  %v551 = vld [vmem:[#allocation2 + $0x261] sm:$0xff]
  %v552 = vld [vmem:[#allocation2 + $0x271] sm:$0xff]
  %v553 = vld [vmem:[#allocation2 + $0x279] sm:$0xff]
  %v554 = vld [vmem:[#allocation2 + $0x289] sm:$0xff]
  %v555 = vld [vmem:[#allocation2 + $0x291] sm:$0xff]
  %v556 = vld [vmem:[#allocation2 + $0x2a1] sm:$0xff]
  %v557 = vld [vmem:[#allocation2 + $0x2a9] sm:$0xff]
  %v558 = vld [vmem:[#allocation2 + $0x2b9] sm:$0xff]
  %v559 = vld [vmem:[#allocation2 + $0x2c1] sm:$0xff]
  %v560 = vld [vmem:[#allocation2 + $0x2d1] sm:$0xff]
  %v561 = vld [vmem:[#allocation2 + $0x2d9] sm:$0xff]
  %v562 = vld [vmem:[#allocation2 + $0x2e9] sm:$0xff]
  %v563 = vld [vmem:[#allocation2 + $0x2f1] sm:$0xff]
  %v564 = vld [vmem:[#allocation2 + $0x301] sm:$0xff]
  %v565 = vld [vmem:[#allocation2 + $0x309] sm:$0xff]
  %v566 = vld [vmem:[#allocation2 + $0x319] sm:$0xff]
  %v567 = vld [vmem:[#allocation2 + $0x321] sm:$0xff]
  %v568 = vld [vmem:[#allocation2 + $0x2] sm:$0xff]
  %v569 = vld [vmem:[#allocation2 + $0xa] sm:$0xff]
  %v570 = vld [vmem:[#allocation2 + $0x1a] sm:$0xff]
  %v571 = vld [vmem:[#allocation2 + $0x22] sm:$0xff]
  %v572 = vld [vmem:[#allocation2 + $0x32] sm:$0xff]
  %v573 = vld [vmem:[#allocation2 + $0x3a] sm:$0xff]
  %v574 = vld [vmem:[#allocation2 + $0x4a] sm:$0xff]
  %v575 = vld [vmem:[#allocation2 + $0x52] sm:$0xff]
  %v576 = vld [vmem:[#allocation2 + $0x62] sm:$0xff]
  %v577 = vld [vmem:[#allocation2 + $0x6a] sm:$0xff]
  %v578 = vld [vmem:[#allocation2 + $0x7a] sm:$0xff]
  %v579 = vld [vmem:[#allocation2 + $0x82] sm:$0xff]
  %v580 = vld [vmem:[#allocation2 + $0x92] sm:$0xff]
  %v581 = vld [vmem:[#allocation2 + $0x9a] sm:$0xff]
  %v582 = vld [vmem:[#allocation2 + $0xaa] sm:$0xff]
  %v583 = vld [vmem:[#allocation2 + $0xb2] sm:$0xff]
  %v584 = vld [vmem:[#allocation2 + $0xc2] sm:$0xff]
  %v585 = vld [vmem:[#allocation2 + $0xca] sm:$0xff]
  %v586 = vld [vmem:[#allocation2 + $0xda] sm:$0xff]
  %v587 = vld [vmem:[#allocation2 + $0xe2] sm:$0xff]
  %v588 = vld [vmem:[#allocation2 + $0xf2] sm:$0xff]
  %v589 = vld [vmem:[#allocation2 + $0xfa] sm:$0xff]
  %v590 = vld [vmem:[#allocation2 + $0x10a] sm:$0xff]
  %v591 = vld [vmem:[#allocation2 + $0x112] sm:$0xff]
  %v592 = vld [vmem:[#allocation2 + $0x122] sm:$0xff]
  %v593 = vld [vmem:[#allocation2 + $0x12a] sm:$0xff]
  %v594 = vld [vmem:[#allocation2 + $0x13a] sm:$0xff]
  %v595 = vld [vmem:[#allocation2 + $0x142] sm:$0xff]
  %v596 = vld [vmem:[#allocation2 + $0x152] sm:$0xff]
  %v597 = vld [vmem:[#allocation2 + $0x15a] sm:$0xff]
  %v598 = vld [vmem:[#allocation2 + $0x16a] sm:$0xff]
  %v599 = vld [vmem:[#allocation2 + $0x172] sm:$0xff]
  %v600 = vld [vmem:[#allocation2 + $0x1b2] sm:$0xff]
  %v601 = vld [vmem:[#allocation2 + $0x1ba] sm:$0xff]
  %v602 = vld [vmem:[#allocation2 + $0x1ca] sm:$0xff]
  %v603 = vld [vmem:[#allocation2 + $0x1d2] sm:$0xff]
  %v604 = vld [vmem:[#allocation2 + $0x1e2] sm:$0xff]
  %v605 = vld [vmem:[#allocation2 + $0x1ea] sm:$0xff]
  %v606 = vld [vmem:[#allocation2 + $0x1fa] sm:$0xff]
  %v607 = vld [vmem:[#allocation2 + $0x202] sm:$0xff]
  %v608 = vld [vmem:[#allocation2 + $0x212] sm:$0xff]
  %v609 = vld [vmem:[#allocation2 + $0x21a] sm:$0xff]
  %v610 = vld [vmem:[#allocation2 + $0x22a] sm:$0xff]
  %v611 = vld [vmem:[#allocation2 + $0x232] sm:$0xff]
  %v612 = vld [vmem:[#allocation2 + $0x242] sm:$0xff]
  %v613 = vld [vmem:[#allocation2 + $0x24a] sm:$0xff]
  %v614 = vld [vmem:[#allocation2 + $0x25a] sm:$0xff]
  %v615 = vld [vmem:[#allocation2 + $0x262] sm:$0xff]
  %v616 = vld [vmem:[#allocation2 + $0x272] sm:$0xff]
  %v617 = vld [vmem:[#allocation2 + $0x27a] sm:$0xff]
  %v618 = vld [vmem:[#allocation2 + $0x28a] sm:$0xff]
  %v619 = vld [vmem:[#allocation2 + $0x292] sm:$0xff]
  %v620 = vld [vmem:[#allocation2 + $0x2a2] sm:$0xff]
  %v621 = vld [vmem:[#allocation2 + $0x2aa] sm:$0xff]
  %v622 = vld [vmem:[#allocation2 + $0x2ba] sm:$0xff]
  %v623 = vld [vmem:[#allocation2 + $0x2c2] sm:$0xff]
  %v624 = vld [vmem:[#allocation2 + $0x2d2] sm:$0xff]
  %v625 = vld [vmem:[#allocation2 + $0x2da] sm:$0xff]
  %v626 = vld [vmem:[#allocation2 + $0x2ea] sm:$0xff]
  %v627 = vld [vmem:[#allocation2 + $0x2f2] sm:$0xff]
  %v628 = vld [vmem:[#allocation2 + $0x302] sm:$0xff]
  %v629 = vld [vmem:[#allocation2 + $0x30a] sm:$0xff]
  %v630 = vld [vmem:[#allocation2 + $0x31a] sm:$0xff]
  %v631 = vld [vmem:[#allocation2 + $0x322] sm:$0xff]
  %v632 = vld [vmem:[%s375] sm:$0xff]
  %v633 = vld [vmem:[%s375 + $0x8] sm:$0xff]
  %v634 = vld [vmem:[%s375 + $0x18] sm:$0xff]
  %v635 = vld [vmem:[%s375 + $0x20] sm:$0xff]
  %v636 = vld [vmem:[%s375 + $0x30] sm:$0xff]
  %v637 = vld [vmem:[%s375 + $0x38] sm:$0xff]
  %v638 = vld [vmem:[%s375 + $0x48] sm:$0xff]
  %v639 = vld [vmem:[%s375 + $0x50] sm:$0xff]
  %v640 = vld [vmem:[%s375 + $0x60] sm:$0xff]
  %v641 = vld [vmem:[%s375 + $0x68] sm:$0xff]
  %v642 = vld [vmem:[%s375 + $0x78] sm:$0xff]
  %v643 = vld [vmem:[%s375 + $0x80] sm:$0xff]
  %v644 = vld [vmem:[%s375 + $0x90] sm:$0xff]
  %v645 = vld [vmem:[%s375 + $0x98] sm:$0xff]
  %v646 = vld [vmem:[%s375 + $0xa8] sm:$0xff]
  %v647 = vld [vmem:[%s375 + $0xb0] sm:$0xff]
  %v648 = vld [vmem:[%s375 + $0xc0] sm:$0xff]
  %v649 = vld [vmem:[%s375 + $0xc8] sm:$0xff]
  %v650 = vld [vmem:[%s375 + $0xd8] sm:$0xff]
  %v651 = vld [vmem:[%s375 + $0xe0] sm:$0xff]
  %v652 = vld [vmem:[%s375 + $0xf0] sm:$0xff]
  %v653 = vld [vmem:[%s375 + $0xf8] sm:$0xff]
  %v654 = vld [vmem:[%s375 + $0x108] sm:$0xff]
  %v655 = vld [vmem:[%s375 + $0x110] sm:$0xff]
  %v656 = vld [vmem:[%s375 + $0x120] sm:$0xff]
  %v657 = vld [vmem:[%s375 + $0x128] sm:$0xff]
  %v658 = vld [vmem:[%s375 + $0x138] sm:$0xff]
  %v659 = vld [vmem:[%s375 + $0x140] sm:$0xff]
  %v660 = vld [vmem:[%s375 + $0x150] sm:$0xff]
  %v661 = vld [vmem:[%s375 + $0x158] sm:$0xff]
  %v662 = vld [vmem:[%s375 + $0x168] sm:$0xff]
  %v663 = vld [vmem:[%s375 + $0x170] sm:$0xff]
  %v664 = vld [vmem:[%s375 + $0x1b0] sm:$0xff]
  %v665 = vld [vmem:[%s375 + $0x1b8] sm:$0xff]
  %v666 = vld [vmem:[%s375 + $0x1c8] sm:$0xff]
  %v667 = vld [vmem:[%s375 + $0x1d0] sm:$0xff]
  %v668 = vld [vmem:[%s375 + $0x1e0] sm:$0xff]
  %v669 = vld [vmem:[%s375 + $0x1e8] sm:$0xff]
  %v670 = vld [vmem:[%s375 + $0x1f8] sm:$0xff]
  %v671 = vld [vmem:[%s375 + $0x200] sm:$0xff]
  %v672 = vld [vmem:[%s375 + $0x210] sm:$0xff]
  %v673 = vld [vmem:[%s375 + $0x218] sm:$0xff]
  %v674 = vld [vmem:[%s375 + $0x228] sm:$0xff]
  %v675 = vld [vmem:[%s375 + $0x230] sm:$0xff]
  %v676 = vld [vmem:[%s375 + $0x240] sm:$0xff]
  %v677 = vld [vmem:[%s375 + $0x248] sm:$0xff]
  %v678 = vld [vmem:[%s375 + $0x258] sm:$0xff]
  %v679 = vld [vmem:[%s375 + $0x260] sm:$0xff]
  %v680 = vld [vmem:[%s375 + $0x270] sm:$0xff]
  %v681 = vld [vmem:[%s375 + $0x278] sm:$0xff]
  %v682 = vld [vmem:[%s375 + $0x288] sm:$0xff]
  %v683 = vld [vmem:[%s375 + $0x290] sm:$0xff]
  %v684 = vld [vmem:[%s375 + $0x2a0] sm:$0xff]
  %v685 = vld [vmem:[%s375 + $0x2a8] sm:$0xff]
  %v686 = vld [vmem:[%s375 + $0x2b8] sm:$0xff]
  %v687 = vld [vmem:[%s375 + $0x2c0] sm:$0xff]
  %v688 = vld [vmem:[%s375 + $0x2d0] sm:$0xff]
  %v689 = vld [vmem:[%s375 + $0x2d8] sm:$0xff]
  %v690 = vld [vmem:[%s375 + $0x2e8] sm:$0xff]
  %v691 = vld [vmem:[%s375 + $0x2f0] sm:$0xff]
  %v692 = vld [vmem:[%s375 + $0x300] sm:$0xff]
  %v693 = vld [vmem:[%s375 + $0x308] sm:$0xff]
  %v694 = vld [vmem:[%s375 + $0x318] sm:$0xff]
  %v695 = vld [vmem:[%s375 + $0x320] sm:$0xff]
  %v696 = vld [vmem:[%s375 + $0x1] sm:$0xff]
  %v697 = vld [vmem:[%s375 + $0x9] sm:$0xff]
  %v698 = vld [vmem:[%s375 + $0x19] sm:$0xff]
  %v699 = vld [vmem:[%s375 + $0x21] sm:$0xff]
  %v700 = vld [vmem:[%s375 + $0x31] sm:$0xff]
  %v701 = vld [vmem:[%s375 + $0x39] sm:$0xff]
  %v702 = vld [vmem:[%s375 + $0x49] sm:$0xff]
  %v703 = vld [vmem:[%s375 + $0x51] sm:$0xff]
  %v704 = vld [vmem:[%s375 + $0x61] sm:$0xff]
  %v705 = vld [vmem:[%s375 + $0x69] sm:$0xff]
  %v706 = vld [vmem:[%s375 + $0x79] sm:$0xff]
  %v707 = vld [vmem:[%s375 + $0x81] sm:$0xff]
  %v708 = vld [vmem:[%s375 + $0x91] sm:$0xff]
  %v709 = vld [vmem:[%s375 + $0x99] sm:$0xff]
  %v710 = vld [vmem:[%s375 + $0xa9] sm:$0xff]
  %v711 = vld [vmem:[%s375 + $0xb1] sm:$0xff]
  %v712 = vld [vmem:[%s375 + $0xc1] sm:$0xff]
  %v713 = vld [vmem:[%s375 + $0xc9] sm:$0xff]
  %v714 = vld [vmem:[%s375 + $0xd9] sm:$0xff]
  %v715 = vld [vmem:[%s375 + $0xe1] sm:$0xff]
  %v716 = vld [vmem:[%s375 + $0xf1] sm:$0xff]
  %v717 = vld [vmem:[%s375 + $0xf9] sm:$0xff]
  %v718 = vld [vmem:[%s375 + $0x109] sm:$0xff]
  %v719 = vld [vmem:[%s375 + $0x111] sm:$0xff]
  %v720 = vld [vmem:[%s375 + $0x121] sm:$0xff]
  %v721 = vld [vmem:[%s375 + $0x129] sm:$0xff]
  %v722 = vld [vmem:[%s375 + $0x139] sm:$0xff]
  %v723 = vld [vmem:[%s375 + $0x141] sm:$0xff]
  %v724 = vld [vmem:[%s375 + $0x151] sm:$0xff]
  %v725 = vld [vmem:[%s375 + $0x159] sm:$0xff]
  %v726 = vld [vmem:[%s375 + $0x169] sm:$0xff]
  %v727 = vld [vmem:[%s375 + $0x171] sm:$0xff]
  %v728 = vld [vmem:[%s375 + $0x1b1] sm:$0xff]
  %v729 = vld [vmem:[%s375 + $0x1b9] sm:$0xff]
  %v730 = vld [vmem:[%s375 + $0x1c9] sm:$0xff]
  %v731 = vld [vmem:[%s375 + $0x1d1] sm:$0xff]
  %v732 = vld [vmem:[%s375 + $0x1e1] sm:$0xff]
  %v733 = vld [vmem:[%s375 + $0x1e9] sm:$0xff]
  %v734 = vld [vmem:[%s375 + $0x1f9] sm:$0xff]
  %v735 = vld [vmem:[%s375 + $0x201] sm:$0xff]
  %v736 = vld [vmem:[%s375 + $0x211] sm:$0xff]
  %v737 = vld [vmem:[%s375 + $0x219] sm:$0xff]
  %v738 = vld [vmem:[%s375 + $0x229] sm:$0xff]
  %v739 = vld [vmem:[%s375 + $0x231] sm:$0xff]
  %v740 = vld [vmem:[%s375 + $0x241] sm:$0xff]
  %v741 = vld [vmem:[%s375 + $0x249] sm:$0xff]
  %v742 = vld [vmem:[%s375 + $0x259] sm:$0xff]
  %v743 = vld [vmem:[%s375 + $0x261] sm:$0xff]
  %v744 = vld [vmem:[%s375 + $0x271] sm:$0xff]
  %v745 = vld [vmem:[%s375 + $0x279] sm:$0xff]
  %v746 = vld [vmem:[%s375 + $0x289] sm:$0xff]
  %v747 = vld [vmem:[%s375 + $0x291] sm:$0xff]
  %v748 = vld [vmem:[%s375 + $0x2a1] sm:$0xff]
  %v749 = vld [vmem:[%s375 + $0x2a9] sm:$0xff]
  %v750 = vld [vmem:[%s375 + $0x2b9] sm:$0xff]
  %v751 = vld [vmem:[%s375 + $0x2c1] sm:$0xff]
  %v752 = vld [vmem:[%s375 + $0x2d1] sm:$0xff]
  %v753 = vld [vmem:[%s375 + $0x2d9] sm:$0xff]
  %v754 = vld [vmem:[%s375 + $0x2e9] sm:$0xff]
  %v755 = vld [vmem:[%s375 + $0x2f1] sm:$0xff]
  %v756 = vld [vmem:[%s375 + $0x301] sm:$0xff]
  %v757 = vld [vmem:[%s375 + $0x309] sm:$0xff]
  %v758 = vld [vmem:[%s375 + $0x319] sm:$0xff]
  %v759 = vld [vmem:[%s375 + $0x321] sm:$0xff]
  %v760 = vld [vmem:[%s375 + $0x2] sm:$0xff]
  %v761 = vld [vmem:[%s375 + $0xa] sm:$0xff]
  %v762 = vld [vmem:[%s375 + $0x1a] sm:$0xff]
  %v763 = vld [vmem:[%s375 + $0x22] sm:$0xff]
  %v764 = vld [vmem:[%s375 + $0x32] sm:$0xff]
  %v765 = vld [vmem:[%s375 + $0x3a] sm:$0xff]
  %v766 = vld [vmem:[%s375 + $0x4a] sm:$0xff]
  %v767 = vld [vmem:[%s375 + $0x52] sm:$0xff]
  %v768 = vld [vmem:[%s375 + $0x62] sm:$0xff]
  %v769 = vld [vmem:[%s375 + $0x6a] sm:$0xff]
  %v770 = vld [vmem:[%s375 + $0x7a] sm:$0xff]
  %v771 = vld [vmem:[%s375 + $0x82] sm:$0xff]
  %v772 = vld [vmem:[%s375 + $0x92] sm:$0xff]
  %v773 = vld [vmem:[%s375 + $0x9a] sm:$0xff]
  %v774 = vld [vmem:[%s375 + $0xaa] sm:$0xff]
  %v775 = vld [vmem:[%s375 + $0xb2] sm:$0xff]
  %v776 = vld [vmem:[%s375 + $0xc2] sm:$0xff]
  %v777 = vld [vmem:[%s375 + $0xca] sm:$0xff]
  %v778 = vld [vmem:[%s375 + $0xda] sm:$0xff]
  %v779 = vld [vmem:[%s375 + $0xe2] sm:$0xff]
  %v780 = vld [vmem:[%s375 + $0xf2] sm:$0xff]
  %v781 = vld [vmem:[%s375 + $0xfa] sm:$0xff]
  %v782 = vld [vmem:[%s375 + $0x10a] sm:$0xff]
  %v783 = vld [vmem:[%s375 + $0x112] sm:$0xff]
  %v784 = vld [vmem:[%s375 + $0x122] sm:$0xff]
  %v785 = vld [vmem:[%s375 + $0x12a] sm:$0xff]
  %v786 = vld [vmem:[%s375 + $0x13a] sm:$0xff]
  %v787 = vld [vmem:[%s375 + $0x142] sm:$0xff]
  %v788 = vld [vmem:[%s375 + $0x152] sm:$0xff]
  %v789 = vld [vmem:[%s375 + $0x15a] sm:$0xff]
  %v790 = vld [vmem:[%s375 + $0x16a] sm:$0xff]
  %v791 = vld [vmem:[%s375 + $0x172] sm:$0xff]
  %v792 = vld [vmem:[%s375 + $0x1b2] sm:$0xff]
  %v793 = vld [vmem:[%s375 + $0x1ba] sm:$0xff]
  %v794 = vld [vmem:[%s375 + $0x1ca] sm:$0xff]
  %v795 = vld [vmem:[%s375 + $0x1d2] sm:$0xff]
  %v796 = vld [vmem:[%s375 + $0x1e2] sm:$0xff]
  %v797 = vld [vmem:[%s375 + $0x1ea] sm:$0xff]
  %v798 = vld [vmem:[%s375 + $0x1fa] sm:$0xff]
  %v799 = vld [vmem:[%s375 + $0x202] sm:$0xff]
  %v800 = vld [vmem:[%s375 + $0x212] sm:$0xff]
  %v801 = vld [vmem:[%s375 + $0x21a] sm:$0xff]
  %v802 = vld [vmem:[%s375 + $0x22a] sm:$0xff]
  %v803 = vld [vmem:[%s375 + $0x232] sm:$0xff]
  %v804 = vld [vmem:[%s375 + $0x242] sm:$0xff]
  %v805 = vld [vmem:[%s375 + $0x24a] sm:$0xff]
  %v806 = vld [vmem:[%s375 + $0x25a] sm:$0xff]
  %v807 = vld [vmem:[%s375 + $0x262] sm:$0xff]
  %v808 = vld [vmem:[%s375 + $0x272] sm:$0xff]
  %v809 = vld [vmem:[%s375 + $0x27a] sm:$0xff]
  %v810 = vld [vmem:[%s375 + $0x28a] sm:$0xff]
  %v811 = vld [vmem:[%s375 + $0x292] sm:$0xff]
  %v812 = vld [vmem:[%s375 + $0x2a2] sm:$0xff]
  %v813 = vld [vmem:[%s375 + $0x2aa] sm:$0xff]
  %v814 = vld [vmem:[%s375 + $0x2ba] sm:$0xff]
  %v815 = vld [vmem:[%s375 + $0x2c2] sm:$0xff]
  %v816 = vld [vmem:[%s375 + $0x2d2] sm:$0xff]
  %v817 = vld [vmem:[%s375 + $0x2da] sm:$0xff]
  %v818 = vld [vmem:[%s375 + $0x2ea] sm:$0xff]
  %v819 = vld [vmem:[%s375 + $0x2f2] sm:$0xff]
  %v820 = vld [vmem:[%s375 + $0x302] sm:$0xff]
  %v821 = vld [vmem:[%s375 + $0x30a] sm:$0xff]
  %v822 = vld [vmem:[%s375 + $0x31a] sm:$0xff]
  %v823 = vld [vmem:[%s375 + $0x322] sm:$0xff]
  %s824 = scalar_lea.vmem [#allocation2], 48
  %v825 = vld [vmem:[%s824] sm:$0xff]
  %v826 = vld [vmem:[%s824 + $0x8] sm:$0xff]
  %v827 = vld [vmem:[%s824 + $0x18] sm:$0xff]
  %v828 = vld [vmem:[%s824 + $0x20] sm:$0xff]
  %v829 = vld [vmem:[%s824 + $0x30] sm:$0xff]
  %v830 = vld [vmem:[%s824 + $0x38] sm:$0xff]
  %v831 = vld [vmem:[%s824 + $0x48] sm:$0xff]
  %v832 = vld [vmem:[%s824 + $0x50] sm:$0xff]
  %v833 = vld [vmem:[%s824 + $0x60] sm:$0xff]
  %v834 = vld [vmem:[%s824 + $0x68] sm:$0xff]
  %v835 = vld [vmem:[%s824 + $0x78] sm:$0xff]
  %v836 = vld [vmem:[%s824 + $0x80] sm:$0xff]
  %v837 = vld [vmem:[%s824 + $0x90] sm:$0xff]
  %v838 = vld [vmem:[%s824 + $0x98] sm:$0xff]
  %v839 = vld [vmem:[%s824 + $0xa8] sm:$0xff]
  %v840 = vld [vmem:[%s824 + $0xb0] sm:$0xff]
  %v841 = vld [vmem:[%s824 + $0xc0] sm:$0xff]
  %v842 = vld [vmem:[%s824 + $0xc8] sm:$0xff]
  %v843 = vld [vmem:[%s824 + $0xd8] sm:$0xff]
  %v844 = vld [vmem:[%s824 + $0xe0] sm:$0xff]
  %v845 = vld [vmem:[%s824 + $0xf0] sm:$0xff]
  %v846 = vld [vmem:[%s824 + $0xf8] sm:$0xff]
  %v847 = vld [vmem:[%s824 + $0x108] sm:$0xff]
  %v848 = vld [vmem:[%s824 + $0x110] sm:$0xff]
  %v849 = vld [vmem:[%s824 + $0x120] sm:$0xff]
  %v850 = vld [vmem:[%s824 + $0x128] sm:$0xff]
  %v851 = vld [vmem:[%s824 + $0x138] sm:$0xff]
  %v852 = vld [vmem:[%s824 + $0x140] sm:$0xff]
  %v853 = vld [vmem:[%s824 + $0x150] sm:$0xff]
  %v854 = vld [vmem:[%s824 + $0x158] sm:$0xff]
  %v855 = vld [vmem:[%s824 + $0x168] sm:$0xff]
  %v856 = vld [vmem:[%s824 + $0x170] sm:$0xff]
  %v857 = vld [vmem:[%s824 + $0x1b0] sm:$0xff]
  %v858 = vld [vmem:[%s824 + $0x1b8] sm:$0xff]
  %v859 = vld [vmem:[%s824 + $0x1c8] sm:$0xff]
  %v860 = vld [vmem:[%s824 + $0x1d0] sm:$0xff]
  %v861 = vld [vmem:[%s824 + $0x1e0] sm:$0xff]
  %v862 = vld [vmem:[%s824 + $0x1e8] sm:$0xff]
  %v863 = vld [vmem:[%s824 + $0x1f8] sm:$0xff]
  %v864 = vld [vmem:[%s824 + $0x200] sm:$0xff]
  %v865 = vld [vmem:[%s824 + $0x210] sm:$0xff]
  %v866 = vld [vmem:[%s824 + $0x218] sm:$0xff]
  %v867 = vld [vmem:[%s824 + $0x228] sm:$0xff]
  %v868 = vld [vmem:[%s824 + $0x230] sm:$0xff]
  %v869 = vld [vmem:[%s824 + $0x240] sm:$0xff]
  %v870 = vld [vmem:[%s824 + $0x248] sm:$0xff]
  %v871 = vld [vmem:[%s824 + $0x258] sm:$0xff]
  %v872 = vld [vmem:[%s824 + $0x260] sm:$0xff]
  %v873 = vld [vmem:[%s824 + $0x270] sm:$0xff]
  %v874 = vld [vmem:[%s824 + $0x278] sm:$0xff]
  %v875 = vld [vmem:[%s824 + $0x288] sm:$0xff]
  %v876 = vld [vmem:[%s824 + $0x290] sm:$0xff]
  %v877 = vld [vmem:[%s824 + $0x2a0] sm:$0xff]
  %v878 = vld [vmem:[%s824 + $0x2a8] sm:$0xff]
  %v879 = vld [vmem:[%s824 + $0x2b8] sm:$0xff]
  %v880 = vld [vmem:[%s824 + $0x2c0] sm:$0xff]
  %v881 = vld [vmem:[%s824 + $0x2d0] sm:$0xff]
  %v882 = vld [vmem:[%s824 + $0x2d8] sm:$0xff]
  %v883 = vld [vmem:[%s824 + $0x2e8] sm:$0xff]
  %v884 = vld [vmem:[%s824 + $0x2f0] sm:$0xff]
  %v885 = vld [vmem:[%s824 + $0x300] sm:$0xff]
  %v886 = vld [vmem:[%s824 + $0x308] sm:$0xff]
  %v887 = vld [vmem:[%s824 + $0x318] sm:$0xff]
  %v888 = vld [vmem:[%s824 + $0x320] sm:$0xff]
  %v889 = vld [vmem:[%s824 + $0x1] sm:$0xff]
  %v890 = vld [vmem:[%s824 + $0x9] sm:$0xff]
  %v891 = vld [vmem:[%s824 + $0x19] sm:$0xff]
  %v892 = vld [vmem:[%s824 + $0x21] sm:$0xff]
  %v893 = vld [vmem:[%s824 + $0x31] sm:$0xff]
  %v894 = vld [vmem:[%s824 + $0x39] sm:$0xff]
  %v895 = vld [vmem:[%s824 + $0x49] sm:$0xff]
  %v896 = vld [vmem:[%s824 + $0x51] sm:$0xff]
  %v897 = vld [vmem:[%s824 + $0x61] sm:$0xff]
  %v898 = vld [vmem:[%s824 + $0x69] sm:$0xff]
  %v899 = vld [vmem:[%s824 + $0x79] sm:$0xff]
  %v900 = vld [vmem:[%s824 + $0x81] sm:$0xff]
  %v901 = vld [vmem:[%s824 + $0x91] sm:$0xff]
  %v902 = vld [vmem:[%s824 + $0x99] sm:$0xff]
  %v903 = vld [vmem:[%s824 + $0xa9] sm:$0xff]
  %v904 = vld [vmem:[%s824 + $0xb1] sm:$0xff]
  %v905 = vld [vmem:[%s824 + $0xc1] sm:$0xff]
  %v906 = vld [vmem:[%s824 + $0xc9] sm:$0xff]
  %v907 = vld [vmem:[%s824 + $0xd9] sm:$0xff]
  %v908 = vld [vmem:[%s824 + $0xe1] sm:$0xff]
  %v909 = vld [vmem:[%s824 + $0xf1] sm:$0xff]
  %v910 = vld [vmem:[%s824 + $0xf9] sm:$0xff]
  %v911 = vld [vmem:[%s824 + $0x109] sm:$0xff]
  %v912 = vld [vmem:[%s824 + $0x111] sm:$0xff]
  %v913 = vld [vmem:[%s824 + $0x121] sm:$0xff]
  %v914 = vld [vmem:[%s824 + $0x129] sm:$0xff]
  %v915 = vld [vmem:[%s824 + $0x139] sm:$0xff]
  %v916 = vld [vmem:[%s824 + $0x141] sm:$0xff]
  %v917 = vld [vmem:[%s824 + $0x151] sm:$0xff]
  %v918 = vld [vmem:[%s824 + $0x159] sm:$0xff]
  %v919 = vld [vmem:[%s824 + $0x169] sm:$0xff]
  %v920 = vld [vmem:[%s824 + $0x171] sm:$0xff]
  %v921 = vld [vmem:[%s824 + $0x1b1] sm:$0xff]
  %v922 = vld [vmem:[%s824 + $0x1b9] sm:$0xff]
  %v923 = vld [vmem:[%s824 + $0x1c9] sm:$0xff]
  %v924 = vld [vmem:[%s824 + $0x1d1] sm:$0xff]
  %v925 = vld [vmem:[%s824 + $0x1e1] sm:$0xff]
  %v926 = vld [vmem:[%s824 + $0x1e9] sm:$0xff]
  %v927 = vld [vmem:[%s824 + $0x1f9] sm:$0xff]
  %v928 = vld [vmem:[%s824 + $0x201] sm:$0xff]
  %v929 = vld [vmem:[%s824 + $0x211] sm:$0xff]
  %v930 = vld [vmem:[%s824 + $0x219] sm:$0xff]
  %v931 = vld [vmem:[%s824 + $0x229] sm:$0xff]
  %v932 = vld [vmem:[%s824 + $0x231] sm:$0xff]
  %v933 = vld [vmem:[%s824 + $0x241] sm:$0xff]
  %v934 = vld [vmem:[%s824 + $0x249] sm:$0xff]
  %v935 = vld [vmem:[%s824 + $0x259] sm:$0xff]
  %v936 = vld [vmem:[%s824 + $0x261] sm:$0xff]
  %v937 = vld [vmem:[%s824 + $0x271] sm:$0xff]
  %v938 = vld [vmem:[%s824 + $0x279] sm:$0xff]
  %v939 = vld [vmem:[%s824 + $0x289] sm:$0xff]
  %v940 = vld [vmem:[%s824 + $0x291] sm:$0xff]
  %v941 = vld [vmem:[%s824 + $0x2a1] sm:$0xff]
  %v942 = vld [vmem:[%s824 + $0x2a9] sm:$0xff]
  %v943 = vld [vmem:[%s824 + $0x2b9] sm:$0xff]
  %v944 = vld [vmem:[%s824 + $0x2c1] sm:$0xff]
  %v945 = vld [vmem:[%s824 + $0x2d1] sm:$0xff]
  %v946 = vld [vmem:[%s824 + $0x2d9] sm:$0xff]
  %v947 = vld [vmem:[%s824 + $0x2e9] sm:$0xff]
  %v948 = vld [vmem:[%s824 + $0x2f1] sm:$0xff]
  %v949 = vld [vmem:[%s824 + $0x301] sm:$0xff]
  %v950 = vld [vmem:[%s824 + $0x309] sm:$0xff]
  %v951 = vld [vmem:[%s824 + $0x319] sm:$0xff]
  %v952 = vld [vmem:[%s824 + $0x321] sm:$0xff]
  %v953 = vld [vmem:[%s824 + $0x2] sm:$0xff]
  %v954 = vld [vmem:[%s824 + $0xa] sm:$0xff]
  %v955 = vld [vmem:[%s824 + $0x1a] sm:$0xff]
  %v956 = vld [vmem:[%s824 + $0x22] sm:$0xff]
  %v957 = vld [vmem:[%s824 + $0x32] sm:$0xff]
  %v958 = vld [vmem:[%s824 + $0x3a] sm:$0xff]
  %v959 = vld [vmem:[%s824 + $0x4a] sm:$0xff]
  %v960 = vld [vmem:[%s824 + $0x52] sm:$0xff]
  %v961 = vld [vmem:[%s824 + $0x62] sm:$0xff]
  %v962 = vld [vmem:[%s824 + $0x6a] sm:$0xff]
  %v963 = vld [vmem:[%s824 + $0x7a] sm:$0xff]
  %v964 = vld [vmem:[%s824 + $0x82] sm:$0xff]
  %v965 = vld [vmem:[%s824 + $0x92] sm:$0xff]
  %v966 = vld [vmem:[%s824 + $0x9a] sm:$0xff]
  %v967 = vld [vmem:[%s824 + $0xaa] sm:$0xff]
  %v968 = vld [vmem:[%s824 + $0xb2] sm:$0xff]
  %v969 = vld [vmem:[%s824 + $0xc2] sm:$0xff]
  %v970 = vld [vmem:[%s824 + $0xca] sm:$0xff]
  %v971 = vld [vmem:[%s824 + $0xda] sm:$0xff]
  %v972 = vld [vmem:[%s824 + $0xe2] sm:$0xff]
  %v973 = vld [vmem:[%s824 + $0xf2] sm:$0xff]
  %v974 = vld [vmem:[%s824 + $0xfa] sm:$0xff]
  %v975 = vld [vmem:[%s824 + $0x10a] sm:$0xff]
  %v976 = vld [vmem:[%s824 + $0x112] sm:$0xff]
  %v977 = vld [vmem:[%s824 + $0x122] sm:$0xff]
  %v978 = vld [vmem:[%s824 + $0x12a] sm:$0xff]
  %v979 = vld [vmem:[%s824 + $0x13a] sm:$0xff]
  %v980 = vld [vmem:[%s824 + $0x142] sm:$0xff]
  %v981 = vld [vmem:[%s824 + $0x152] sm:$0xff]
  %v982 = vld [vmem:[%s824 + $0x15a] sm:$0xff]
  %v983 = vld [vmem:[%s824 + $0x16a] sm:$0xff]
  %v984 = vld [vmem:[%s824 + $0x172] sm:$0xff]
  %v985 = vld [vmem:[%s824 + $0x1b2] sm:$0xff]
  %v986 = vld [vmem:[%s824 + $0x1ba] sm:$0xff]
  %v987 = vld [vmem:[%s824 + $0x1ca] sm:$0xff]
  %v988 = vld [vmem:[%s824 + $0x1d2] sm:$0xff]
  %v989 = vld [vmem:[%s824 + $0x1e2] sm:$0xff]
  %v990 = vld [vmem:[%s824 + $0x1ea] sm:$0xff]
  %v991 = vld [vmem:[%s824 + $0x1fa] sm:$0xff]
  %v992 = vld [vmem:[%s824 + $0x202] sm:$0xff]
  %v993 = vld [vmem:[%s824 + $0x212] sm:$0xff]
  %v994 = vld [vmem:[%s824 + $0x21a] sm:$0xff]
  %v995 = vld [vmem:[%s824 + $0x22a] sm:$0xff]
  %v996 = vld [vmem:[%s824 + $0x232] sm:$0xff]
  %v997 = vld [vmem:[%s824 + $0x242] sm:$0xff]
  %v998 = vld [vmem:[%s824 + $0x24a] sm:$0xff]
  %v999 = vld [vmem:[%s824 + $0x25a] sm:$0xff]
  %v1000 = vld [vmem:[%s824 + $0x262] sm:$0xff]
  %v1001 = vld [vmem:[%s824 + $0x272] sm:$0xff]
  %v1002 = vld [vmem:[%s824 + $0x27a] sm:$0xff]
  %v1003 = vld [vmem:[%s824 + $0x28a] sm:$0xff]
  %v1004 = vld [vmem:[%s824 + $0x292] sm:$0xff]
  %v1005 = vld [vmem:[%s824 + $0x2a2] sm:$0xff]
  %v1006 = vld [vmem:[%s824 + $0x2aa] sm:$0xff]
  %v1007 = vld [vmem:[%s824 + $0x2ba] sm:$0xff]
  %v1008 = vld [vmem:[%s824 + $0x2c2] sm:$0xff]
  %v1009 = vld [vmem:[%s824 + $0x2d2] sm:$0xff]
  %v1010 = vld [vmem:[%s824 + $0x2da] sm:$0xff]
  %v1011 = vld [vmem:[%s824 + $0x2ea] sm:$0xff]
  %v1012 = vld [vmem:[%s824 + $0x2f2] sm:$0xff]
  %v1013 = vld [vmem:[%s824 + $0x302] sm:$0xff]
  %v1014 = vld [vmem:[%s824 + $0x30a] sm:$0xff]
  %v1015 = vld [vmem:[%s824 + $0x31a] sm:$0xff]
  %v1016 = vld [vmem:[%s824 + $0x322] sm:$0xff]
  %1081 = vrot.lane.b32.xlu0 %v504, 4
  %v1082 = vpop.permute.xlu0 %1081
  %1083 = vrot.lane.b32.xlu0 %v505, 4
  %v1084 = vpop.permute.xlu0 %1083
  %1085 = vrot.lane.b32.xlu0 %v506, 4
  %v1086 = vpop.permute.xlu0 %1085
  %1087 = vrot.lane.b32.xlu0 %v507, 4
  %v1088 = vpop.permute.xlu0 %1087
  %1089 = vrot.lane.b32.xlu0 %v508, 4
  %v1090 = vpop.permute.xlu0 %1089
  %1091 = vrot.lane.b32.xlu0 %v509, 4
  %v1092 = vpop.permute.xlu0 %1091
  %1093 = vrot.lane.b32.xlu0 %v510, 4
  %v1094 = vpop.permute.xlu0 %1093
  %1095 = vrot.lane.b32.xlu0 %v511, 4
  %v1096 = vpop.permute.xlu0 %1095
  %1097 = vrot.lane.b32.xlu0 %v512, 4
  %v1098 = vpop.permute.xlu0 %1097
  %1099 = vrot.lane.b32.xlu0 %v513, 4
  %v1100 = vpop.permute.xlu0 %1099
  %1101 = vrot.lane.b32.xlu0 %v514, 4
  %v1102 = vpop.permute.xlu0 %1101
  %1103 = vrot.lane.b32.xlu0 %v515, 4
  %v1104 = vpop.permute.xlu0 %1103
  %1105 = vrot.lane.b32.xlu0 %v516, 4
  %v1106 = vpop.permute.xlu0 %1105
  %1107 = vrot.lane.b32.xlu0 %v517, 4
  %v1108 = vpop.permute.xlu0 %1107
  %1109 = vrot.lane.b32.xlu0 %v518, 4
  %v1110 = vpop.permute.xlu0 %1109
  %1111 = vrot.lane.b32.xlu0 %v519, 4
  %v1112 = vpop.permute.xlu0 %1111
  %1113 = vrot.lane.b32.xlu0 %v520, 4
  %v1114 = vpop.permute.xlu0 %1113
  %1115 = vrot.lane.b32.xlu0 %v521, 4
  %v1116 = vpop.permute.xlu0 %1115
  %1117 = vrot.lane.b32.xlu0 %v522, 4
  %v1118 = vpop.permute.xlu0 %1117
  %1119 = vrot.lane.b32.xlu0 %v523, 4
  %v1120 = vpop.permute.xlu0 %1119
  %1121 = vrot.lane.b32.xlu0 %v524, 4
  %v1122 = vpop.permute.xlu0 %1121
  %1123 = vrot.lane.b32.xlu0 %v525, 4
  %v1124 = vpop.permute.xlu0 %1123
  %1125 = vrot.lane.b32.xlu0 %v526, 4
  %v1126 = vpop.permute.xlu0 %1125
  %1127 = vrot.lane.b32.xlu0 %v527, 4
  %v1128 = vpop.permute.xlu0 %1127
  %1129 = vrot.lane.b32.xlu0 %v528, 4
  %v1130 = vpop.permute.xlu0 %1129
  %1131 = vrot.lane.b32.xlu0 %v529, 4
  %v1132 = vpop.permute.xlu0 %1131
  %1133 = vrot.lane.b32.xlu0 %v530, 4
  %v1134 = vpop.permute.xlu0 %1133
  %1135 = vrot.lane.b32.xlu0 %v531, 4
  %v1136 = vpop.permute.xlu0 %1135
  %1137 = vrot.lane.b32.xlu0 %v532, 4
  %v1138 = vpop.permute.xlu0 %1137
  %1139 = vrot.lane.b32.xlu0 %v533, 4
  %v1140 = vpop.permute.xlu0 %1139
  %1141 = vrot.lane.b32.xlu0 %v534, 4
  %v1142 = vpop.permute.xlu0 %1141
  %1143 = vrot.lane.b32.xlu0 %v535, 4
  %v1144 = vpop.permute.xlu0 %1143
  %1145 = vrot.lane.b32.xlu0 %v536, 4
  %v1146 = vpop.permute.xlu0 %1145
  %1147 = vrot.lane.b32.xlu0 %v537, 4
  %v1148 = vpop.permute.xlu0 %1147
  %1149 = vrot.lane.b32.xlu0 %v538, 4
  %v1150 = vpop.permute.xlu0 %1149
  %1151 = vrot.lane.b32.xlu0 %v539, 4
  %v1152 = vpop.permute.xlu0 %1151
  %1153 = vrot.lane.b32.xlu0 %v540, 4
  %v1154 = vpop.permute.xlu0 %1153
  %1155 = vrot.lane.b32.xlu0 %v541, 4
  %v1156 = vpop.permute.xlu0 %1155
  %1157 = vrot.lane.b32.xlu0 %v542, 4
  %v1158 = vpop.permute.xlu0 %1157
  %1159 = vrot.lane.b32.xlu0 %v543, 4
  %v1160 = vpop.permute.xlu0 %1159
  %1161 = vrot.lane.b32.xlu0 %v544, 4
  %v1162 = vpop.permute.xlu0 %1161
  %1163 = vrot.lane.b32.xlu0 %v545, 4
  %v1164 = vpop.permute.xlu0 %1163
  %1165 = vrot.lane.b32.xlu0 %v546, 4
  %v1166 = vpop.permute.xlu0 %1165
  %1167 = vrot.lane.b32.xlu0 %v547, 4
  %v1168 = vpop.permute.xlu0 %1167
  %1169 = vrot.lane.b32.xlu0 %v548, 4
  %v1170 = vpop.permute.xlu0 %1169
  %1171 = vrot.lane.b32.xlu0 %v549, 4
  %v1172 = vpop.permute.xlu0 %1171
  %1173 = vrot.lane.b32.xlu0 %v550, 4
  %v1174 = vpop.permute.xlu0 %1173
  %1175 = vrot.lane.b32.xlu0 %v551, 4
  %v1176 = vpop.permute.xlu0 %1175
  %1177 = vrot.lane.b32.xlu0 %v552, 4
  %v1178 = vpop.permute.xlu0 %1177
  %1179 = vrot.lane.b32.xlu0 %v553, 4
  %v1180 = vpop.permute.xlu0 %1179
  %1181 = vrot.lane.b32.xlu0 %v554, 4
  %v1182 = vpop.permute.xlu0 %1181
  %1183 = vrot.lane.b32.xlu0 %v555, 4
  %v1184 = vpop.permute.xlu0 %1183
  %1185 = vrot.lane.b32.xlu0 %v556, 4
  %v1186 = vpop.permute.xlu0 %1185
  %1187 = vrot.lane.b32.xlu0 %v557, 4
  %v1188 = vpop.permute.xlu0 %1187
  %1189 = vrot.lane.b32.xlu0 %v558, 4
  %v1190 = vpop.permute.xlu0 %1189
  %1191 = vrot.lane.b32.xlu0 %v559, 4
  %v1192 = vpop.permute.xlu0 %1191
  %1193 = vrot.lane.b32.xlu0 %v560, 4
  %v1194 = vpop.permute.xlu0 %1193
  %1195 = vrot.lane.b32.xlu0 %v561, 4
  %v1196 = vpop.permute.xlu0 %1195
  %1197 = vrot.lane.b32.xlu0 %v562, 4
  %v1198 = vpop.permute.xlu0 %1197
  %1199 = vrot.lane.b32.xlu0 %v563, 4
  %v1200 = vpop.permute.xlu0 %1199
  %1201 = vrot.lane.b32.xlu0 %v564, 4
  %v1202 = vpop.permute.xlu0 %1201
  %1203 = vrot.lane.b32.xlu0 %v565, 4
  %v1204 = vpop.permute.xlu0 %1203
  %1205 = vrot.lane.b32.xlu0 %v566, 4
  %v1206 = vpop.permute.xlu0 %1205
  %1207 = vrot.lane.b32.xlu0 %v567, 4
  %v1208 = vpop.permute.xlu0 %1207
  %1337 = vrot.lane.b32.xlu0 %v568, 8
  %v1338 = vpop.permute.xlu0 %1337
  %1339 = vrot.lane.b32.xlu0 %v569, 8
  %v1340 = vpop.permute.xlu0 %1339
  %1341 = vrot.lane.b32.xlu0 %v570, 8
  %v1342 = vpop.permute.xlu0 %1341
  %1343 = vrot.lane.b32.xlu0 %v571, 8
  %v1344 = vpop.permute.xlu0 %1343
  %1345 = vrot.lane.b32.xlu0 %v572, 8
  %v1346 = vpop.permute.xlu0 %1345
  %1347 = vrot.lane.b32.xlu0 %v573, 8
  %v1348 = vpop.permute.xlu0 %1347
  %1349 = vrot.lane.b32.xlu0 %v574, 8
  %v1350 = vpop.permute.xlu0 %1349
  %1351 = vrot.lane.b32.xlu0 %v575, 8
  %v1352 = vpop.permute.xlu0 %1351
  %1353 = vrot.lane.b32.xlu0 %v576, 8
  %v1354 = vpop.permute.xlu0 %1353
  %1355 = vrot.lane.b32.xlu0 %v577, 8
  %v1356 = vpop.permute.xlu0 %1355
  %1357 = vrot.lane.b32.xlu0 %v578, 8
  %v1358 = vpop.permute.xlu0 %1357
  %1359 = vrot.lane.b32.xlu0 %v579, 8
  %v1360 = vpop.permute.xlu0 %1359
  %1361 = vrot.lane.b32.xlu0 %v580, 8
  %v1362 = vpop.permute.xlu0 %1361
  %1363 = vrot.lane.b32.xlu0 %v581, 8
  %v1364 = vpop.permute.xlu0 %1363
  %1365 = vrot.lane.b32.xlu0 %v582, 8
  %v1366 = vpop.permute.xlu0 %1365
  %1367 = vrot.lane.b32.xlu0 %v583, 8
  %v1368 = vpop.permute.xlu0 %1367
  %1369 = vrot.lane.b32.xlu0 %v584, 8
  %v1370 = vpop.permute.xlu0 %1369
  %1371 = vrot.lane.b32.xlu0 %v585, 8
  %v1372 = vpop.permute.xlu0 %1371
  %1373 = vrot.lane.b32.xlu0 %v586, 8
  %v1374 = vpop.permute.xlu0 %1373
  %1375 = vrot.lane.b32.xlu0 %v587, 8
  %v1376 = vpop.permute.xlu0 %1375
  %1377 = vrot.lane.b32.xlu0 %v588, 8
  %v1378 = vpop.permute.xlu0 %1377
  %1379 = vrot.lane.b32.xlu0 %v589, 8
  %v1380 = vpop.permute.xlu0 %1379
  %1381 = vrot.lane.b32.xlu0 %v590, 8
  %v1382 = vpop.permute.xlu0 %1381
  %1383 = vrot.lane.b32.xlu0 %v591, 8
  %v1384 = vpop.permute.xlu0 %1383
  %1385 = vrot.lane.b32.xlu0 %v592, 8
  %v1386 = vpop.permute.xlu0 %1385
  %1387 = vrot.lane.b32.xlu0 %v593, 8
  %v1388 = vpop.permute.xlu0 %1387
  %1389 = vrot.lane.b32.xlu0 %v594, 8
  %v1390 = vpop.permute.xlu0 %1389
  %1391 = vrot.lane.b32.xlu0 %v595, 8
  %v1392 = vpop.permute.xlu0 %1391
  %1393 = vrot.lane.b32.xlu0 %v596, 8
  %v1394 = vpop.permute.xlu0 %1393
  %1395 = vrot.lane.b32.xlu0 %v597, 8
  %v1396 = vpop.permute.xlu0 %1395
  %1397 = vrot.lane.b32.xlu0 %v598, 8
  %v1398 = vpop.permute.xlu0 %1397
  %1399 = vrot.lane.b32.xlu0 %v599, 8
  %v1400 = vpop.permute.xlu0 %1399
  %1401 = vrot.lane.b32.xlu0 %v600, 8
  %v1402 = vpop.permute.xlu0 %1401
  %1403 = vrot.lane.b32.xlu0 %v601, 8
  %v1404 = vpop.permute.xlu0 %1403
  %1405 = vrot.lane.b32.xlu0 %v602, 8
  %v1406 = vpop.permute.xlu0 %1405
  %1407 = vrot.lane.b32.xlu0 %v603, 8
  %v1408 = vpop.permute.xlu0 %1407
  %1409 = vrot.lane.b32.xlu0 %v604, 8
  %v1410 = vpop.permute.xlu0 %1409
  %1411 = vrot.lane.b32.xlu0 %v605, 8
  %v1412 = vpop.permute.xlu0 %1411
  %1413 = vrot.lane.b32.xlu0 %v606, 8
  %v1414 = vpop.permute.xlu0 %1413
  %1415 = vrot.lane.b32.xlu0 %v607, 8
  %v1416 = vpop.permute.xlu0 %1415
  %1417 = vrot.lane.b32.xlu0 %v608, 8
  %v1418 = vpop.permute.xlu0 %1417
  %1419 = vrot.lane.b32.xlu0 %v609, 8
  %v1420 = vpop.permute.xlu0 %1419
  %1421 = vrot.lane.b32.xlu0 %v610, 8
  %v1422 = vpop.permute.xlu0 %1421
  %1423 = vrot.lane.b32.xlu0 %v611, 8
  %v1424 = vpop.permute.xlu0 %1423
  %1425 = vrot.lane.b32.xlu0 %v612, 8
  %v1426 = vpop.permute.xlu0 %1425
  %1427 = vrot.lane.b32.xlu0 %v613, 8
  %v1428 = vpop.permute.xlu0 %1427
  %1429 = vrot.lane.b32.xlu0 %v614, 8
  %v1430 = vpop.permute.xlu0 %1429
  %1431 = vrot.lane.b32.xlu0 %v615, 8
  %v1432 = vpop.permute.xlu0 %1431
  %1433 = vrot.lane.b32.xlu0 %v616, 8
  %v1434 = vpop.permute.xlu0 %1433
  %1435 = vrot.lane.b32.xlu0 %v617, 8
  %v1436 = vpop.permute.xlu0 %1435
  %1437 = vrot.lane.b32.xlu0 %v618, 8
  %v1438 = vpop.permute.xlu0 %1437
  %1439 = vrot.lane.b32.xlu0 %v619, 8
  %v1440 = vpop.permute.xlu0 %1439
  %1441 = vrot.lane.b32.xlu0 %v620, 8
  %v1442 = vpop.permute.xlu0 %1441
  %1443 = vrot.lane.b32.xlu0 %v621, 8
  %v1444 = vpop.permute.xlu0 %1443
  %1445 = vrot.lane.b32.xlu0 %v622, 8
  %v1446 = vpop.permute.xlu0 %1445
  %1447 = vrot.lane.b32.xlu0 %v623, 8
  %v1448 = vpop.permute.xlu0 %1447
  %1449 = vrot.lane.b32.xlu0 %v624, 8
  %v1450 = vpop.permute.xlu0 %1449
  %1451 = vrot.lane.b32.xlu0 %v625, 8
  %v1452 = vpop.permute.xlu0 %1451
  %1453 = vrot.lane.b32.xlu0 %v626, 8
  %v1454 = vpop.permute.xlu0 %1453
  %1455 = vrot.lane.b32.xlu0 %v627, 8
  %v1456 = vpop.permute.xlu0 %1455
  %1457 = vrot.lane.b32.xlu0 %v628, 8
  %v1458 = vpop.permute.xlu0 %1457
  %1459 = vrot.lane.b32.xlu0 %v629, 8
  %v1460 = vpop.permute.xlu0 %1459
  %1461 = vrot.lane.b32.xlu0 %v630, 8
  %v1462 = vpop.permute.xlu0 %1461
  %1463 = vrot.lane.b32.xlu0 %v631, 8
  %v1464 = vpop.permute.xlu0 %1463
  %1593 = vrot.lane.b32.xlu0 %v632, 12
  %v1594 = vpop.permute.xlu0 %1593
  %1595 = vrot.lane.b32.xlu0 %v633, 12
  %v1596 = vpop.permute.xlu0 %1595
  %1597 = vrot.lane.b32.xlu0 %v634, 12
  %v1598 = vpop.permute.xlu0 %1597
  %1599 = vrot.lane.b32.xlu0 %v635, 12
  %v1600 = vpop.permute.xlu0 %1599
  %1601 = vrot.lane.b32.xlu0 %v636, 12
  %v1602 = vpop.permute.xlu0 %1601
  %1603 = vrot.lane.b32.xlu0 %v637, 12
  %v1604 = vpop.permute.xlu0 %1603
  %1605 = vrot.lane.b32.xlu0 %v638, 12
  %v1606 = vpop.permute.xlu0 %1605
  %1607 = vrot.lane.b32.xlu0 %v639, 12
  %v1608 = vpop.permute.xlu0 %1607
  %1609 = vrot.lane.b32.xlu0 %v640, 12
  %v1610 = vpop.permute.xlu0 %1609
  %1611 = vrot.lane.b32.xlu0 %v641, 12
  %v1612 = vpop.permute.xlu0 %1611
  %1613 = vrot.lane.b32.xlu0 %v642, 12
  %v1614 = vpop.permute.xlu0 %1613
  %1615 = vrot.lane.b32.xlu0 %v643, 12
  %v1616 = vpop.permute.xlu0 %1615
  %1617 = vrot.lane.b32.xlu0 %v644, 12
  %v1618 = vpop.permute.xlu0 %1617
  %1619 = vrot.lane.b32.xlu0 %v645, 12
  %v1620 = vpop.permute.xlu0 %1619
  %1621 = vrot.lane.b32.xlu0 %v646, 12
  %v1622 = vpop.permute.xlu0 %1621
  %1623 = vrot.lane.b32.xlu0 %v647, 12
  %v1624 = vpop.permute.xlu0 %1623
  %1625 = vrot.lane.b32.xlu0 %v648, 12
  %v1626 = vpop.permute.xlu0 %1625
  %1627 = vrot.lane.b32.xlu0 %v649, 12
  %v1628 = vpop.permute.xlu0 %1627
  %1629 = vrot.lane.b32.xlu0 %v650, 12
  %v1630 = vpop.permute.xlu0 %1629
  %1631 = vrot.lane.b32.xlu0 %v651, 12
  %v1632 = vpop.permute.xlu0 %1631
  %1633 = vrot.lane.b32.xlu0 %v652, 12
  %v1634 = vpop.permute.xlu0 %1633
  %1635 = vrot.lane.b32.xlu0 %v653, 12
  %v1636 = vpop.permute.xlu0 %1635
  %1637 = vrot.lane.b32.xlu0 %v654, 12
  %v1638 = vpop.permute.xlu0 %1637
  %1639 = vrot.lane.b32.xlu0 %v655, 12
  %v1640 = vpop.permute.xlu0 %1639
  %1641 = vrot.lane.b32.xlu0 %v656, 12
  %v1642 = vpop.permute.xlu0 %1641
  %1643 = vrot.lane.b32.xlu0 %v657, 12
  %v1644 = vpop.permute.xlu0 %1643
  %1645 = vrot.lane.b32.xlu0 %v658, 12
  %v1646 = vpop.permute.xlu0 %1645
  %1647 = vrot.lane.b32.xlu0 %v659, 12
  %v1648 = vpop.permute.xlu0 %1647
  %1649 = vrot.lane.b32.xlu0 %v660, 12
  %v1650 = vpop.permute.xlu0 %1649
  %1651 = vrot.lane.b32.xlu0 %v661, 12
  %v1652 = vpop.permute.xlu0 %1651
  %1653 = vrot.lane.b32.xlu0 %v662, 12
  %v1654 = vpop.permute.xlu0 %1653
  %1655 = vrot.lane.b32.xlu0 %v663, 12
  %v1656 = vpop.permute.xlu0 %1655
  %1657 = vrot.lane.b32.xlu0 %v664, 12
  %v1658 = vpop.permute.xlu0 %1657
  %1659 = vrot.lane.b32.xlu0 %v665, 12
  %v1660 = vpop.permute.xlu0 %1659
  %1661 = vrot.lane.b32.xlu0 %v666, 12
  %v1662 = vpop.permute.xlu0 %1661
  %1663 = vrot.lane.b32.xlu0 %v667, 12
  %v1664 = vpop.permute.xlu0 %1663
  %1665 = vrot.lane.b32.xlu0 %v668, 12
  %v1666 = vpop.permute.xlu0 %1665
  %1667 = vrot.lane.b32.xlu0 %v669, 12
  %v1668 = vpop.permute.xlu0 %1667
  %1669 = vrot.lane.b32.xlu0 %v670, 12
  %v1670 = vpop.permute.xlu0 %1669
  %1671 = vrot.lane.b32.xlu0 %v671, 12
  %v1672 = vpop.permute.xlu0 %1671
  %1673 = vrot.lane.b32.xlu0 %v672, 12
  %v1674 = vpop.permute.xlu0 %1673
  %1675 = vrot.lane.b32.xlu0 %v673, 12
  %v1676 = vpop.permute.xlu0 %1675
  %1677 = vrot.lane.b32.xlu0 %v674, 12
  %v1678 = vpop.permute.xlu0 %1677
  %1679 = vrot.lane.b32.xlu0 %v675, 12
  %v1680 = vpop.permute.xlu0 %1679
  %1681 = vrot.lane.b32.xlu0 %v676, 12
  %v1682 = vpop.permute.xlu0 %1681
  %1683 = vrot.lane.b32.xlu0 %v677, 12
  %v1684 = vpop.permute.xlu0 %1683
  %1685 = vrot.lane.b32.xlu0 %v678, 12
  %v1686 = vpop.permute.xlu0 %1685
  %1687 = vrot.lane.b32.xlu0 %v679, 12
  %v1688 = vpop.permute.xlu0 %1687
  %1689 = vrot.lane.b32.xlu0 %v680, 12
  %v1690 = vpop.permute.xlu0 %1689
  %1691 = vrot.lane.b32.xlu0 %v681, 12
  %v1692 = vpop.permute.xlu0 %1691
  %1693 = vrot.lane.b32.xlu0 %v682, 12
  %v1694 = vpop.permute.xlu0 %1693
  %1695 = vrot.lane.b32.xlu0 %v683, 12
  %v1696 = vpop.permute.xlu0 %1695
  %1697 = vrot.lane.b32.xlu0 %v684, 12
  %v1698 = vpop.permute.xlu0 %1697
  %1699 = vrot.lane.b32.xlu0 %v685, 12
  %v1700 = vpop.permute.xlu0 %1699
  %1701 = vrot.lane.b32.xlu0 %v686, 12
  %v1702 = vpop.permute.xlu0 %1701
  %1703 = vrot.lane.b32.xlu0 %v687, 12
  %v1704 = vpop.permute.xlu0 %1703
  %1705 = vrot.lane.b32.xlu0 %v688, 12
  %v1706 = vpop.permute.xlu0 %1705
  %1707 = vrot.lane.b32.xlu0 %v689, 12
  %v1708 = vpop.permute.xlu0 %1707
  %1709 = vrot.lane.b32.xlu0 %v690, 12
  %v1710 = vpop.permute.xlu0 %1709
  %1711 = vrot.lane.b32.xlu0 %v691, 12
  %v1712 = vpop.permute.xlu0 %1711
  %1713 = vrot.lane.b32.xlu0 %v692, 12
  %v1714 = vpop.permute.xlu0 %1713
  %1715 = vrot.lane.b32.xlu0 %v693, 12
  %v1716 = vpop.permute.xlu0 %1715
  %1717 = vrot.lane.b32.xlu0 %v694, 12
  %v1718 = vpop.permute.xlu0 %1717
  %1719 = vrot.lane.b32.xlu0 %v695, 12
  %v1720 = vpop.permute.xlu0 %1719
  %1849 = vrot.lane.b32.xlu0 %v696, 16
  %v1850 = vpop.permute.xlu0 %1849
  %1851 = vrot.lane.b32.xlu0 %v697, 16
  %v1852 = vpop.permute.xlu0 %1851
  %1853 = vrot.lane.b32.xlu0 %v698, 16
  %v1854 = vpop.permute.xlu0 %1853
  %1855 = vrot.lane.b32.xlu0 %v699, 16
  %v1856 = vpop.permute.xlu0 %1855
  %1857 = vrot.lane.b32.xlu0 %v700, 16
  %v1858 = vpop.permute.xlu0 %1857
  %1859 = vrot.lane.b32.xlu0 %v701, 16
  %v1860 = vpop.permute.xlu0 %1859
  %1861 = vrot.lane.b32.xlu0 %v702, 16
  %v1862 = vpop.permute.xlu0 %1861
  %1863 = vrot.lane.b32.xlu0 %v703, 16
  %v1864 = vpop.permute.xlu0 %1863
  %1865 = vrot.lane.b32.xlu0 %v704, 16
  %v1866 = vpop.permute.xlu0 %1865
  %1867 = vrot.lane.b32.xlu0 %v705, 16
  %v1868 = vpop.permute.xlu0 %1867
  %1869 = vrot.lane.b32.xlu0 %v706, 16
  %v1870 = vpop.permute.xlu0 %1869
  %1871 = vrot.lane.b32.xlu0 %v707, 16
  %v1872 = vpop.permute.xlu0 %1871
  %1873 = vrot.lane.b32.xlu0 %v708, 16
  %v1874 = vpop.permute.xlu0 %1873
  %1875 = vrot.lane.b32.xlu0 %v709, 16
  %v1876 = vpop.permute.xlu0 %1875
  %1877 = vrot.lane.b32.xlu0 %v710, 16
  %v1878 = vpop.permute.xlu0 %1877
  %1879 = vrot.lane.b32.xlu0 %v711, 16
  %v1880 = vpop.permute.xlu0 %1879
  %1881 = vrot.lane.b32.xlu0 %v712, 16
  %v1882 = vpop.permute.xlu0 %1881
  %1883 = vrot.lane.b32.xlu0 %v713, 16
  %v1884 = vpop.permute.xlu0 %1883
  %1885 = vrot.lane.b32.xlu0 %v714, 16
  %v1886 = vpop.permute.xlu0 %1885
  %1887 = vrot.lane.b32.xlu0 %v715, 16
  %v1888 = vpop.permute.xlu0 %1887
  %1889 = vrot.lane.b32.xlu0 %v716, 16
  %v1890 = vpop.permute.xlu0 %1889
  %1891 = vrot.lane.b32.xlu0 %v717, 16
  %v1892 = vpop.permute.xlu0 %1891
  %1893 = vrot.lane.b32.xlu0 %v718, 16
  %v1894 = vpop.permute.xlu0 %1893
  %1895 = vrot.lane.b32.xlu0 %v719, 16
  %v1896 = vpop.permute.xlu0 %1895
  %1897 = vrot.lane.b32.xlu0 %v720, 16
  %v1898 = vpop.permute.xlu0 %1897
  %1899 = vrot.lane.b32.xlu0 %v721, 16
  %v1900 = vpop.permute.xlu0 %1899
  %1901 = vrot.lane.b32.xlu0 %v722, 16
  %v1902 = vpop.permute.xlu0 %1901
  %1903 = vrot.lane.b32.xlu0 %v723, 16
  %v1904 = vpop.permute.xlu0 %1903
  %1905 = vrot.lane.b32.xlu0 %v724, 16
  %v1906 = vpop.permute.xlu0 %1905
  %1907 = vrot.lane.b32.xlu0 %v725, 16
  %v1908 = vpop.permute.xlu0 %1907
  %1909 = vrot.lane.b32.xlu0 %v726, 16
  %v1910 = vpop.permute.xlu0 %1909
  %1911 = vrot.lane.b32.xlu0 %v727, 16
  %v1912 = vpop.permute.xlu0 %1911
  %1913 = vrot.lane.b32.xlu0 %v728, 16
  %v1914 = vpop.permute.xlu0 %1913
  %1915 = vrot.lane.b32.xlu0 %v729, 16
  %v1916 = vpop.permute.xlu0 %1915
  %1917 = vrot.lane.b32.xlu0 %v730, 16
  %v1918 = vpop.permute.xlu0 %1917
  %1919 = vrot.lane.b32.xlu0 %v731, 16
  %v1920 = vpop.permute.xlu0 %1919
  %1921 = vrot.lane.b32.xlu0 %v732, 16
  %v1922 = vpop.permute.xlu0 %1921
  %1923 = vrot.lane.b32.xlu0 %v733, 16
  %v1924 = vpop.permute.xlu0 %1923
  %1925 = vrot.lane.b32.xlu0 %v734, 16
  %v1926 = vpop.permute.xlu0 %1925
  %1927 = vrot.lane.b32.xlu0 %v735, 16
  %v1928 = vpop.permute.xlu0 %1927
  %1929 = vrot.lane.b32.xlu0 %v736, 16
  %v1930 = vpop.permute.xlu0 %1929
  %1931 = vrot.lane.b32.xlu0 %v737, 16
  %v1932 = vpop.permute.xlu0 %1931
  %1933 = vrot.lane.b32.xlu0 %v738, 16
  %v1934 = vpop.permute.xlu0 %1933
  %1935 = vrot.lane.b32.xlu0 %v739, 16
  %v1936 = vpop.permute.xlu0 %1935
  %1937 = vrot.lane.b32.xlu0 %v740, 16
  %v1938 = vpop.permute.xlu0 %1937
  %1939 = vrot.lane.b32.xlu0 %v741, 16
  %v1940 = vpop.permute.xlu0 %1939
  %1941 = vrot.lane.b32.xlu0 %v742, 16
  %v1942 = vpop.permute.xlu0 %1941
  %1943 = vrot.lane.b32.xlu0 %v743, 16
  %v1944 = vpop.permute.xlu0 %1943
  %1945 = vrot.lane.b32.xlu0 %v744, 16
  %v1946 = vpop.permute.xlu0 %1945
  %1947 = vrot.lane.b32.xlu0 %v745, 16
  %v1948 = vpop.permute.xlu0 %1947
  %1949 = vrot.lane.b32.xlu0 %v746, 16
  %v1950 = vpop.permute.xlu0 %1949
  %1951 = vrot.lane.b32.xlu0 %v747, 16
  %v1952 = vpop.permute.xlu0 %1951
  %1953 = vrot.lane.b32.xlu0 %v748, 16
  %v1954 = vpop.permute.xlu0 %1953
  %1955 = vrot.lane.b32.xlu0 %v749, 16
  %v1956 = vpop.permute.xlu0 %1955
  %1957 = vrot.lane.b32.xlu0 %v750, 16
  %v1958 = vpop.permute.xlu0 %1957
  %1959 = vrot.lane.b32.xlu0 %v751, 16
  %v1960 = vpop.permute.xlu0 %1959
  %1961 = vrot.lane.b32.xlu0 %v752, 16
  %v1962 = vpop.permute.xlu0 %1961
  %1963 = vrot.lane.b32.xlu0 %v753, 16
  %v1964 = vpop.permute.xlu0 %1963
  %1965 = vrot.lane.b32.xlu0 %v754, 16
  %v1966 = vpop.permute.xlu0 %1965
  %1967 = vrot.lane.b32.xlu0 %v755, 16
  %v1968 = vpop.permute.xlu0 %1967
  %1969 = vrot.lane.b32.xlu0 %v756, 16
  %v1970 = vpop.permute.xlu0 %1969
  %1971 = vrot.lane.b32.xlu0 %v757, 16
  %v1972 = vpop.permute.xlu0 %1971
  %1973 = vrot.lane.b32.xlu0 %v758, 16
  %v1974 = vpop.permute.xlu0 %1973
  %1975 = vrot.lane.b32.xlu0 %v759, 16
  %v1976 = vpop.permute.xlu0 %1975
  %2105 = vrot.lane.b32.xlu0 %v760, 20
  %v2106 = vpop.permute.xlu0 %2105
  %2107 = vrot.lane.b32.xlu0 %v761, 20
  %v2108 = vpop.permute.xlu0 %2107
  %2109 = vrot.lane.b32.xlu0 %v762, 20
  %v2110 = vpop.permute.xlu0 %2109
  %2111 = vrot.lane.b32.xlu0 %v763, 20
  %v2112 = vpop.permute.xlu0 %2111
  %2113 = vrot.lane.b32.xlu0 %v764, 20
  %v2114 = vpop.permute.xlu0 %2113
  %2115 = vrot.lane.b32.xlu0 %v765, 20
  %v2116 = vpop.permute.xlu0 %2115
  %2117 = vrot.lane.b32.xlu0 %v766, 20
  %v2118 = vpop.permute.xlu0 %2117
  %2119 = vrot.lane.b32.xlu0 %v767, 20
  %v2120 = vpop.permute.xlu0 %2119
  %2121 = vrot.lane.b32.xlu0 %v768, 20
  %v2122 = vpop.permute.xlu0 %2121
  %2123 = vrot.lane.b32.xlu0 %v769, 20
  %v2124 = vpop.permute.xlu0 %2123
  %2125 = vrot.lane.b32.xlu0 %v770, 20
  %v2126 = vpop.permute.xlu0 %2125
  %2127 = vrot.lane.b32.xlu0 %v771, 20
  %v2128 = vpop.permute.xlu0 %2127
  %2129 = vrot.lane.b32.xlu0 %v772, 20
  %v2130 = vpop.permute.xlu0 %2129
  %2131 = vrot.lane.b32.xlu0 %v773, 20
  %v2132 = vpop.permute.xlu0 %2131
  %2133 = vrot.lane.b32.xlu0 %v774, 20
  %v2134 = vpop.permute.xlu0 %2133
  %2135 = vrot.lane.b32.xlu0 %v775, 20
  %v2136 = vpop.permute.xlu0 %2135
  %2137 = vrot.lane.b32.xlu0 %v776, 20
  %v2138 = vpop.permute.xlu0 %2137
  %2139 = vrot.lane.b32.xlu0 %v777, 20
  %v2140 = vpop.permute.xlu0 %2139
  %2141 = vrot.lane.b32.xlu0 %v778, 20
  %v2142 = vpop.permute.xlu0 %2141
  %2143 = vrot.lane.b32.xlu0 %v779, 20
  %v2144 = vpop.permute.xlu0 %2143
  %2145 = vrot.lane.b32.xlu0 %v780, 20
  %v2146 = vpop.permute.xlu0 %2145
  %2147 = vrot.lane.b32.xlu0 %v781, 20
  %v2148 = vpop.permute.xlu0 %2147
  %2149 = vrot.lane.b32.xlu0 %v782, 20
  %v2150 = vpop.permute.xlu0 %2149
  %2151 = vrot.lane.b32.xlu0 %v783, 20
  %v2152 = vpop.permute.xlu0 %2151
  %2153 = vrot.lane.b32.xlu0 %v784, 20
  %v2154 = vpop.permute.xlu0 %2153
  %2155 = vrot.lane.b32.xlu0 %v785, 20
  %v2156 = vpop.permute.xlu0 %2155
  %2157 = vrot.lane.b32.xlu0 %v786, 20
  %v2158 = vpop.permute.xlu0 %2157
  %2159 = vrot.lane.b32.xlu0 %v787, 20
  %v2160 = vpop.permute.xlu0 %2159
  %2161 = vrot.lane.b32.xlu0 %v788, 20
  %v2162 = vpop.permute.xlu0 %2161
  %2163 = vrot.lane.b32.xlu0 %v789, 20
  %v2164 = vpop.permute.xlu0 %2163
  %2165 = vrot.lane.b32.xlu0 %v790, 20
  %v2166 = vpop.permute.xlu0 %2165
  %2167 = vrot.lane.b32.xlu0 %v791, 20
  %v2168 = vpop.permute.xlu0 %2167
  %2169 = vrot.lane.b32.xlu0 %v792, 20
  %v2170 = vpop.permute.xlu0 %2169
  %2171 = vrot.lane.b32.xlu0 %v793, 20
  %v2172 = vpop.permute.xlu0 %2171
  %2173 = vrot.lane.b32.xlu0 %v794, 20
  %v2174 = vpop.permute.xlu0 %2173
  %2175 = vrot.lane.b32.xlu0 %v795, 20
  %v2176 = vpop.permute.xlu0 %2175
  %2177 = vrot.lane.b32.xlu0 %v796, 20
  %v2178 = vpop.permute.xlu0 %2177
  %2179 = vrot.lane.b32.xlu0 %v797, 20
  %v2180 = vpop.permute.xlu0 %2179
  %2181 = vrot.lane.b32.xlu0 %v798, 20
  %v2182 = vpop.permute.xlu0 %2181
  %2183 = vrot.lane.b32.xlu0 %v799, 20
  %v2184 = vpop.permute.xlu0 %2183
  %2185 = vrot.lane.b32.xlu0 %v800, 20
  %v2186 = vpop.permute.xlu0 %2185
  %2187 = vrot.lane.b32.xlu0 %v801, 20
  %v2188 = vpop.permute.xlu0 %2187
  %2189 = vrot.lane.b32.xlu0 %v802, 20
  %v2190 = vpop.permute.xlu0 %2189
  %2191 = vrot.lane.b32.xlu0 %v803, 20
  %v2192 = vpop.permute.xlu0 %2191
  %2193 = vrot.lane.b32.xlu0 %v804, 20
  %v2194 = vpop.permute.xlu0 %2193
  %2195 = vrot.lane.b32.xlu0 %v805, 20
  %v2196 = vpop.permute.xlu0 %2195
  %2197 = vrot.lane.b32.xlu0 %v806, 20
  %v2198 = vpop.permute.xlu0 %2197
  %2199 = vrot.lane.b32.xlu0 %v807, 20
  %v2200 = vpop.permute.xlu0 %2199
  %2201 = vrot.lane.b32.xlu0 %v808, 20
  %v2202 = vpop.permute.xlu0 %2201
  %2203 = vrot.lane.b32.xlu0 %v809, 20
  %v2204 = vpop.permute.xlu0 %2203
  %2205 = vrot.lane.b32.xlu0 %v810, 20
  %v2206 = vpop.permute.xlu0 %2205
  %2207 = vrot.lane.b32.xlu0 %v811, 20
  %v2208 = vpop.permute.xlu0 %2207
  %2209 = vrot.lane.b32.xlu0 %v812, 20
  %v2210 = vpop.permute.xlu0 %2209
  %2211 = vrot.lane.b32.xlu0 %v813, 20
  %v2212 = vpop.permute.xlu0 %2211
  %2213 = vrot.lane.b32.xlu0 %v814, 20
  %v2214 = vpop.permute.xlu0 %2213
  %2215 = vrot.lane.b32.xlu0 %v815, 20
  %v2216 = vpop.permute.xlu0 %2215
  %2217 = vrot.lane.b32.xlu0 %v816, 20
  %v2218 = vpop.permute.xlu0 %2217
  %2219 = vrot.lane.b32.xlu0 %v817, 20
  %v2220 = vpop.permute.xlu0 %2219
  %2221 = vrot.lane.b32.xlu0 %v818, 20
  %v2222 = vpop.permute.xlu0 %2221
  %2223 = vrot.lane.b32.xlu0 %v819, 20
  %v2224 = vpop.permute.xlu0 %2223
  %2225 = vrot.lane.b32.xlu0 %v820, 20
  %v2226 = vpop.permute.xlu0 %2225
  %2227 = vrot.lane.b32.xlu0 %v821, 20
  %v2228 = vpop.permute.xlu0 %2227
  %2229 = vrot.lane.b32.xlu0 %v822, 20
  %v2230 = vpop.permute.xlu0 %2229
  %2231 = vrot.lane.b32.xlu0 %v823, 20
  %v2232 = vpop.permute.xlu0 %2231
  %2361 = vrot.lane.b32.xlu0 %v825, 24
  %v2362 = vpop.permute.xlu0 %2361
  %2363 = vrot.lane.b32.xlu0 %v826, 24
  %v2364 = vpop.permute.xlu0 %2363
  %2365 = vrot.lane.b32.xlu0 %v827, 24
  %v2366 = vpop.permute.xlu0 %2365
  %2367 = vrot.lane.b32.xlu0 %v828, 24
  %v2368 = vpop.permute.xlu0 %2367
  %2369 = vrot.lane.b32.xlu0 %v829, 24
  %v2370 = vpop.permute.xlu0 %2369
  %2371 = vrot.lane.b32.xlu0 %v830, 24
  %v2372 = vpop.permute.xlu0 %2371
  %2373 = vrot.lane.b32.xlu0 %v831, 24
  %v2374 = vpop.permute.xlu0 %2373
  %2375 = vrot.lane.b32.xlu0 %v832, 24
  %v2376 = vpop.permute.xlu0 %2375
  %2377 = vrot.lane.b32.xlu0 %v833, 24
  %v2378 = vpop.permute.xlu0 %2377
  %2379 = vrot.lane.b32.xlu0 %v834, 24
  %v2380 = vpop.permute.xlu0 %2379
  %2381 = vrot.lane.b32.xlu0 %v835, 24
  %v2382 = vpop.permute.xlu0 %2381
  %2383 = vrot.lane.b32.xlu0 %v836, 24
  %v2384 = vpop.permute.xlu0 %2383
  %2385 = vrot.lane.b32.xlu0 %v837, 24
  %v2386 = vpop.permute.xlu0 %2385
  %2387 = vrot.lane.b32.xlu0 %v838, 24
  %v2388 = vpop.permute.xlu0 %2387
  %2389 = vrot.lane.b32.xlu0 %v839, 24
  %v2390 = vpop.permute.xlu0 %2389
  %2391 = vrot.lane.b32.xlu0 %v840, 24
  %v2392 = vpop.permute.xlu0 %2391
  %2393 = vrot.lane.b32.xlu0 %v841, 24
  %v2394 = vpop.permute.xlu0 %2393
  %2395 = vrot.lane.b32.xlu0 %v842, 24
  %v2396 = vpop.permute.xlu0 %2395
  %2397 = vrot.lane.b32.xlu0 %v843, 24
  %v2398 = vpop.permute.xlu0 %2397
  %2399 = vrot.lane.b32.xlu0 %v844, 24
  %v2400 = vpop.permute.xlu0 %2399
  %2401 = vrot.lane.b32.xlu0 %v845, 24
  %v2402 = vpop.permute.xlu0 %2401
  %2403 = vrot.lane.b32.xlu0 %v846, 24
  %v2404 = vpop.permute.xlu0 %2403
  %2405 = vrot.lane.b32.xlu0 %v847, 24
  %v2406 = vpop.permute.xlu0 %2405
  %2407 = vrot.lane.b32.xlu0 %v848, 24
  %v2408 = vpop.permute.xlu0 %2407
  %2409 = vrot.lane.b32.xlu0 %v849, 24
  %v2410 = vpop.permute.xlu0 %2409
  %2411 = vrot.lane.b32.xlu0 %v850, 24
  %v2412 = vpop.permute.xlu0 %2411
  %2413 = vrot.lane.b32.xlu0 %v851, 24
  %v2414 = vpop.permute.xlu0 %2413
  %2415 = vrot.lane.b32.xlu0 %v852, 24
  %v2416 = vpop.permute.xlu0 %2415
  %2417 = vrot.lane.b32.xlu0 %v853, 24
  %v2418 = vpop.permute.xlu0 %2417
  %2419 = vrot.lane.b32.xlu0 %v854, 24
  %v2420 = vpop.permute.xlu0 %2419
  %2421 = vrot.lane.b32.xlu0 %v855, 24
  %v2422 = vpop.permute.xlu0 %2421
  %2423 = vrot.lane.b32.xlu0 %v856, 24
  %v2424 = vpop.permute.xlu0 %2423
  %2425 = vrot.lane.b32.xlu0 %v857, 24
  %v2426 = vpop.permute.xlu0 %2425
  %2427 = vrot.lane.b32.xlu0 %v858, 24
  %v2428 = vpop.permute.xlu0 %2427
  %2429 = vrot.lane.b32.xlu0 %v859, 24
  %v2430 = vpop.permute.xlu0 %2429
  %2431 = vrot.lane.b32.xlu0 %v860, 24
  %v2432 = vpop.permute.xlu0 %2431
  %2433 = vrot.lane.b32.xlu0 %v861, 24
  %v2434 = vpop.permute.xlu0 %2433
  %2435 = vrot.lane.b32.xlu0 %v862, 24
  %v2436 = vpop.permute.xlu0 %2435
  %2437 = vrot.lane.b32.xlu0 %v863, 24
  %v2438 = vpop.permute.xlu0 %2437
  %2439 = vrot.lane.b32.xlu0 %v864, 24
  %v2440 = vpop.permute.xlu0 %2439
  %2441 = vrot.lane.b32.xlu0 %v865, 24
  %v2442 = vpop.permute.xlu0 %2441
  %2443 = vrot.lane.b32.xlu0 %v866, 24
  %v2444 = vpop.permute.xlu0 %2443
  %2445 = vrot.lane.b32.xlu0 %v867, 24
  %v2446 = vpop.permute.xlu0 %2445
  %2447 = vrot.lane.b32.xlu0 %v868, 24
  %v2448 = vpop.permute.xlu0 %2447
  %2449 = vrot.lane.b32.xlu0 %v869, 24
  %v2450 = vpop.permute.xlu0 %2449
  %2451 = vrot.lane.b32.xlu0 %v870, 24
  %v2452 = vpop.permute.xlu0 %2451
  %2453 = vrot.lane.b32.xlu0 %v871, 24
  %v2454 = vpop.permute.xlu0 %2453
  %2455 = vrot.lane.b32.xlu0 %v872, 24
  %v2456 = vpop.permute.xlu0 %2455
  %2457 = vrot.lane.b32.xlu0 %v873, 24
  %v2458 = vpop.permute.xlu0 %2457
  %2459 = vrot.lane.b32.xlu0 %v874, 24
  %v2460 = vpop.permute.xlu0 %2459
  %2461 = vrot.lane.b32.xlu0 %v875, 24
  %v2462 = vpop.permute.xlu0 %2461
  %2463 = vrot.lane.b32.xlu0 %v876, 24
  %v2464 = vpop.permute.xlu0 %2463
  %2465 = vrot.lane.b32.xlu0 %v877, 24
  %v2466 = vpop.permute.xlu0 %2465
  %2467 = vrot.lane.b32.xlu0 %v878, 24
  %v2468 = vpop.permute.xlu0 %2467
  %2469 = vrot.lane.b32.xlu0 %v879, 24
  %v2470 = vpop.permute.xlu0 %2469
  %2471 = vrot.lane.b32.xlu0 %v880, 24
  %v2472 = vpop.permute.xlu0 %2471
  %2473 = vrot.lane.b32.xlu0 %v881, 24
  %v2474 = vpop.permute.xlu0 %2473
  %2475 = vrot.lane.b32.xlu0 %v882, 24
  %v2476 = vpop.permute.xlu0 %2475
  %2477 = vrot.lane.b32.xlu0 %v883, 24
  %v2478 = vpop.permute.xlu0 %2477
  %2479 = vrot.lane.b32.xlu0 %v884, 24
  %v2480 = vpop.permute.xlu0 %2479
  %2481 = vrot.lane.b32.xlu0 %v885, 24
  %v2482 = vpop.permute.xlu0 %2481
  %2483 = vrot.lane.b32.xlu0 %v886, 24
  %v2484 = vpop.permute.xlu0 %2483
  %2485 = vrot.lane.b32.xlu0 %v887, 24
  %v2486 = vpop.permute.xlu0 %2485
  %2487 = vrot.lane.b32.xlu0 %v888, 24
  %v2488 = vpop.permute.xlu0 %2487
  %2617 = vrot.lane.b32.xlu0 %v889, 28
  %v2618 = vpop.permute.xlu0 %2617
  %2619 = vrot.lane.b32.xlu0 %v890, 28
  %v2620 = vpop.permute.xlu0 %2619
  %2621 = vrot.lane.b32.xlu0 %v891, 28
  %v2622 = vpop.permute.xlu0 %2621
  %2623 = vrot.lane.b32.xlu0 %v892, 28
  %v2624 = vpop.permute.xlu0 %2623
  %2625 = vrot.lane.b32.xlu0 %v893, 28
  %v2626 = vpop.permute.xlu0 %2625
  %2627 = vrot.lane.b32.xlu0 %v894, 28
  %v2628 = vpop.permute.xlu0 %2627
  %2629 = vrot.lane.b32.xlu0 %v895, 28
  %v2630 = vpop.permute.xlu0 %2629
  %2631 = vrot.lane.b32.xlu0 %v896, 28
  %v2632 = vpop.permute.xlu0 %2631
  %2633 = vrot.lane.b32.xlu0 %v897, 28
  %v2634 = vpop.permute.xlu0 %2633
  %2635 = vrot.lane.b32.xlu0 %v898, 28
  %v2636 = vpop.permute.xlu0 %2635
  %2637 = vrot.lane.b32.xlu0 %v899, 28
  %v2638 = vpop.permute.xlu0 %2637
  %2639 = vrot.lane.b32.xlu0 %v900, 28
  %v2640 = vpop.permute.xlu0 %2639
  %2641 = vrot.lane.b32.xlu0 %v901, 28
  %v2642 = vpop.permute.xlu0 %2641
  %2643 = vrot.lane.b32.xlu0 %v902, 28
  %v2644 = vpop.permute.xlu0 %2643
  %2645 = vrot.lane.b32.xlu0 %v903, 28
  %v2646 = vpop.permute.xlu0 %2645
  %2647 = vrot.lane.b32.xlu0 %v904, 28
  %v2648 = vpop.permute.xlu0 %2647
  %2649 = vrot.lane.b32.xlu0 %v905, 28
  %v2650 = vpop.permute.xlu0 %2649
  %2651 = vrot.lane.b32.xlu0 %v906, 28
  %v2652 = vpop.permute.xlu0 %2651
  %2653 = vrot.lane.b32.xlu0 %v907, 28
  %v2654 = vpop.permute.xlu0 %2653
  %2655 = vrot.lane.b32.xlu0 %v908, 28
  %v2656 = vpop.permute.xlu0 %2655
  %2657 = vrot.lane.b32.xlu0 %v909, 28
  %v2658 = vpop.permute.xlu0 %2657
  %2659 = vrot.lane.b32.xlu0 %v910, 28
  %v2660 = vpop.permute.xlu0 %2659
  %2661 = vrot.lane.b32.xlu0 %v911, 28
  %v2662 = vpop.permute.xlu0 %2661
  %2663 = vrot.lane.b32.xlu0 %v912, 28
  %v2664 = vpop.permute.xlu0 %2663
  %2665 = vrot.lane.b32.xlu0 %v913, 28
  %v2666 = vpop.permute.xlu0 %2665
  %2667 = vrot.lane.b32.xlu0 %v914, 28
  %v2668 = vpop.permute.xlu0 %2667
  %2669 = vrot.lane.b32.xlu0 %v915, 28
  %v2670 = vpop.permute.xlu0 %2669
  %2671 = vrot.lane.b32.xlu0 %v916, 28
  %v2672 = vpop.permute.xlu0 %2671
  %2673 = vrot.lane.b32.xlu0 %v917, 28
  %v2674 = vpop.permute.xlu0 %2673
  %2675 = vrot.lane.b32.xlu0 %v918, 28
  %v2676 = vpop.permute.xlu0 %2675
  %2677 = vrot.lane.b32.xlu0 %v919, 28
  %v2678 = vpop.permute.xlu0 %2677
  %2679 = vrot.lane.b32.xlu0 %v920, 28
  %v2680 = vpop.permute.xlu0 %2679
  %2681 = vrot.lane.b32.xlu0 %v921, 28
  %v2682 = vpop.permute.xlu0 %2681
  %2683 = vrot.lane.b32.xlu0 %v922, 28
  %v2684 = vpop.permute.xlu0 %2683
  %2685 = vrot.lane.b32.xlu0 %v923, 28
  %v2686 = vpop.permute.xlu0 %2685
  %2687 = vrot.lane.b32.xlu0 %v924, 28
  %v2688 = vpop.permute.xlu0 %2687
  %2689 = vrot.lane.b32.xlu0 %v925, 28
  %v2690 = vpop.permute.xlu0 %2689
  %2691 = vrot.lane.b32.xlu0 %v926, 28
  %v2692 = vpop.permute.xlu0 %2691
  %2693 = vrot.lane.b32.xlu0 %v927, 28
  %v2694 = vpop.permute.xlu0 %2693
  %2695 = vrot.lane.b32.xlu0 %v928, 28
  %v2696 = vpop.permute.xlu0 %2695
  %2697 = vrot.lane.b32.xlu0 %v929, 28
  %v2698 = vpop.permute.xlu0 %2697
  %2699 = vrot.lane.b32.xlu0 %v930, 28
  %v2700 = vpop.permute.xlu0 %2699
  %2701 = vrot.lane.b32.xlu0 %v931, 28
  %v2702 = vpop.permute.xlu0 %2701
  %2703 = vrot.lane.b32.xlu0 %v932, 28
  %v2704 = vpop.permute.xlu0 %2703
  %2705 = vrot.lane.b32.xlu0 %v933, 28
  %v2706 = vpop.permute.xlu0 %2705
  %2707 = vrot.lane.b32.xlu0 %v934, 28
  %v2708 = vpop.permute.xlu0 %2707
  %2709 = vrot.lane.b32.xlu0 %v935, 28
  %v2710 = vpop.permute.xlu0 %2709
  %2711 = vrot.lane.b32.xlu0 %v936, 28
  %v2712 = vpop.permute.xlu0 %2711
  %2713 = vrot.lane.b32.xlu0 %v937, 28
  %v2714 = vpop.permute.xlu0 %2713
  %2715 = vrot.lane.b32.xlu0 %v938, 28
  %v2716 = vpop.permute.xlu0 %2715
  %2717 = vrot.lane.b32.xlu0 %v939, 28
  %v2718 = vpop.permute.xlu0 %2717
  %2719 = vrot.lane.b32.xlu0 %v940, 28
  %v2720 = vpop.permute.xlu0 %2719
  %2721 = vrot.lane.b32.xlu0 %v941, 28
  %v2722 = vpop.permute.xlu0 %2721
  %2723 = vrot.lane.b32.xlu0 %v942, 28
  %v2724 = vpop.permute.xlu0 %2723
  %2725 = vrot.lane.b32.xlu0 %v943, 28
  %v2726 = vpop.permute.xlu0 %2725
  %2727 = vrot.lane.b32.xlu0 %v944, 28
  %v2728 = vpop.permute.xlu0 %2727
  %2729 = vrot.lane.b32.xlu0 %v945, 28
  %v2730 = vpop.permute.xlu0 %2729
  %2731 = vrot.lane.b32.xlu0 %v946, 28
  %v2732 = vpop.permute.xlu0 %2731
  %2733 = vrot.lane.b32.xlu0 %v947, 28
  %v2734 = vpop.permute.xlu0 %2733
  %2735 = vrot.lane.b32.xlu0 %v948, 28
  %v2736 = vpop.permute.xlu0 %2735
  %2737 = vrot.lane.b32.xlu0 %v949, 28
  %v2738 = vpop.permute.xlu0 %2737
  %2739 = vrot.lane.b32.xlu0 %v950, 28
  %v2740 = vpop.permute.xlu0 %2739
  %2741 = vrot.lane.b32.xlu0 %v951, 28
  %v2742 = vpop.permute.xlu0 %2741
  %2743 = vrot.lane.b32.xlu0 %v952, 28
  %v2744 = vpop.permute.xlu0 %2743
  %2873 = vrot.lane.b32.xlu0 %v953, 32
  %v2874 = vpop.permute.xlu0 %2873
  %2875 = vrot.lane.b32.xlu0 %v954, 32
  %v2876 = vpop.permute.xlu0 %2875
  %2877 = vrot.lane.b32.xlu0 %v955, 32
  %v2878 = vpop.permute.xlu0 %2877
  %2879 = vrot.lane.b32.xlu0 %v956, 32
  %v2880 = vpop.permute.xlu0 %2879
  %2881 = vrot.lane.b32.xlu0 %v957, 32
  %v2882 = vpop.permute.xlu0 %2881
  %2883 = vrot.lane.b32.xlu0 %v958, 32
  %v2884 = vpop.permute.xlu0 %2883
  %2885 = vrot.lane.b32.xlu0 %v959, 32
  %v2886 = vpop.permute.xlu0 %2885
  %2887 = vrot.lane.b32.xlu0 %v960, 32
  %v2888 = vpop.permute.xlu0 %2887
  %2889 = vrot.lane.b32.xlu0 %v961, 32
  %v2890 = vpop.permute.xlu0 %2889
  %2891 = vrot.lane.b32.xlu0 %v962, 32
  %v2892 = vpop.permute.xlu0 %2891
  %2893 = vrot.lane.b32.xlu0 %v963, 32
  %v2894 = vpop.permute.xlu0 %2893
  %2895 = vrot.lane.b32.xlu0 %v964, 32
  %v2896 = vpop.permute.xlu0 %2895
  %2897 = vrot.lane.b32.xlu0 %v965, 32
  %v2898 = vpop.permute.xlu0 %2897
  %2899 = vrot.lane.b32.xlu0 %v966, 32
  %v2900 = vpop.permute.xlu0 %2899
  %2901 = vrot.lane.b32.xlu0 %v967, 32
  %v2902 = vpop.permute.xlu0 %2901
  %2903 = vrot.lane.b32.xlu0 %v968, 32
  %v2904 = vpop.permute.xlu0 %2903
  %2905 = vrot.lane.b32.xlu0 %v969, 32
  %v2906 = vpop.permute.xlu0 %2905
  %2907 = vrot.lane.b32.xlu0 %v970, 32
  %v2908 = vpop.permute.xlu0 %2907
  %2909 = vrot.lane.b32.xlu0 %v971, 32
  %v2910 = vpop.permute.xlu0 %2909
  %2911 = vrot.lane.b32.xlu0 %v972, 32
  %v2912 = vpop.permute.xlu0 %2911
  %2913 = vrot.lane.b32.xlu0 %v973, 32
  %v2914 = vpop.permute.xlu0 %2913
  %2915 = vrot.lane.b32.xlu0 %v974, 32
  %v2916 = vpop.permute.xlu0 %2915
  %2917 = vrot.lane.b32.xlu0 %v975, 32
  %v2918 = vpop.permute.xlu0 %2917
  %2919 = vrot.lane.b32.xlu0 %v976, 32
  %v2920 = vpop.permute.xlu0 %2919
  %2921 = vrot.lane.b32.xlu0 %v977, 32
  %v2922 = vpop.permute.xlu0 %2921
  %2923 = vrot.lane.b32.xlu0 %v978, 32
  %v2924 = vpop.permute.xlu0 %2923
  %2925 = vrot.lane.b32.xlu0 %v979, 32
  %v2926 = vpop.permute.xlu0 %2925
  %2927 = vrot.lane.b32.xlu0 %v980, 32
  %v2928 = vpop.permute.xlu0 %2927
  %2929 = vrot.lane.b32.xlu0 %v981, 32
  %v2930 = vpop.permute.xlu0 %2929
  %2931 = vrot.lane.b32.xlu0 %v982, 32
  %v2932 = vpop.permute.xlu0 %2931
  %2933 = vrot.lane.b32.xlu0 %v983, 32
  %v2934 = vpop.permute.xlu0 %2933
  %2935 = vrot.lane.b32.xlu0 %v984, 32
  %v2936 = vpop.permute.xlu0 %2935
  %2937 = vrot.lane.b32.xlu0 %v985, 32
  %v2938 = vpop.permute.xlu0 %2937
  %2939 = vrot.lane.b32.xlu0 %v986, 32
  %v2940 = vpop.permute.xlu0 %2939
  %2941 = vrot.lane.b32.xlu0 %v987, 32
  %v2942 = vpop.permute.xlu0 %2941
  %2943 = vrot.lane.b32.xlu0 %v988, 32
  %v2944 = vpop.permute.xlu0 %2943
  %2945 = vrot.lane.b32.xlu0 %v989, 32
  %v2946 = vpop.permute.xlu0 %2945
  %2947 = vrot.lane.b32.xlu0 %v990, 32
  %v2948 = vpop.permute.xlu0 %2947
  %2949 = vrot.lane.b32.xlu0 %v991, 32
  %v2950 = vpop.permute.xlu0 %2949
  %2951 = vrot.lane.b32.xlu0 %v992, 32
  %v2952 = vpop.permute.xlu0 %2951
  %2953 = vrot.lane.b32.xlu0 %v993, 32
  %v2954 = vpop.permute.xlu0 %2953
  %2955 = vrot.lane.b32.xlu0 %v994, 32
  %v2956 = vpop.permute.xlu0 %2955
  %2957 = vrot.lane.b32.xlu0 %v995, 32
  %v2958 = vpop.permute.xlu0 %2957
  %2959 = vrot.lane.b32.xlu0 %v996, 32
  %v2960 = vpop.permute.xlu0 %2959
  %2961 = vrot.lane.b32.xlu0 %v997, 32
  %v2962 = vpop.permute.xlu0 %2961
  %2963 = vrot.lane.b32.xlu0 %v998, 32
  %v2964 = vpop.permute.xlu0 %2963
  %2965 = vrot.lane.b32.xlu0 %v999, 32
  %v2966 = vpop.permute.xlu0 %2965
  %2967 = vrot.lane.b32.xlu0 %v1000, 32
  %v2968 = vpop.permute.xlu0 %2967
  %2969 = vrot.lane.b32.xlu0 %v1001, 32
  %v2970 = vpop.permute.xlu0 %2969
  %2971 = vrot.lane.b32.xlu0 %v1002, 32
  %v2972 = vpop.permute.xlu0 %2971
  %2973 = vrot.lane.b32.xlu0 %v1003, 32
  %v2974 = vpop.permute.xlu0 %2973
  %2975 = vrot.lane.b32.xlu0 %v1004, 32
  %v2976 = vpop.permute.xlu0 %2975
  %2977 = vrot.lane.b32.xlu0 %v1005, 32
  %v2978 = vpop.permute.xlu0 %2977
  %2979 = vrot.lane.b32.xlu0 %v1006, 32
  %v2980 = vpop.permute.xlu0 %2979
  %2981 = vrot.lane.b32.xlu0 %v1007, 32
  %v2982 = vpop.permute.xlu0 %2981
  %2983 = vrot.lane.b32.xlu0 %v1008, 32
  %v2984 = vpop.permute.xlu0 %2983
  %2985 = vrot.lane.b32.xlu0 %v1009, 32
  %v2986 = vpop.permute.xlu0 %2985
  %2987 = vrot.lane.b32.xlu0 %v1010, 32
  %v2988 = vpop.permute.xlu0 %2987
  %2989 = vrot.lane.b32.xlu0 %v1011, 32
  %v2990 = vpop.permute.xlu0 %2989
  %2991 = vrot.lane.b32.xlu0 %v1012, 32
  %v2992 = vpop.permute.xlu0 %2991
  %2993 = vrot.lane.b32.xlu0 %v1013, 32
  %v2994 = vpop.permute.xlu0 %2993
  %2995 = vrot.lane.b32.xlu0 %v1014, 32
  %v2996 = vpop.permute.xlu0 %2995
  %2997 = vrot.lane.b32.xlu0 %v1015, 32
  %v2998 = vpop.permute.xlu0 %2997
  %2999 = vrot.lane.b32.xlu0 %v1016, 32
  %v3000 = vpop.permute.xlu0 %2999
  %v3065 = vsel %vm287, %v440, %v1082
  %v3066 = vsel %vm287, %v441, %v1084
  %v3067 = vsel %vm287, %v442, %v1086
  %v3068 = vsel %vm287, %v443, %v1088
  %v3069 = vsel %vm287, %v444, %v1090
  %v3070 = vsel %vm287, %v445, %v1092
  %v3071 = vsel %vm287, %v446, %v1094
  %v3072 = vsel %vm287, %v447, %v1096
  %v3073 = vsel %vm287, %v448, %v1098
  %v3074 = vsel %vm287, %v449, %v1100
  %v3075 = vsel %vm287, %v450, %v1102
  %v3076 = vsel %vm287, %v451, %v1104
  %v3077 = vsel %vm287, %v452, %v1106
  %v3078 = vsel %vm287, %v453, %v1108
  %v3079 = vsel %vm287, %v454, %v1110
  %v3080 = vsel %vm287, %v455, %v1112
  %v3081 = vsel %vm287, %v456, %v1114
  %v3082 = vsel %vm287, %v457, %v1116
  %v3083 = vsel %vm287, %v458, %v1118
  %v3084 = vsel %vm287, %v459, %v1120
  %v3085 = vsel %vm287, %v460, %v1122
  %v3086 = vsel %vm287, %v461, %v1124
  %v3087 = vsel %vm287, %v462, %v1126
  %v3088 = vsel %vm287, %v463, %v1128
  %v3089 = vsel %vm287, %v464, %v1130
  %v3090 = vsel %vm287, %v465, %v1132
  %v3091 = vsel %vm287, %v466, %v1134
  %v3092 = vsel %vm287, %v467, %v1136
  %v3093 = vsel %vm287, %v468, %v1138
  %v3094 = vsel %vm287, %v469, %v1140
  %v3095 = vsel %vm287, %v470, %v1142
  %v3096 = vsel %vm287, %v471, %v1144
  %v3097 = vsel %vm287, %v472, %v1146
  %v3098 = vsel %vm287, %v473, %v1148
  %v3099 = vsel %vm287, %v474, %v1150
  %v3100 = vsel %vm287, %v475, %v1152
  %v3101 = vsel %vm287, %v476, %v1154
  %v3102 = vsel %vm287, %v477, %v1156
  %v3103 = vsel %vm287, %v478, %v1158
  %v3104 = vsel %vm287, %v479, %v1160
  %v3105 = vsel %vm287, %v480, %v1162
  %v3106 = vsel %vm287, %v481, %v1164
  %v3107 = vsel %vm287, %v482, %v1166
  %v3108 = vsel %vm287, %v483, %v1168
  %v3109 = vsel %vm287, %v484, %v1170
  %v3110 = vsel %vm287, %v485, %v1172
  %v3111 = vsel %vm287, %v486, %v1174
  %v3112 = vsel %vm287, %v487, %v1176
  %v3113 = vsel %vm287, %v488, %v1178
  %v3114 = vsel %vm287, %v489, %v1180
  %v3115 = vsel %vm287, %v490, %v1182
  %v3116 = vsel %vm287, %v491, %v1184
  %v3117 = vsel %vm287, %v492, %v1186
  %v3118 = vsel %vm287, %v493, %v1188
  %v3119 = vsel %vm287, %v494, %v1190
  %v3120 = vsel %vm287, %v495, %v1192
  %v3121 = vsel %vm287, %v496, %v1194
  %v3122 = vsel %vm287, %v497, %v1196
  %v3123 = vsel %vm287, %v498, %v1198
  %v3124 = vsel %vm287, %v499, %v1200
  %v3125 = vsel %vm287, %v500, %v1202
  %v3126 = vsel %vm287, %v501, %v1204
  %v3127 = vsel %vm287, %v502, %v1206
  %v3128 = vsel %vm287, %v503, %v1208
  %vm3129 = vcmask 64512
  %v3130 = vsel %vm3129, %v3065, %v1338
  %v3131 = vsel %vm3129, %v3066, %v1340
  %v3132 = vsel %vm3129, %v3067, %v1342
  %v3133 = vsel %vm3129, %v3068, %v1344
  %v3134 = vsel %vm3129, %v3069, %v1346
  %v3135 = vsel %vm3129, %v3070, %v1348
  %v3136 = vsel %vm3129, %v3071, %v1350
  %v3137 = vsel %vm3129, %v3072, %v1352
  %v3138 = vsel %vm3129, %v3073, %v1354
  %v3139 = vsel %vm3129, %v3074, %v1356
  %v3140 = vsel %vm3129, %v3075, %v1358
  %v3141 = vsel %vm3129, %v3076, %v1360
  %v3142 = vsel %vm3129, %v3077, %v1362
  %v3143 = vsel %vm3129, %v3078, %v1364
  %v3144 = vsel %vm3129, %v3079, %v1366
  %v3145 = vsel %vm3129, %v3080, %v1368
  %v3146 = vsel %vm3129, %v3081, %v1370
  %v3147 = vsel %vm3129, %v3082, %v1372
  %v3148 = vsel %vm3129, %v3083, %v1374
  %v3149 = vsel %vm3129, %v3084, %v1376
  %v3150 = vsel %vm3129, %v3085, %v1378
  %v3151 = vsel %vm3129, %v3086, %v1380
  %v3152 = vsel %vm3129, %v3087, %v1382
  %v3153 = vsel %vm3129, %v3088, %v1384
  %v3154 = vsel %vm3129, %v3089, %v1386
  %v3155 = vsel %vm3129, %v3090, %v1388
  %v3156 = vsel %vm3129, %v3091, %v1390
  %v3157 = vsel %vm3129, %v3092, %v1392
  %v3158 = vsel %vm3129, %v3093, %v1394
  %v3159 = vsel %vm3129, %v3094, %v1396
  %v3160 = vsel %vm3129, %v3095, %v1398
  %v3161 = vsel %vm3129, %v3096, %v1400
  %v3162 = vsel %vm3129, %v3097, %v1402
  %v3163 = vsel %vm3129, %v3098, %v1404
  %v3164 = vsel %vm3129, %v3099, %v1406
  %v3165 = vsel %vm3129, %v3100, %v1408
  %v3166 = vsel %vm3129, %v3101, %v1410
  %v3167 = vsel %vm3129, %v3102, %v1412
  %v3168 = vsel %vm3129, %v3103, %v1414
  %v3169 = vsel %vm3129, %v3104, %v1416
  %v3170 = vsel %vm3129, %v3105, %v1418
  %v3171 = vsel %vm3129, %v3106, %v1420
  %v3172 = vsel %vm3129, %v3107, %v1422
  %v3173 = vsel %vm3129, %v3108, %v1424
  %v3174 = vsel %vm3129, %v3109, %v1426
  %v3175 = vsel %vm3129, %v3110, %v1428
  %v3176 = vsel %vm3129, %v3111, %v1430
  %v3177 = vsel %vm3129, %v3112, %v1432
  %v3178 = vsel %vm3129, %v3113, %v1434
  %v3179 = vsel %vm3129, %v3114, %v1436
  %v3180 = vsel %vm3129, %v3115, %v1438
  %v3181 = vsel %vm3129, %v3116, %v1440
  %v3182 = vsel %vm3129, %v3117, %v1442
  %v3183 = vsel %vm3129, %v3118, %v1444
  %v3184 = vsel %vm3129, %v3119, %v1446
  %v3185 = vsel %vm3129, %v3120, %v1448
  %v3186 = vsel %vm3129, %v3121, %v1450
  %v3187 = vsel %vm3129, %v3122, %v1452
  %v3188 = vsel %vm3129, %v3123, %v1454
  %v3189 = vsel %vm3129, %v3124, %v1456
  %v3190 = vsel %vm3129, %v3125, %v1458
  %v3191 = vsel %vm3129, %v3126, %v1460
  %v3192 = vsel %vm3129, %v3127, %v1462
  %v3193 = vsel %vm3129, %v3128, %v1464
  %vm3194 = vcmask 97280
  %v3195 = vsel %vm3194, %v3130, %v1594
  %v3196 = vsel %vm3194, %v3131, %v1596
  %v3197 = vsel %vm3194, %v3132, %v1598
  %v3198 = vsel %vm3194, %v3133, %v1600
  %v3199 = vsel %vm3194, %v3134, %v1602
  %v3200 = vsel %vm3194, %v3135, %v1604
  %v3201 = vsel %vm3194, %v3136, %v1606
  %v3202 = vsel %vm3194, %v3137, %v1608
  %v3203 = vsel %vm3194, %v3138, %v1610
  %v3204 = vsel %vm3194, %v3139, %v1612
  %v3205 = vsel %vm3194, %v3140, %v1614
  %v3206 = vsel %vm3194, %v3141, %v1616
  %v3207 = vsel %vm3194, %v3142, %v1618
  %v3208 = vsel %vm3194, %v3143, %v1620
  %v3209 = vsel %vm3194, %v3144, %v1622
  %v3210 = vsel %vm3194, %v3145, %v1624
  %v3211 = vsel %vm3194, %v3146, %v1626
  %v3212 = vsel %vm3194, %v3147, %v1628
  %v3213 = vsel %vm3194, %v3148, %v1630
  %v3214 = vsel %vm3194, %v3149, %v1632
  %v3215 = vsel %vm3194, %v3150, %v1634
  %v3216 = vsel %vm3194, %v3151, %v1636
  %v3217 = vsel %vm3194, %v3152, %v1638
  %v3218 = vsel %vm3194, %v3153, %v1640
  %v3219 = vsel %vm3194, %v3154, %v1642
  %v3220 = vsel %vm3194, %v3155, %v1644
  %v3221 = vsel %vm3194, %v3156, %v1646
  %v3222 = vsel %vm3194, %v3157, %v1648
  %v3223 = vsel %vm3194, %v3158, %v1650
  %v3224 = vsel %vm3194, %v3159, %v1652
  %v3225 = vsel %vm3194, %v3160, %v1654
  %v3226 = vsel %vm3194, %v3161, %v1656
  %v3227 = vsel %vm3194, %v3162, %v1658
  %v3228 = vsel %vm3194, %v3163, %v1660
  %v3229 = vsel %vm3194, %v3164, %v1662
  %v3230 = vsel %vm3194, %v3165, %v1664
  %v3231 = vsel %vm3194, %v3166, %v1666
  %v3232 = vsel %vm3194, %v3167, %v1668
  %v3233 = vsel %vm3194, %v3168, %v1670
  %v3234 = vsel %vm3194, %v3169, %v1672
  %v3235 = vsel %vm3194, %v3170, %v1674
  %v3236 = vsel %vm3194, %v3171, %v1676
  %v3237 = vsel %vm3194, %v3172, %v1678
  %v3238 = vsel %vm3194, %v3173, %v1680
  %v3239 = vsel %vm3194, %v3174, %v1682
  %v3240 = vsel %vm3194, %v3175, %v1684
  %v3241 = vsel %vm3194, %v3176, %v1686
  %v3242 = vsel %vm3194, %v3177, %v1688
  %v3243 = vsel %vm3194, %v3178, %v1690
  %v3244 = vsel %vm3194, %v3179, %v1692
  %v3245 = vsel %vm3194, %v3180, %v1694
  %v3246 = vsel %vm3194, %v3181, %v1696
  %v3247 = vsel %vm3194, %v3182, %v1698
  %v3248 = vsel %vm3194, %v3183, %v1700
  %v3249 = vsel %vm3194, %v3184, %v1702
  %v3250 = vsel %vm3194, %v3185, %v1704
  %v3251 = vsel %vm3194, %v3186, %v1706
  %v3252 = vsel %vm3194, %v3187, %v1708
  %v3253 = vsel %vm3194, %v3188, %v1710
  %v3254 = vsel %vm3194, %v3189, %v1712
  %v3255 = vsel %vm3194, %v3190, %v1714
  %v3256 = vsel %vm3194, %v3191, %v1716
  %v3257 = vsel %vm3194, %v3192, %v1718
  %v3258 = vsel %vm3194, %v3193, %v1720
  %vm3259 = vcmask 130048
  %v3260 = vsel %vm3259, %v3195, %v1850
  %v3261 = vsel %vm3259, %v3196, %v1852
  %v3262 = vsel %vm3259, %v3197, %v1854
  %v3263 = vsel %vm3259, %v3198, %v1856
  %v3264 = vsel %vm3259, %v3199, %v1858
  %v3265 = vsel %vm3259, %v3200, %v1860
  %v3266 = vsel %vm3259, %v3201, %v1862
  %v3267 = vsel %vm3259, %v3202, %v1864
  %v3268 = vsel %vm3259, %v3203, %v1866
  %v3269 = vsel %vm3259, %v3204, %v1868
  %v3270 = vsel %vm3259, %v3205, %v1870
  %v3271 = vsel %vm3259, %v3206, %v1872
  %v3272 = vsel %vm3259, %v3207, %v1874
  %v3273 = vsel %vm3259, %v3208, %v1876
  %v3274 = vsel %vm3259, %v3209, %v1878
  %v3275 = vsel %vm3259, %v3210, %v1880
  %v3276 = vsel %vm3259, %v3211, %v1882
  %v3277 = vsel %vm3259, %v3212, %v1884
  %v3278 = vsel %vm3259, %v3213, %v1886
  %v3279 = vsel %vm3259, %v3214, %v1888
  %v3280 = vsel %vm3259, %v3215, %v1890
  %v3281 = vsel %vm3259, %v3216, %v1892
  %v3282 = vsel %vm3259, %v3217, %v1894
  %v3283 = vsel %vm3259, %v3218, %v1896
  %v3284 = vsel %vm3259, %v3219, %v1898
  %v3285 = vsel %vm3259, %v3220, %v1900
  %v3286 = vsel %vm3259, %v3221, %v1902
  %v3287 = vsel %vm3259, %v3222, %v1904
  %v3288 = vsel %vm3259, %v3223, %v1906
  %v3289 = vsel %vm3259, %v3224, %v1908
  %v3290 = vsel %vm3259, %v3225, %v1910
  %v3291 = vsel %vm3259, %v3226, %v1912
  %v3292 = vsel %vm3259, %v3227, %v1914
  %v3293 = vsel %vm3259, %v3228, %v1916
  %v3294 = vsel %vm3259, %v3229, %v1918
  %v3295 = vsel %vm3259, %v3230, %v1920
  %v3296 = vsel %vm3259, %v3231, %v1922
  %v3297 = vsel %vm3259, %v3232, %v1924
  %v3298 = vsel %vm3259, %v3233, %v1926
  %v3299 = vsel %vm3259, %v3234, %v1928
  %v3300 = vsel %vm3259, %v3235, %v1930
  %v3301 = vsel %vm3259, %v3236, %v1932
  %v3302 = vsel %vm3259, %v3237, %v1934
  %v3303 = vsel %vm3259, %v3238, %v1936
  %v3304 = vsel %vm3259, %v3239, %v1938
  %v3305 = vsel %vm3259, %v3240, %v1940
  %v3306 = vsel %vm3259, %v3241, %v1942
  %v3307 = vsel %vm3259, %v3242, %v1944
  %v3308 = vsel %vm3259, %v3243, %v1946
  %v3309 = vsel %vm3259, %v3244, %v1948
  %v3310 = vsel %vm3259, %v3245, %v1950
  %v3311 = vsel %vm3259, %v3246, %v1952
  %v3312 = vsel %vm3259, %v3247, %v1954
  %v3313 = vsel %vm3259, %v3248, %v1956
  %v3314 = vsel %vm3259, %v3249, %v1958
  %v3315 = vsel %vm3259, %v3250, %v1960
  %v3316 = vsel %vm3259, %v3251, %v1962
  %v3317 = vsel %vm3259, %v3252, %v1964
  %v3318 = vsel %vm3259, %v3253, %v1966
  %v3319 = vsel %vm3259, %v3254, %v1968
  %v3320 = vsel %vm3259, %v3255, %v1970
  %v3321 = vsel %vm3259, %v3256, %v1972
  %v3322 = vsel %vm3259, %v3257, %v1974
  %v3323 = vsel %vm3259, %v3258, %v1976
  %vm3324 = vcmask 162816
  %v3325 = vsel %vm3324, %v3260, %v2106
  %v3326 = vsel %vm3324, %v3261, %v2108
  %v3327 = vsel %vm3324, %v3262, %v2110
  %v3328 = vsel %vm3324, %v3263, %v2112
  %v3329 = vsel %vm3324, %v3264, %v2114
  %v3330 = vsel %vm3324, %v3265, %v2116
  %v3331 = vsel %vm3324, %v3266, %v2118
  %v3332 = vsel %vm3324, %v3267, %v2120
  %v3333 = vsel %vm3324, %v3268, %v2122
  %v3334 = vsel %vm3324, %v3269, %v2124
  %v3335 = vsel %vm3324, %v3270, %v2126
  %v3336 = vsel %vm3324, %v3271, %v2128
  %v3337 = vsel %vm3324, %v3272, %v2130
  %v3338 = vsel %vm3324, %v3273, %v2132
  %v3339 = vsel %vm3324, %v3274, %v2134
  %v3340 = vsel %vm3324, %v3275, %v2136
  %v3341 = vsel %vm3324, %v3276, %v2138
  %v3342 = vsel %vm3324, %v3277, %v2140
  %v3343 = vsel %vm3324, %v3278, %v2142
  %v3344 = vsel %vm3324, %v3279, %v2144
  %v3345 = vsel %vm3324, %v3280, %v2146
  %v3346 = vsel %vm3324, %v3281, %v2148
  %v3347 = vsel %vm3324, %v3282, %v2150
  %v3348 = vsel %vm3324, %v3283, %v2152
  %v3349 = vsel %vm3324, %v3284, %v2154
  %v3350 = vsel %vm3324, %v3285, %v2156
  %v3351 = vsel %vm3324, %v3286, %v2158
  %v3352 = vsel %vm3324, %v3287, %v2160
  %v3353 = vsel %vm3324, %v3288, %v2162
  %v3354 = vsel %vm3324, %v3289, %v2164
  %v3355 = vsel %vm3324, %v3290, %v2166
  %v3356 = vsel %vm3324, %v3291, %v2168
  %v3357 = vsel %vm3324, %v3292, %v2170
  %v3358 = vsel %vm3324, %v3293, %v2172
  %v3359 = vsel %vm3324, %v3294, %v2174
  %v3360 = vsel %vm3324, %v3295, %v2176
  %v3361 = vsel %vm3324, %v3296, %v2178
  %v3362 = vsel %vm3324, %v3297, %v2180
  %v3363 = vsel %vm3324, %v3298, %v2182
  %v3364 = vsel %vm3324, %v3299, %v2184
  %v3365 = vsel %vm3324, %v3300, %v2186
  %v3366 = vsel %vm3324, %v3301, %v2188
  %v3367 = vsel %vm3324, %v3302, %v2190
  %v3368 = vsel %vm3324, %v3303, %v2192
  %v3369 = vsel %vm3324, %v3304, %v2194
  %v3370 = vsel %vm3324, %v3305, %v2196
  %v3371 = vsel %vm3324, %v3306, %v2198
  %v3372 = vsel %vm3324, %v3307, %v2200
  %v3373 = vsel %vm3324, %v3308, %v2202
  %v3374 = vsel %vm3324, %v3309, %v2204
  %v3375 = vsel %vm3324, %v3310, %v2206
  %v3376 = vsel %vm3324, %v3311, %v2208
  %v3377 = vsel %vm3324, %v3312, %v2210
  %v3378 = vsel %vm3324, %v3313, %v2212
  %v3379 = vsel %vm3324, %v3314, %v2214
  %v3380 = vsel %vm3324, %v3315, %v2216
  %v3381 = vsel %vm3324, %v3316, %v2218
  %v3382 = vsel %vm3324, %v3317, %v2220
  %v3383 = vsel %vm3324, %v3318, %v2222
  %v3384 = vsel %vm3324, %v3319, %v2224
  %v3385 = vsel %vm3324, %v3320, %v2226
  %v3386 = vsel %vm3324, %v3321, %v2228
  %v3387 = vsel %vm3324, %v3322, %v2230
  %v3388 = vsel %vm3324, %v3323, %v2232
  %vm3389 = vcmask 195584
  %v3390 = vsel %vm3389, %v3325, %v2362
  %v3391 = vsel %vm3389, %v3326, %v2364
  %v3392 = vsel %vm3389, %v3327, %v2366
  %v3393 = vsel %vm3389, %v3328, %v2368
  %v3394 = vsel %vm3389, %v3329, %v2370
  %v3395 = vsel %vm3389, %v3330, %v2372
  %v3396 = vsel %vm3389, %v3331, %v2374
  %v3397 = vsel %vm3389, %v3332, %v2376
  %v3398 = vsel %vm3389, %v3333, %v2378
  %v3399 = vsel %vm3389, %v3334, %v2380
  %v3400 = vsel %vm3389, %v3335, %v2382
  %v3401 = vsel %vm3389, %v3336, %v2384
  %v3402 = vsel %vm3389, %v3337, %v2386
  %v3403 = vsel %vm3389, %v3338, %v2388
  %v3404 = vsel %vm3389, %v3339, %v2390
  %v3405 = vsel %vm3389, %v3340, %v2392
  %v3406 = vsel %vm3389, %v3341, %v2394
  %v3407 = vsel %vm3389, %v3342, %v2396
  %v3408 = vsel %vm3389, %v3343, %v2398
  %v3409 = vsel %vm3389, %v3344, %v2400
  %v3410 = vsel %vm3389, %v3345, %v2402
  %v3411 = vsel %vm3389, %v3346, %v2404
  %v3412 = vsel %vm3389, %v3347, %v2406
  %v3413 = vsel %vm3389, %v3348, %v2408
  %v3414 = vsel %vm3389, %v3349, %v2410
  %v3415 = vsel %vm3389, %v3350, %v2412
  %v3416 = vsel %vm3389, %v3351, %v2414
  %v3417 = vsel %vm3389, %v3352, %v2416
  %v3418 = vsel %vm3389, %v3353, %v2418
  %v3419 = vsel %vm3389, %v3354, %v2420
  %v3420 = vsel %vm3389, %v3355, %v2422
  %v3421 = vsel %vm3389, %v3356, %v2424
  %v3422 = vsel %vm3389, %v3357, %v2426
  %v3423 = vsel %vm3389, %v3358, %v2428
  %v3424 = vsel %vm3389, %v3359, %v2430
  %v3425 = vsel %vm3389, %v3360, %v2432
  %v3426 = vsel %vm3389, %v3361, %v2434
  %v3427 = vsel %vm3389, %v3362, %v2436
  %v3428 = vsel %vm3389, %v3363, %v2438
  %v3429 = vsel %vm3389, %v3364, %v2440
  %v3430 = vsel %vm3389, %v3365, %v2442
  %v3431 = vsel %vm3389, %v3366, %v2444
  %v3432 = vsel %vm3389, %v3367, %v2446
  %v3433 = vsel %vm3389, %v3368, %v2448
  %v3434 = vsel %vm3389, %v3369, %v2450
  %v3435 = vsel %vm3389, %v3370, %v2452
  %v3436 = vsel %vm3389, %v3371, %v2454
  %v3437 = vsel %vm3389, %v3372, %v2456
  %v3438 = vsel %vm3389, %v3373, %v2458
  %v3439 = vsel %vm3389, %v3374, %v2460
  %v3440 = vsel %vm3389, %v3375, %v2462
  %v3441 = vsel %vm3389, %v3376, %v2464
  %v3442 = vsel %vm3389, %v3377, %v2466
  %v3443 = vsel %vm3389, %v3378, %v2468
  %v3444 = vsel %vm3389, %v3379, %v2470
  %v3445 = vsel %vm3389, %v3380, %v2472
  %v3446 = vsel %vm3389, %v3381, %v2474
  %v3447 = vsel %vm3389, %v3382, %v2476
  %v3448 = vsel %vm3389, %v3383, %v2478
  %v3449 = vsel %vm3389, %v3384, %v2480
  %v3450 = vsel %vm3389, %v3385, %v2482
  %v3451 = vsel %vm3389, %v3386, %v2484
  %v3452 = vsel %vm3389, %v3387, %v2486
  %v3453 = vsel %vm3389, %v3388, %v2488
  %vm3454 = vcmask 228352
  %v3455 = vsel %vm3454, %v3390, %v2618
  %v3456 = vsel %vm3454, %v3391, %v2620
  %v3457 = vsel %vm3454, %v3392, %v2622
  %v3458 = vsel %vm3454, %v3393, %v2624
  %v3459 = vsel %vm3454, %v3394, %v2626
  %v3460 = vsel %vm3454, %v3395, %v2628
  %v3461 = vsel %vm3454, %v3396, %v2630
  %v3462 = vsel %vm3454, %v3397, %v2632
  %v3463 = vsel %vm3454, %v3398, %v2634
  %v3464 = vsel %vm3454, %v3399, %v2636
  %v3465 = vsel %vm3454, %v3400, %v2638
  %v3466 = vsel %vm3454, %v3401, %v2640
  %v3467 = vsel %vm3454, %v3402, %v2642
  %v3468 = vsel %vm3454, %v3403, %v2644
  %v3469 = vsel %vm3454, %v3404, %v2646
  %v3470 = vsel %vm3454, %v3405, %v2648
  %v3471 = vsel %vm3454, %v3406, %v2650
  %v3472 = vsel %vm3454, %v3407, %v2652
  %v3473 = vsel %vm3454, %v3408, %v2654
  %v3474 = vsel %vm3454, %v3409, %v2656
  %v3475 = vsel %vm3454, %v3410, %v2658
  %v3476 = vsel %vm3454, %v3411, %v2660
  %v3477 = vsel %vm3454, %v3412, %v2662
  %v3478 = vsel %vm3454, %v3413, %v2664
  %v3479 = vsel %vm3454, %v3414, %v2666
  %v3480 = vsel %vm3454, %v3415, %v2668
  %v3481 = vsel %vm3454, %v3416, %v2670
  %v3482 = vsel %vm3454, %v3417, %v2672
  %v3483 = vsel %vm3454, %v3418, %v2674
  %v3484 = vsel %vm3454, %v3419, %v2676
  %v3485 = vsel %vm3454, %v3420, %v2678
  %v3486 = vsel %vm3454, %v3421, %v2680
  %v3487 = vsel %vm3454, %v3422, %v2682
  %v3488 = vsel %vm3454, %v3423, %v2684
  %v3489 = vsel %vm3454, %v3424, %v2686
  %v3490 = vsel %vm3454, %v3425, %v2688
  %v3491 = vsel %vm3454, %v3426, %v2690
  %v3492 = vsel %vm3454, %v3427, %v2692
  %v3493 = vsel %vm3454, %v3428, %v2694
  %v3494 = vsel %vm3454, %v3429, %v2696
  %v3495 = vsel %vm3454, %v3430, %v2698
  %v3496 = vsel %vm3454, %v3431, %v2700
  %v3497 = vsel %vm3454, %v3432, %v2702
  %v3498 = vsel %vm3454, %v3433, %v2704
  %v3499 = vsel %vm3454, %v3434, %v2706
  %v3500 = vsel %vm3454, %v3435, %v2708
  %v3501 = vsel %vm3454, %v3436, %v2710
  %v3502 = vsel %vm3454, %v3437, %v2712
  %v3503 = vsel %vm3454, %v3438, %v2714
  %v3504 = vsel %vm3454, %v3439, %v2716
  %v3505 = vsel %vm3454, %v3440, %v2718
  %v3506 = vsel %vm3454, %v3441, %v2720
  %v3507 = vsel %vm3454, %v3442, %v2722
  %v3508 = vsel %vm3454, %v3443, %v2724
  %v3509 = vsel %vm3454, %v3444, %v2726
  %v3510 = vsel %vm3454, %v3445, %v2728
  %v3511 = vsel %vm3454, %v3446, %v2730
  %v3512 = vsel %vm3454, %v3447, %v2732
  %v3513 = vsel %vm3454, %v3448, %v2734
  %v3514 = vsel %vm3454, %v3449, %v2736
  %v3515 = vsel %vm3454, %v3450, %v2738
  %v3516 = vsel %vm3454, %v3451, %v2740
  %v3517 = vsel %vm3454, %v3452, %v2742
  %v3518 = vsel %vm3454, %v3453, %v2744
  %vm3519 = vcmask 261120
  %v3520 = vsel %vm3519, %v3455, %v2874
  %v3521 = vsel %vm3519, %v3456, %v2876
  %v3522 = vsel %vm3519, %v3457, %v2878
  %v3523 = vsel %vm3519, %v3458, %v2880
  %v3524 = vsel %vm3519, %v3459, %v2882
  %v3525 = vsel %vm3519, %v3460, %v2884
  %v3526 = vsel %vm3519, %v3461, %v2886
  %v3527 = vsel %vm3519, %v3462, %v2888
  %v3528 = vsel %vm3519, %v3463, %v2890
  %v3529 = vsel %vm3519, %v3464, %v2892
  %v3530 = vsel %vm3519, %v3465, %v2894
  %v3531 = vsel %vm3519, %v3466, %v2896
  %v3532 = vsel %vm3519, %v3467, %v2898
  %v3533 = vsel %vm3519, %v3468, %v2900
  %v3534 = vsel %vm3519, %v3469, %v2902
  %v3535 = vsel %vm3519, %v3470, %v2904
  %v3536 = vsel %vm3519, %v3471, %v2906
  %v3537 = vsel %vm3519, %v3472, %v2908
  %v3538 = vsel %vm3519, %v3473, %v2910
  %v3539 = vsel %vm3519, %v3474, %v2912
  %v3540 = vsel %vm3519, %v3475, %v2914
  %v3541 = vsel %vm3519, %v3476, %v2916
  %v3542 = vsel %vm3519, %v3477, %v2918
  %v3543 = vsel %vm3519, %v3478, %v2920
  %v3544 = vsel %vm3519, %v3479, %v2922
  %v3545 = vsel %vm3519, %v3480, %v2924
  %v3546 = vsel %vm3519, %v3481, %v2926
  %v3547 = vsel %vm3519, %v3482, %v2928
  %v3548 = vsel %vm3519, %v3483, %v2930
  %v3549 = vsel %vm3519, %v3484, %v2932
  %v3550 = vsel %vm3519, %v3485, %v2934
  %v3551 = vsel %vm3519, %v3486, %v2936
  %v3552 = vsel %vm3519, %v3487, %v2938
  %v3553 = vsel %vm3519, %v3488, %v2940
  %v3554 = vsel %vm3519, %v3489, %v2942
  %v3555 = vsel %vm3519, %v3490, %v2944
  %v3556 = vsel %vm3519, %v3491, %v2946
  %v3557 = vsel %vm3519, %v3492, %v2948
  %v3558 = vsel %vm3519, %v3493, %v2950
  %v3559 = vsel %vm3519, %v3494, %v2952
  %v3560 = vsel %vm3519, %v3495, %v2954
  %v3561 = vsel %vm3519, %v3496, %v2956
  %v3562 = vsel %vm3519, %v3497, %v2958
  %v3563 = vsel %vm3519, %v3498, %v2960
  %v3564 = vsel %vm3519, %v3499, %v2962
  %v3565 = vsel %vm3519, %v3500, %v2964
  %v3566 = vsel %vm3519, %v3501, %v2966
  %v3567 = vsel %vm3519, %v3502, %v2968
  %v3568 = vsel %vm3519, %v3503, %v2970
  %v3569 = vsel %vm3519, %v3504, %v2972
  %v3570 = vsel %vm3519, %v3505, %v2974
  %v3571 = vsel %vm3519, %v3506, %v2976
  %v3572 = vsel %vm3519, %v3507, %v2978
  %v3573 = vsel %vm3519, %v3508, %v2980
  %v3574 = vsel %vm3519, %v3509, %v2982
  %v3575 = vsel %vm3519, %v3510, %v2984
  %v3576 = vsel %vm3519, %v3511, %v2986
  %v3577 = vsel %vm3519, %v3512, %v2988
  %v3578 = vsel %vm3519, %v3513, %v2990
  %v3579 = vsel %vm3519, %v3514, %v2992
  %v3580 = vsel %vm3519, %v3515, %v2994
  %v3581 = vsel %vm3519, %v3516, %v2996
  %v3582 = vsel %vm3519, %v3517, %v2998
  %v3583 = vsel %vm3519, %v3518, %v3000
  %v3584 = vld [vmem:[%s3] sm:$0xff]
  %v3585 = vld [vmem:[%s3 + $0x8] sm:$0xff]
  %v3586 = vld [vmem:[%s3 + $0x10] sm:$0xff]
  %v3587 = vld [vmem:[%s3 + $0x18] sm:$0xff]
  %v3588 = vld [vmem:[%s3 + $0x20] sm:$0xf]
  %vm3589 = vcmask 293888
  %v3591 = vsel %vm3589, %v3520, 0
  %v3594 = vsel %vm3589, %v3521, 0
  %v3597 = vsel %vm3589, %v3522, 0
  %v3600 = vsel %vm3589, %v3523, 0
  %v3603 = vsel %vm3589, %v3524, 0
  %v3606 = vsel %vm3589, %v3525, 0
  %v3609 = vsel %vm3589, %v3526, 0
  %v3612 = vsel %vm3589, %v3527, 0
  %v3615 = vsel %vm3589, %v3528, 0
  %v3618 = vsel %vm3589, %v3529, 0
  %v3621 = vsel %vm3589, %v3530, 0
  %v3624 = vsel %vm3589, %v3531, 0
  %v3627 = vsel %vm3589, %v3532, 0
  %v3630 = vsel %vm3589, %v3533, 0
  %v3633 = vsel %vm3589, %v3534, 0
  %v3636 = vsel %vm3589, %v3535, 0
  %v3639 = vsel %vm3589, %v3536, 0
  %v3642 = vsel %vm3589, %v3537, 0
  %v3645 = vsel %vm3589, %v3538, 0
  %v3648 = vsel %vm3589, %v3539, 0
  %v3651 = vsel %vm3589, %v3540, 0
  %v3654 = vsel %vm3589, %v3541, 0
  %v3657 = vsel %vm3589, %v3542, 0
  %v3660 = vsel %vm3589, %v3543, 0
  %v3663 = vsel %vm3589, %v3544, 0
  %v3666 = vsel %vm3589, %v3545, 0
  %v3669 = vsel %vm3589, %v3546, 0
  %v3672 = vsel %vm3589, %v3547, 0
  %v3675 = vsel %vm3589, %v3548, 0
  %v3678 = vsel %vm3589, %v3549, 0
  %v3681 = vsel %vm3589, %v3550, 0
  %v3684 = vsel %vm3589, %v3551, 0
  %v3687 = vsel %vm3589, %v3552, 0
  %v3690 = vsel %vm3589, %v3553, 0
  %v3693 = vsel %vm3589, %v3554, 0
  %v3696 = vsel %vm3589, %v3555, 0
  %v3699 = vsel %vm3589, %v3556, 0
  %v3702 = vsel %vm3589, %v3557, 0
  %v3705 = vsel %vm3589, %v3558, 0
  %v3708 = vsel %vm3589, %v3559, 0
  %v3711 = vsel %vm3589, %v3560, 0
  %v3714 = vsel %vm3589, %v3561, 0
  %v3717 = vsel %vm3589, %v3562, 0
  %v3720 = vsel %vm3589, %v3563, 0
  %v3723 = vsel %vm3589, %v3564, 0
  %v3726 = vsel %vm3589, %v3565, 0
  %v3729 = vsel %vm3589, %v3566, 0
  %v3732 = vsel %vm3589, %v3567, 0
  %v3735 = vsel %vm3589, %v3568, 0
  %v3738 = vsel %vm3589, %v3569, 0
  %v3741 = vsel %vm3589, %v3570, 0
  %v3744 = vsel %vm3589, %v3571, 0
  %v3747 = vsel %vm3589, %v3572, 0
  %v3750 = vsel %vm3589, %v3573, 0
  %v3753 = vsel %vm3589, %v3574, 0
  %v3756 = vsel %vm3589, %v3575, 0
  %v3759 = vsel %vm3589, %v3576, 0
  %v3762 = vsel %vm3589, %v3577, 0
  %v3765 = vsel %vm3589, %v3578, 0
  %v3768 = vsel %vm3589, %v3579, 0
  %v3771 = vsel %vm3589, %v3580, 0
  %v3774 = vsel %vm3589, %v3581, 0
  %v3777 = vsel %vm3589, %v3582, 0
  %v3780 = vsel %vm3589, %v3583, 0
  %vm3782 = vcmask 1043456
  %v3784 = vsel %vm3782, %v3588, 0
  %3786 = vmatprep.subr.mxu0 0.0
  %3787 = vmatpush1.msra.mxu0 %v3584
  %3788 = vmatprep.subr.mxu0 0.0
  %3789 = vmatpush1.msra.mxu0 %v3585
  %3790 = vmatprep.subr.mxu0 0.0
  %3791 = vmatpush1.msra.mxu0 %v3586
  %3792 = vmatprep.subr.mxu0 0.0
  %3793 = vmatpush1.msra.mxu0 %v3587
  %3794 = vmatprep.subr.mxu0 0.0
  %3795 = vmatpush1.msra.mxu0 %v3784
  %3796 = vmatprep.subr.mxu0 0.0
  %3797 = vmatpush1.msra.mxu0 0.0
  %3798 = vmatprep.subr.mxu0 0.0
  %3799 = vmatpush1.msra.mxu0 0.0
  %3800 = vmatprep.subr.mxu0 0.0
  %3801 = vmatpush1.msra.mxu0 0.0
  %3802 = vmatprep.subr.mxu0 0.0
  %3803 = vmatpush1.msra.mxu0 0.0
  %3804 = vmatprep.subr.mxu0 0.0
  %3805 = vmatpush1.msra.mxu0 0.0
  %3806 = vmatprep.subr.mxu0 0.0
  %3807 = vmatpush1.msra.mxu0 0.0
  %3808 = vmatprep.subr.mxu0 0.0
  %3809 = vmatpush1.msra.mxu0 0.0
  %3810 = vmatprep.subr.mxu0 0.0
  %3811 = vmatpush1.msra.mxu0 0.0
  %3812 = vmatprep.subr.mxu0 0.0
  %3813 = vmatpush1.msra.mxu0 0.0
  %3814 = vmatprep.subr.mxu0 0.0
  %3815 = vmatpush1.msra.mxu0 0.0
  %3816 = vmatprep.subr.mxu0 0.0
  %3817 = vmatpush1.msra.mxu0 0.0
  %3818 = vmatprep.subr.mxu0 0.0
  %3819 = vmatpush1.msra.mxu0 0.0
  %3820 = vmatprep.subr.mxu0 0.0
  %3821 = vmatpush1.msra.mxu0 0.0
  %3822 = vmatprep.subr.mxu0 0.0
  %3823 = vmatpush1.msra.mxu0 0.0
  %3824 = vmatprep.subr.mxu0 0.0
  %3825 = vmatpush1.msra.mxu0 0.0
  %3826 = vmatprep.subr.mxu0 0.0
  %3827 = vmatpush1.msra.mxu0 0.0
  %3828 = vmatprep.subr.mxu0 0.0
  %3829 = vmatpush1.msra.mxu0 0.0
  %3830 = vmatprep.subr.mxu0 0.0
  %3831 = vmatpush1.msra.mxu0 0.0
  %3832 = vmatprep.subr.mxu0 0.0
  %3833 = vmatpush1.msra.mxu0 0.0
  %3834 = vmatprep.subr.mxu0 0.0
  %3835 = vmatpush1.msra.mxu0 0.0
  %3836 = vmatprep.subr.mxu0 0.0
  %3837 = vmatpush1.msra.mxu0 0.0
  %3838 = vmatprep.subr.mxu0 0.0
  %3839 = vmatpush1.msra.mxu0 0.0
  %3840 = vmatprep.subr.mxu0 0.0
  %3841 = vmatpush1.msra.mxu0 0.0
  %3842 = vmatprep.subr.mxu0 0.0
  %3843 = vmatpush1.msra.mxu0 0.0
  %3844 = vmatprep.subr.mxu0 0.0
  %3845 = vmatpush1.msra.mxu0 0.0
  %3846 = vmatprep.subr.mxu0 0.0
  %3847 = vmatpush1.msra.mxu0 0.0
  %3848 = vmatprep.subr.mxu0 0.0
  %3849 = vmatpush1.msra.mxu0 0.0
  %3850 = vmatprep.mubr.f32.mxu0 0.0
  %3851 = vmatmul.mubr.f32.gmra.mrb[0].mxu0 %v3591
  %v3852 = vpop.f32.mrb[0].mxu0
  %v3853 = vadd.f32 0.0, %v3852
  %v3854 = vpop.f32.mrb[0].mxu0
  %3855 = vmatprep.mubr.f32.mxu0 0.0
  %3856 = vmatmul.mubr.f32.gmra.mrb[0].mxu0 %v3594
  %v3857 = vpop.f32.mrb[0].mxu0
  %v3858 = vadd.f32 0.0, %v3857
  %v3859 = vpop.f32.mrb[0].mxu0
  %3860 = vmatprep.mubr.f32.mxu0 0.0
  %3861 = vmatmul.mubr.f32.gmra.mrb[0].mxu0 %v3597
  %v3862 = vpop.f32.mrb[0].mxu0
  %v3863 = vadd.f32 0.0, %v3862
  %v3864 = vpop.f32.mrb[0].mxu0
  %3865 = vmatprep.mubr.f32.mxu0 0.0
  %3866 = vmatmul.mubr.f32.gmra.mrb[0].mxu0 %v3600
  %v3867 = vpop.f32.mrb[0].mxu0
  %v3868 = vadd.f32 0.0, %v3867
  %v3869 = vpop.f32.mrb[0].mxu0
  %3870 = vmatprep.mubr.f32.mxu0 0.0
  %3871 = vmatmul.mubr.f32.gmra.mrb[0].mxu0 %v3603
  %v3872 = vpop.f32.mrb[0].mxu0
  %v3873 = vadd.f32 0.0, %v3872
  %v3874 = vpop.f32.mrb[0].mxu0
  %3875 = vmatprep.mubr.f32.mxu0 0.0
  %3876 = vmatmul.mubr.f32.gmra.mrb[0].mxu0 %v3606
  %v3877 = vpop.f32.mrb[0].mxu0
  %v3878 = vadd.f32 0.0, %v3877
  %v3879 = vpop.f32.mrb[0].mxu0
  %3880 = vmatprep.mubr.f32.mxu0 0.0
  %3881 = vmatmul.mubr.f32.gmra.mrb[0].mxu0 %v3609
  %v3882 = vpop.f32.mrb[0].mxu0
  %v3883 = vadd.f32 0.0, %v3882
  %v3884 = vpop.f32.mrb[0].mxu0
  %3885 = vmatprep.mubr.f32.mxu0 0.0
  %3886 = vmatmul.mubr.f32.gmra.mrb[0].mxu0 %v3612
  %v3887 = vpop.f32.mrb[0].mxu0
  %v3888 = vadd.f32 0.0, %v3887
  %v3889 = vpop.f32.mrb[0].mxu0
  %3890 = vmatprep.mubr.f32.mxu0 0.0
  %3891 = vmatmul.mubr.f32.gmra.mrb[0].mxu0 %v3615
  %v3892 = vpop.f32.mrb[0].mxu0
  %v3893 = vadd.f32 0.0, %v3892
  %v3894 = vpop.f32.mrb[0].mxu0
  %3895 = vmatprep.mubr.f32.mxu0 0.0
  %3896 = vmatmul.mubr.f32.gmra.mrb[0].mxu0 %v3618
  %v3897 = vpop.f32.mrb[0].mxu0
  %v3898 = vadd.f32 0.0, %v3897
  %v3899 = vpop.f32.mrb[0].mxu0
  %3900 = vmatprep.mubr.f32.mxu0 0.0
  %3901 = vmatmul.mubr.f32.gmra.mrb[0].mxu0 %v3621
  %v3902 = vpop.f32.mrb[0].mxu0
  %v3903 = vadd.f32 0.0, %v3902
  %v3904 = vpop.f32.mrb[0].mxu0
  %3905 = vmatprep.mubr.f32.mxu0 0.0
  %3906 = vmatmul.mubr.f32.gmra.mrb[0].mxu0 %v3624
  %v3907 = vpop.f32.mrb[0].mxu0
  %v3908 = vadd.f32 0.0, %v3907
  %v3909 = vpop.f32.mrb[0].mxu0
  %3910 = vmatprep.mubr.f32.mxu0 0.0
  %3911 = vmatmul.mubr.f32.gmra.mrb[0].mxu0 %v3627
  %v3912 = vpop.f32.mrb[0].mxu0
  %v3913 = vadd.f32 0.0, %v3912
  %v3914 = vpop.f32.mrb[0].mxu0
  %3915 = vmatprep.mubr.f32.mxu0 0.0
  %3916 = vmatmul.mubr.f32.gmra.mrb[0].mxu0 %v3630
  %v3917 = vpop.f32.mrb[0].mxu0
  %v3918 = vadd.f32 0.0, %v3917
  %v3919 = vpop.f32.mrb[0].mxu0
  %3920 = vmatprep.mubr.f32.mxu0 0.0
  %3921 = vmatmul.mubr.f32.gmra.mrb[0].mxu0 %v3633
  %v3922 = vpop.f32.mrb[0].mxu0
  %v3923 = vadd.f32 0.0, %v3922
  %v3924 = vpop.f32.mrb[0].mxu0
  %3925 = vmatprep.mubr.f32.mxu0 0.0
  %3926 = vmatmul.mubr.f32.gmra.mrb[0].mxu0 %v3636
  %v3927 = vpop.f32.mrb[0].mxu0
  %v3928 = vadd.f32 0.0, %v3927
  %v3929 = vpop.f32.mrb[0].mxu0
  %3930 = vmatprep.mubr.f32.mxu0 0.0
  %3931 = vmatmul.mubr.f32.gmra.mrb[0].mxu0 %v3639
  %v3932 = vpop.f32.mrb[0].mxu0
  %v3933 = vadd.f32 0.0, %v3932
  %v3934 = vpop.f32.mrb[0].mxu0
  %3935 = vmatprep.mubr.f32.mxu0 0.0
  %3936 = vmatmul.mubr.f32.gmra.mrb[0].mxu0 %v3642
  %v3937 = vpop.f32.mrb[0].mxu0
  %v3938 = vadd.f32 0.0, %v3937
  %v3939 = vpop.f32.mrb[0].mxu0
  %3940 = vmatprep.mubr.f32.mxu0 0.0
  %3941 = vmatmul.mubr.f32.gmra.mrb[0].mxu0 %v3645
  %v3942 = vpop.f32.mrb[0].mxu0
  %v3943 = vadd.f32 0.0, %v3942
  %v3944 = vpop.f32.mrb[0].mxu0
  %3945 = vmatprep.mubr.f32.mxu0 0.0
  %3946 = vmatmul.mubr.f32.gmra.mrb[0].mxu0 %v3648
  %v3947 = vpop.f32.mrb[0].mxu0
  %v3948 = vadd.f32 0.0, %v3947
  %v3949 = vpop.f32.mrb[0].mxu0
  %3950 = vmatprep.mubr.f32.mxu0 0.0
  %3951 = vmatmul.mubr.f32.gmra.mrb[0].mxu0 %v3651
  %v3952 = vpop.f32.mrb[0].mxu0
  %v3953 = vadd.f32 0.0, %v3952
  %v3954 = vpop.f32.mrb[0].mxu0
  %3955 = vmatprep.mubr.f32.mxu0 0.0
  %3956 = vmatmul.mubr.f32.gmra.mrb[0].mxu0 %v3654
  %v3957 = vpop.f32.mrb[0].mxu0
  %v3958 = vadd.f32 0.0, %v3957
  %v3959 = vpop.f32.mrb[0].mxu0
  %3960 = vmatprep.mubr.f32.mxu0 0.0
  %3961 = vmatmul.mubr.f32.gmra.mrb[0].mxu0 %v3657
  %v3962 = vpop.f32.mrb[0].mxu0
  %v3963 = vadd.f32 0.0, %v3962
  %v3964 = vpop.f32.mrb[0].mxu0
  %3965 = vmatprep.mubr.f32.mxu0 0.0
  %3966 = vmatmul.mubr.f32.gmra.mrb[0].mxu0 %v3660
  %v3967 = vpop.f32.mrb[0].mxu0
  %v3968 = vadd.f32 0.0, %v3967
  %v3969 = vpop.f32.mrb[0].mxu0
  %3970 = vmatprep.mubr.f32.mxu0 0.0
  %3971 = vmatmul.mubr.f32.gmra.mrb[0].mxu0 %v3663
  %v3972 = vpop.f32.mrb[0].mxu0
  %v3973 = vadd.f32 0.0, %v3972
  %v3974 = vpop.f32.mrb[0].mxu0
  %3975 = vmatprep.mubr.f32.mxu0 0.0
  %3976 = vmatmul.mubr.f32.gmra.mrb[0].mxu0 %v3666
  %v3977 = vpop.f32.mrb[0].mxu0
  %v3978 = vadd.f32 0.0, %v3977
  %v3979 = vpop.f32.mrb[0].mxu0
  %3980 = vmatprep.mubr.f32.mxu0 0.0
  %3981 = vmatmul.mubr.f32.gmra.mrb[0].mxu0 %v3669
  %v3982 = vpop.f32.mrb[0].mxu0
  %v3983 = vadd.f32 0.0, %v3982
  %v3984 = vpop.f32.mrb[0].mxu0
  %3985 = vmatprep.mubr.f32.mxu0 0.0
  %3986 = vmatmul.mubr.f32.gmra.mrb[0].mxu0 %v3672
  %v3987 = vpop.f32.mrb[0].mxu0
  %v3988 = vadd.f32 0.0, %v3987
  %v3989 = vpop.f32.mrb[0].mxu0
  %3990 = vmatprep.mubr.f32.mxu0 0.0
  %3991 = vmatmul.mubr.f32.gmra.mrb[0].mxu0 %v3675
  %v3992 = vpop.f32.mrb[0].mxu0
  %v3993 = vadd.f32 0.0, %v3992
  %v3994 = vpop.f32.mrb[0].mxu0
  %3995 = vmatprep.mubr.f32.mxu0 0.0
  %3996 = vmatmul.mubr.f32.gmra.mrb[0].mxu0 %v3678
  %v3997 = vpop.f32.mrb[0].mxu0
  %v3998 = vadd.f32 0.0, %v3997
  %v3999 = vpop.f32.mrb[0].mxu0
  %4000 = vmatprep.mubr.f32.mxu0 0.0
  %4001 = vmatmul.mubr.f32.gmra.mrb[0].mxu0 %v3681
  %v4002 = vpop.f32.mrb[0].mxu0
  %v4003 = vadd.f32 0.0, %v4002
  %v4004 = vpop.f32.mrb[0].mxu0
  %4005 = vmatprep.mubr.f32.mxu0 0.0
  %4006 = vmatmul.mubr.f32.gmra.mrb[0].mxu0 %v3684
  %v4007 = vpop.f32.mrb[0].mxu0
  %v4008 = vadd.f32 0.0, %v4007
  %v4009 = vpop.f32.mrb[0].mxu0
  %4010 = vmatprep.mubr.f32.mxu0 0.0
  %4011 = vmatmul.mubr.f32.gmra.mrb[0].mxu0 %v3687
  %v4012 = vpop.f32.mrb[0].mxu0
  %v4013 = vadd.f32 0.0, %v4012
  %v4014 = vpop.f32.mrb[0].mxu0
  %4015 = vmatprep.mubr.f32.mxu0 0.0
  %4016 = vmatmul.mubr.f32.gmra.mrb[0].mxu0 %v3690
  %v4017 = vpop.f32.mrb[0].mxu0
  %v4018 = vadd.f32 0.0, %v4017
  %v4019 = vpop.f32.mrb[0].mxu0
  %4020 = vmatprep.mubr.f32.mxu0 0.0
  %4021 = vmatmul.mubr.f32.gmra.mrb[0].mxu0 %v3693
  %v4022 = vpop.f32.mrb[0].mxu0
  %v4023 = vadd.f32 0.0, %v4022
  %v4024 = vpop.f32.mrb[0].mxu0
  %4025 = vmatprep.mubr.f32.mxu0 0.0
  %4026 = vmatmul.mubr.f32.gmra.mrb[0].mxu0 %v3696
  %v4027 = vpop.f32.mrb[0].mxu0
  %v4028 = vadd.f32 0.0, %v4027
  %v4029 = vpop.f32.mrb[0].mxu0
  %4030 = vmatprep.mubr.f32.mxu0 0.0
  %4031 = vmatmul.mubr.f32.gmra.mrb[0].mxu0 %v3699
  %v4032 = vpop.f32.mrb[0].mxu0
  %v4033 = vadd.f32 0.0, %v4032
  %v4034 = vpop.f32.mrb[0].mxu0
  %4035 = vmatprep.mubr.f32.mxu0 0.0
  %4036 = vmatmul.mubr.f32.gmra.mrb[0].mxu0 %v3702
  %v4037 = vpop.f32.mrb[0].mxu0
  %v4038 = vadd.f32 0.0, %v4037
  %v4039 = vpop.f32.mrb[0].mxu0
  %4040 = vmatprep.mubr.f32.mxu0 0.0
  %4041 = vmatmul.mubr.f32.gmra.mrb[0].mxu0 %v3705
  %v4042 = vpop.f32.mrb[0].mxu0
  %v4043 = vadd.f32 0.0, %v4042
  %v4044 = vpop.f32.mrb[0].mxu0
  %4045 = vmatprep.mubr.f32.mxu0 0.0
  %4046 = vmatmul.mubr.f32.gmra.mrb[0].mxu0 %v3708
  %v4047 = vpop.f32.mrb[0].mxu0
  %v4048 = vadd.f32 0.0, %v4047
  %v4049 = vpop.f32.mrb[0].mxu0
  %4050 = vmatprep.mubr.f32.mxu0 0.0
  %4051 = vmatmul.mubr.f32.gmra.mrb[0].mxu0 %v3711
  %v4052 = vpop.f32.mrb[0].mxu0
  %v4053 = vadd.f32 0.0, %v4052
  %v4054 = vpop.f32.mrb[0].mxu0
  %4055 = vmatprep.mubr.f32.mxu0 0.0
  %4056 = vmatmul.mubr.f32.gmra.mrb[0].mxu0 %v3714
  %v4057 = vpop.f32.mrb[0].mxu0
  %v4058 = vadd.f32 0.0, %v4057
  %v4059 = vpop.f32.mrb[0].mxu0
  %4060 = vmatprep.mubr.f32.mxu0 0.0
  %4061 = vmatmul.mubr.f32.gmra.mrb[0].mxu0 %v3717
  %v4062 = vpop.f32.mrb[0].mxu0
  %v4063 = vadd.f32 0.0, %v4062
  %v4064 = vpop.f32.mrb[0].mxu0
  %4065 = vmatprep.mubr.f32.mxu0 0.0
  %4066 = vmatmul.mubr.f32.gmra.mrb[0].mxu0 %v3720
  %v4067 = vpop.f32.mrb[0].mxu0
  %v4068 = vadd.f32 0.0, %v4067
  %v4069 = vpop.f32.mrb[0].mxu0
  %4070 = vmatprep.mubr.f32.mxu0 0.0
  %4071 = vmatmul.mubr.f32.gmra.mrb[0].mxu0 %v3723
  %v4072 = vpop.f32.mrb[0].mxu0
  %v4073 = vadd.f32 0.0, %v4072
  %v4074 = vpop.f32.mrb[0].mxu0
  %4075 = vmatprep.mubr.f32.mxu0 0.0
  %4076 = vmatmul.mubr.f32.gmra.mrb[0].mxu0 %v3726
  %v4077 = vpop.f32.mrb[0].mxu0
  %v4078 = vadd.f32 0.0, %v4077
  %v4079 = vpop.f32.mrb[0].mxu0
  %4080 = vmatprep.mubr.f32.mxu0 0.0
  %4081 = vmatmul.mubr.f32.gmra.mrb[0].mxu0 %v3729
  %v4082 = vpop.f32.mrb[0].mxu0
  %v4083 = vadd.f32 0.0, %v4082
  %v4084 = vpop.f32.mrb[0].mxu0
  %4085 = vmatprep.mubr.f32.mxu0 0.0
  %4086 = vmatmul.mubr.f32.gmra.mrb[0].mxu0 %v3732
  %v4087 = vpop.f32.mrb[0].mxu0
  %v4088 = vadd.f32 0.0, %v4087
  %v4089 = vpop.f32.mrb[0].mxu0
  %4090 = vmatprep.mubr.f32.mxu0 0.0
  %4091 = vmatmul.mubr.f32.gmra.mrb[0].mxu0 %v3735
  %v4092 = vpop.f32.mrb[0].mxu0
  %v4093 = vadd.f32 0.0, %v4092
  %v4094 = vpop.f32.mrb[0].mxu0
  %4095 = vmatprep.mubr.f32.mxu0 0.0
  %4096 = vmatmul.mubr.f32.gmra.mrb[0].mxu0 %v3738
  %v4097 = vpop.f32.mrb[0].mxu0
  %v4098 = vadd.f32 0.0, %v4097
  %v4099 = vpop.f32.mrb[0].mxu0
  %4100 = vmatprep.mubr.f32.mxu0 0.0
  %4101 = vmatmul.mubr.f32.gmra.mrb[0].mxu0 %v3741
  %v4102 = vpop.f32.mrb[0].mxu0
  %v4103 = vadd.f32 0.0, %v4102
  %v4104 = vpop.f32.mrb[0].mxu0
  %4105 = vmatprep.mubr.f32.mxu0 0.0
  %4106 = vmatmul.mubr.f32.gmra.mrb[0].mxu0 %v3744
  %v4107 = vpop.f32.mrb[0].mxu0
  %v4108 = vadd.f32 0.0, %v4107
  %v4109 = vpop.f32.mrb[0].mxu0
  %4110 = vmatprep.mubr.f32.mxu0 0.0
  %4111 = vmatmul.mubr.f32.gmra.mrb[0].mxu0 %v3747
  %v4112 = vpop.f32.mrb[0].mxu0
  %v4113 = vadd.f32 0.0, %v4112
  %v4114 = vpop.f32.mrb[0].mxu0
  %4115 = vmatprep.mubr.f32.mxu0 0.0
  %4116 = vmatmul.mubr.f32.gmra.mrb[0].mxu0 %v3750
  %v4117 = vpop.f32.mrb[0].mxu0
  %v4118 = vadd.f32 0.0, %v4117
  %v4119 = vpop.f32.mrb[0].mxu0
  %4120 = vmatprep.mubr.f32.mxu0 0.0
  %4121 = vmatmul.mubr.f32.gmra.mrb[0].mxu0 %v3753
  %v4122 = vpop.f32.mrb[0].mxu0
  %v4123 = vadd.f32 0.0, %v4122
  %v4124 = vpop.f32.mrb[0].mxu0
  %4125 = vmatprep.mubr.f32.mxu0 0.0
  %4126 = vmatmul.mubr.f32.gmra.mrb[0].mxu0 %v3756
  %v4127 = vpop.f32.mrb[0].mxu0
  %v4128 = vadd.f32 0.0, %v4127
  %v4129 = vpop.f32.mrb[0].mxu0
  %4130 = vmatprep.mubr.f32.mxu0 0.0
  %4131 = vmatmul.mubr.f32.gmra.mrb[0].mxu0 %v3759
  %v4132 = vpop.f32.mrb[0].mxu0
  %v4133 = vadd.f32 0.0, %v4132
  %v4134 = vpop.f32.mrb[0].mxu0
  %4135 = vmatprep.mubr.f32.mxu0 0.0
  %4136 = vmatmul.mubr.f32.gmra.mrb[0].mxu0 %v3762
  %v4137 = vpop.f32.mrb[0].mxu0
  %v4138 = vadd.f32 0.0, %v4137
  %v4139 = vpop.f32.mrb[0].mxu0
  %4140 = vmatprep.mubr.f32.mxu0 0.0
  %4141 = vmatmul.mubr.f32.gmra.mrb[0].mxu0 %v3765
  %v4142 = vpop.f32.mrb[0].mxu0
  %v4143 = vadd.f32 0.0, %v4142
  %v4144 = vpop.f32.mrb[0].mxu0
  %4145 = vmatprep.mubr.f32.mxu0 0.0
  %4146 = vmatmul.mubr.f32.gmra.mrb[0].mxu0 %v3768
  %v4147 = vpop.f32.mrb[0].mxu0
  %v4148 = vadd.f32 0.0, %v4147
  %v4149 = vpop.f32.mrb[0].mxu0
  %4150 = vmatprep.mubr.f32.mxu0 0.0
  %4151 = vmatmul.mubr.f32.gmra.mrb[0].mxu0 %v3771
  %v4152 = vpop.f32.mrb[0].mxu0
  %v4153 = vadd.f32 0.0, %v4152
  %v4154 = vpop.f32.mrb[0].mxu0
  %4155 = vmatprep.mubr.f32.mxu0 0.0
  %4156 = vmatmul.mubr.f32.gmra.mrb[0].mxu0 %v3774
  %v4157 = vpop.f32.mrb[0].mxu0
  %v4158 = vadd.f32 0.0, %v4157
  %v4159 = vpop.f32.mrb[0].mxu0
  %4160 = vmatprep.mubr.f32.mxu0 0.0
  %4161 = vmatmul.mubr.f32.gmra.mrb[0].mxu0 %v3777
  %v4162 = vpop.f32.mrb[0].mxu0
  %v4163 = vadd.f32 0.0, %v4162
  %v4164 = vpop.f32.mrb[0].mxu0
  %4165 = vmatprep.mubr.f32.mxu0 0.0
  %4166 = vmatmul.mubr.f32.gmra.mrb[0].mxu0 %v3780
  %v4167 = vpop.f32.mrb[0].mxu0
  %v4168 = vadd.f32 0.0, %v4167
  %v4169 = vpop.f32.mrb[0].mxu0
  %4170 = vdwg.mxu0
  %4171 = vst.msk [vmem:[%s4] sm:$0xff] %vm287, %v17
  %4172 = vst.msk [vmem:[%s4 + $0x8] sm:$0xff] %vm287, %v18
  %4173 = vst.msk [vmem:[%s4 + $0x10] sm:$0xff] %vm287, %v19
  %4174 = vst.msk [vmem:[%s4 + $0x18] sm:$0xff] %vm287, %v20
  %4175 = vst.msk [vmem:[%s4 + $0x20] sm:$0xff] %vm287, %v21
  %4176 = vst.msk [vmem:[%s4 + $0x28] sm:$0xff] %vm287, %v22
  %4177 = vst.msk [vmem:[%s4 + $0x30] sm:$0xff] %vm287, %v23
  %4178 = vst.msk [vmem:[%s4 + $0x38] sm:$0xff] %vm287, %v24
  %4179 = vst.msk [vmem:[%s4 + $0x40] sm:$0xff] %vm287, %v25
  %4180 = vst.msk [vmem:[%s4 + $0x48] sm:$0xff] %vm287, %v26
  %4181 = vst.msk [vmem:[%s4 + $0x50] sm:$0xff] %vm287, %v27
  %4182 = vst.msk [vmem:[%s4 + $0x58] sm:$0xff] %vm287, %v28
  %4183 = vst.msk [vmem:[%s4 + $0x60] sm:$0xff] %vm287, %v29
  %4184 = vst.msk [vmem:[%s4 + $0x68] sm:$0xff] %vm287, %v30
  %4185 = vst.msk [vmem:[%s4 + $0x70] sm:$0xff] %vm287, %v31
  %4186 = vst.msk [vmem:[%s4 + $0x78] sm:$0xff] %vm287, %v32
  %4187 = vst.msk [vmem:[%s4 + $0x80] sm:$0xff] %vm287, %v33
  %4188 = vst.msk [vmem:[%s4 + $0x88] sm:$0xff] %vm287, %v34
  %4189 = vst.msk [vmem:[%s4 + $0x90] sm:$0xff] %vm287, %v35
  %4190 = vst.msk [vmem:[%s4 + $0x98] sm:$0xff] %vm287, %v36
  %4191 = vst.msk [vmem:[%s4 + $0xa0] sm:$0xff] %vm287, %v37
  %4192 = vst.msk [vmem:[%s4 + $0xa8] sm:$0xff] %vm287, %v38
  %4193 = vst.msk [vmem:[%s4 + $0xb0] sm:$0xff] %vm287, %v39
  %4194 = vst.msk [vmem:[%s4 + $0xb8] sm:$0xff] %vm287, %v40
  %4195 = vst.msk [vmem:[%s4 + $0xc0] sm:$0xff] %vm287, %v41
  %4196 = vst.msk [vmem:[%s4 + $0xc8] sm:$0xff] %vm287, %v42
  %4197 = vst.msk [vmem:[%s4 + $0xd0] sm:$0xff] %vm287, %v43
  %4198 = vst.msk [vmem:[%s4 + $0xd8] sm:$0xff] %vm287, %v44
  %4199 = vst.msk [vmem:[%s4 + $0xe0] sm:$0xff] %vm287, %v45
  %4200 = vst.msk [vmem:[%s4 + $0xe8] sm:$0xff] %vm287, %v46
  %4201 = vst.msk [vmem:[%s4 + $0xf0] sm:$0xff] %vm287, %v47
  %4202 = vst.msk [vmem:[%s4 + $0xf8] sm:$0xff] %vm287, %v48
  %4203 = vst.msk [vmem:[%s4 + $0x100] sm:$0xff] %vm287, %v49
  %4204 = vst.msk [vmem:[%s4 + $0x108] sm:$0xff] %vm287, %v50
  %4205 = vst.msk [vmem:[%s4 + $0x110] sm:$0xff] %vm287, %v51
  %4206 = vst.msk [vmem:[%s4 + $0x118] sm:$0xff] %vm287, %v52
  %4207 = vst.msk [vmem:[%s4 + $0x120] sm:$0xff] %vm287, %v53
  %4208 = vst.msk [vmem:[%s4 + $0x128] sm:$0xff] %vm287, %v54
  %4209 = vst.msk [vmem:[%s4 + $0x130] sm:$0xff] %vm287, %v55
  %4210 = vst.msk [vmem:[%s4 + $0x138] sm:$0xff] %vm287, %v56
  %4211 = vst.msk [vmem:[%s4 + $0x140] sm:$0xff] %vm287, %v57
  %4212 = vst.msk [vmem:[%s4 + $0x148] sm:$0xff] %vm287, %v58
  %4213 = vst.msk [vmem:[%s4 + $0x150] sm:$0xff] %vm287, %v59
  %4214 = vst.msk [vmem:[%s4 + $0x158] sm:$0xff] %vm287, %v60
  %4215 = vst.msk [vmem:[%s4 + $0x160] sm:$0xff] %vm287, %v61
  %4216 = vst.msk [vmem:[%s4 + $0x168] sm:$0xff] %vm287, %v62
  %4217 = vst.msk [vmem:[%s4 + $0x170] sm:$0xff] %vm287, %v63
  %4218 = vst.msk [vmem:[%s4 + $0x178] sm:$0xff] %vm287, %v64
  %4219 = vst.msk [vmem:[%s4 + $0x180] sm:$0xff] %vm287, %v65
  %4220 = vst.msk [vmem:[%s4 + $0x188] sm:$0xff] %vm287, %v66
  %4221 = vst.msk [vmem:[%s4 + $0x190] sm:$0xff] %vm287, %v67
  %4222 = vst.msk [vmem:[%s4 + $0x198] sm:$0xff] %vm287, %v68
  %4223 = vst.msk [vmem:[%s4 + $0x1a0] sm:$0xff] %vm287, %v69
  %4224 = vst.msk [vmem:[%s4 + $0x1a8] sm:$0xff] %vm287, %v70
  %4225 = vst.msk [vmem:[%s4 + $0x1b0] sm:$0xff] %vm287, %v71
  %4226 = vst.msk [vmem:[%s4 + $0x1b8] sm:$0xff] %vm287, %v72
  %4227 = vst.msk [vmem:[%s4 + $0x1c0] sm:$0xff] %vm287, %v73
  %4228 = vst.msk [vmem:[%s4 + $0x1c8] sm:$0xff] %vm287, %v74
  %4229 = vst.msk [vmem:[%s4 + $0x1d0] sm:$0xff] %vm287, %v75
  %4230 = vst.msk [vmem:[%s4 + $0x1d8] sm:$0xff] %vm287, %v76
  %4231 = vst.msk [vmem:[%s4 + $0x1e0] sm:$0xff] %vm287, %v77
  %4232 = vst.msk [vmem:[%s4 + $0x1e8] sm:$0xff] %vm287, %v78
  %4233 = vst.msk [vmem:[%s4 + $0x1f0] sm:$0xff] %vm287, %v79
  %4234 = vst.msk [vmem:[%s4 + $0x1f8] sm:$0xff] %vm287, %v80
  %4299 = vrot.lane.b32.xlu0 %v3853, 4
  %v4300 = vpop.permute.xlu0 %4299
  %4301 = vrot.lane.b32.xlu0 %v3858, 4
  %v4302 = vpop.permute.xlu0 %4301
  %4303 = vrot.lane.b32.xlu0 %v3863, 4
  %v4304 = vpop.permute.xlu0 %4303
  %4305 = vrot.lane.b32.xlu0 %v3868, 4
  %v4306 = vpop.permute.xlu0 %4305
  %4307 = vrot.lane.b32.xlu0 %v3873, 4
  %v4308 = vpop.permute.xlu0 %4307
  %4309 = vrot.lane.b32.xlu0 %v3878, 4
  %v4310 = vpop.permute.xlu0 %4309
  %4311 = vrot.lane.b32.xlu0 %v3883, 4
  %v4312 = vpop.permute.xlu0 %4311
  %4313 = vrot.lane.b32.xlu0 %v3888, 4
  %v4314 = vpop.permute.xlu0 %4313
  %4315 = vrot.lane.b32.xlu0 %v3893, 4
  %v4316 = vpop.permute.xlu0 %4315
  %4317 = vrot.lane.b32.xlu0 %v3898, 4
  %v4318 = vpop.permute.xlu0 %4317
  %4319 = vrot.lane.b32.xlu0 %v3903, 4
  %v4320 = vpop.permute.xlu0 %4319
  %4321 = vrot.lane.b32.xlu0 %v3908, 4
  %v4322 = vpop.permute.xlu0 %4321
  %4323 = vrot.lane.b32.xlu0 %v3913, 4
  %v4324 = vpop.permute.xlu0 %4323
  %4325 = vrot.lane.b32.xlu0 %v3918, 4
  %v4326 = vpop.permute.xlu0 %4325
  %4327 = vrot.lane.b32.xlu0 %v3923, 4
  %v4328 = vpop.permute.xlu0 %4327
  %4329 = vrot.lane.b32.xlu0 %v3928, 4
  %v4330 = vpop.permute.xlu0 %4329
  %4331 = vrot.lane.b32.xlu0 %v3933, 4
  %v4332 = vpop.permute.xlu0 %4331
  %4333 = vrot.lane.b32.xlu0 %v3938, 4
  %v4334 = vpop.permute.xlu0 %4333
  %4335 = vrot.lane.b32.xlu0 %v3943, 4
  %v4336 = vpop.permute.xlu0 %4335
  %4337 = vrot.lane.b32.xlu0 %v3948, 4
  %v4338 = vpop.permute.xlu0 %4337
  %4339 = vrot.lane.b32.xlu0 %v3953, 4
  %v4340 = vpop.permute.xlu0 %4339
  %4341 = vrot.lane.b32.xlu0 %v3958, 4
  %v4342 = vpop.permute.xlu0 %4341
  %4343 = vrot.lane.b32.xlu0 %v3963, 4
  %v4344 = vpop.permute.xlu0 %4343
  %4345 = vrot.lane.b32.xlu0 %v3968, 4
  %v4346 = vpop.permute.xlu0 %4345
  %4347 = vrot.lane.b32.xlu0 %v3973, 4
  %v4348 = vpop.permute.xlu0 %4347
  %4349 = vrot.lane.b32.xlu0 %v3978, 4
  %v4350 = vpop.permute.xlu0 %4349
  %4351 = vrot.lane.b32.xlu0 %v3983, 4
  %v4352 = vpop.permute.xlu0 %4351
  %4353 = vrot.lane.b32.xlu0 %v3988, 4
  %v4354 = vpop.permute.xlu0 %4353
  %4355 = vrot.lane.b32.xlu0 %v3993, 4
  %v4356 = vpop.permute.xlu0 %4355
  %4357 = vrot.lane.b32.xlu0 %v3998, 4
  %v4358 = vpop.permute.xlu0 %4357
  %4359 = vrot.lane.b32.xlu0 %v4003, 4
  %v4360 = vpop.permute.xlu0 %4359
  %4361 = vrot.lane.b32.xlu0 %v4008, 4
  %v4362 = vpop.permute.xlu0 %4361
  %4363 = vrot.lane.b32.xlu0 %v4013, 4
  %v4364 = vpop.permute.xlu0 %4363
  %4365 = vrot.lane.b32.xlu0 %v4018, 4
  %v4366 = vpop.permute.xlu0 %4365
  %4367 = vrot.lane.b32.xlu0 %v4023, 4
  %v4368 = vpop.permute.xlu0 %4367
  %4369 = vrot.lane.b32.xlu0 %v4028, 4
  %v4370 = vpop.permute.xlu0 %4369
  %4371 = vrot.lane.b32.xlu0 %v4033, 4
  %v4372 = vpop.permute.xlu0 %4371
  %4373 = vrot.lane.b32.xlu0 %v4038, 4
  %v4374 = vpop.permute.xlu0 %4373
  %4375 = vrot.lane.b32.xlu0 %v4043, 4
  %v4376 = vpop.permute.xlu0 %4375
  %4377 = vrot.lane.b32.xlu0 %v4048, 4
  %v4378 = vpop.permute.xlu0 %4377
  %4379 = vrot.lane.b32.xlu0 %v4053, 4
  %v4380 = vpop.permute.xlu0 %4379
  %4381 = vrot.lane.b32.xlu0 %v4058, 4
  %v4382 = vpop.permute.xlu0 %4381
  %4383 = vrot.lane.b32.xlu0 %v4063, 4
  %v4384 = vpop.permute.xlu0 %4383
  %4385 = vrot.lane.b32.xlu0 %v4068, 4
  %v4386 = vpop.permute.xlu0 %4385
  %4387 = vrot.lane.b32.xlu0 %v4073, 4
  %v4388 = vpop.permute.xlu0 %4387
  %4389 = vrot.lane.b32.xlu0 %v4078, 4
  %v4390 = vpop.permute.xlu0 %4389
  %4391 = vrot.lane.b32.xlu0 %v4083, 4
  %v4392 = vpop.permute.xlu0 %4391
  %4393 = vrot.lane.b32.xlu0 %v4088, 4
  %v4394 = vpop.permute.xlu0 %4393
  %4395 = vrot.lane.b32.xlu0 %v4093, 4
  %v4396 = vpop.permute.xlu0 %4395
  %4397 = vrot.lane.b32.xlu0 %v4098, 4
  %v4398 = vpop.permute.xlu0 %4397
  %4399 = vrot.lane.b32.xlu0 %v4103, 4
  %v4400 = vpop.permute.xlu0 %4399
  %4401 = vrot.lane.b32.xlu0 %v4108, 4
  %v4402 = vpop.permute.xlu0 %4401
  %4403 = vrot.lane.b32.xlu0 %v4113, 4
  %v4404 = vpop.permute.xlu0 %4403
  %4405 = vrot.lane.b32.xlu0 %v4118, 4
  %v4406 = vpop.permute.xlu0 %4405
  %4407 = vrot.lane.b32.xlu0 %v4123, 4
  %v4408 = vpop.permute.xlu0 %4407
  %4409 = vrot.lane.b32.xlu0 %v4128, 4
  %v4410 = vpop.permute.xlu0 %4409
  %4411 = vrot.lane.b32.xlu0 %v4133, 4
  %v4412 = vpop.permute.xlu0 %4411
  %4413 = vrot.lane.b32.xlu0 %v4138, 4
  %v4414 = vpop.permute.xlu0 %4413
  %4415 = vrot.lane.b32.xlu0 %v4143, 4
  %v4416 = vpop.permute.xlu0 %4415
  %4417 = vrot.lane.b32.xlu0 %v4148, 4
  %v4418 = vpop.permute.xlu0 %4417
  %4419 = vrot.lane.b32.xlu0 %v4153, 4
  %v4420 = vpop.permute.xlu0 %4419
  %4421 = vrot.lane.b32.xlu0 %v4158, 4
  %v4422 = vpop.permute.xlu0 %4421
  %4423 = vrot.lane.b32.xlu0 %v4163, 4
  %v4424 = vpop.permute.xlu0 %4423
  %4425 = vrot.lane.b32.xlu0 %v4168, 4
  %v4426 = vpop.permute.xlu0 %4425
  %vm4491 = vcmask 97312
  %4492 = vst.msk [vmem:[%s4] sm:$0xff] %vm4491, %v4300
  %4493 = vst.msk [vmem:[%s4 + $0x8] sm:$0xff] %vm4491, %v4302
  %4494 = vst.msk [vmem:[%s4 + $0x10] sm:$0xff] %vm4491, %v4304
  %4495 = vst.msk [vmem:[%s4 + $0x18] sm:$0xff] %vm4491, %v4306
  %4496 = vst.msk [vmem:[%s4 + $0x20] sm:$0xff] %vm4491, %v4308
  %4497 = vst.msk [vmem:[%s4 + $0x28] sm:$0xff] %vm4491, %v4310
  %4498 = vst.msk [vmem:[%s4 + $0x30] sm:$0xff] %vm4491, %v4312
  %4499 = vst.msk [vmem:[%s4 + $0x38] sm:$0xff] %vm4491, %v4314
  %4500 = vst.msk [vmem:[%s4 + $0x40] sm:$0xff] %vm4491, %v4316
  %4501 = vst.msk [vmem:[%s4 + $0x48] sm:$0xff] %vm4491, %v4318
  %4502 = vst.msk [vmem:[%s4 + $0x50] sm:$0xff] %vm4491, %v4320
  %4503 = vst.msk [vmem:[%s4 + $0x58] sm:$0xff] %vm4491, %v4322
  %4504 = vst.msk [vmem:[%s4 + $0x60] sm:$0xff] %vm4491, %v4324
  %4505 = vst.msk [vmem:[%s4 + $0x68] sm:$0xff] %vm4491, %v4326
  %4506 = vst.msk [vmem:[%s4 + $0x70] sm:$0xff] %vm4491, %v4328
  %4507 = vst.msk [vmem:[%s4 + $0x78] sm:$0xff] %vm4491, %v4330
  %4508 = vst.msk [vmem:[%s4 + $0x80] sm:$0xff] %vm4491, %v4332
  %4509 = vst.msk [vmem:[%s4 + $0x88] sm:$0xff] %vm4491, %v4334
  %4510 = vst.msk [vmem:[%s4 + $0x90] sm:$0xff] %vm4491, %v4336
  %4511 = vst.msk [vmem:[%s4 + $0x98] sm:$0xff] %vm4491, %v4338
  %4512 = vst.msk [vmem:[%s4 + $0xa0] sm:$0xff] %vm4491, %v4340
  %4513 = vst.msk [vmem:[%s4 + $0xa8] sm:$0xff] %vm4491, %v4342
  %4514 = vst.msk [vmem:[%s4 + $0xb0] sm:$0xff] %vm4491, %v4344
  %4515 = vst.msk [vmem:[%s4 + $0xb8] sm:$0xff] %vm4491, %v4346
  %4516 = vst.msk [vmem:[%s4 + $0xc0] sm:$0xff] %vm4491, %v4348
  %4517 = vst.msk [vmem:[%s4 + $0xc8] sm:$0xff] %vm4491, %v4350
  %4518 = vst.msk [vmem:[%s4 + $0xd0] sm:$0xff] %vm4491, %v4352
  %4519 = vst.msk [vmem:[%s4 + $0xd8] sm:$0xff] %vm4491, %v4354
  %4520 = vst.msk [vmem:[%s4 + $0xe0] sm:$0xff] %vm4491, %v4356
  %4521 = vst.msk [vmem:[%s4 + $0xe8] sm:$0xff] %vm4491, %v4358
  %4522 = vst.msk [vmem:[%s4 + $0xf0] sm:$0xff] %vm4491, %v4360
  %4523 = vst.msk [vmem:[%s4 + $0xf8] sm:$0xff] %vm4491, %v4362
  %4524 = vst.msk [vmem:[%s4 + $0x100] sm:$0xff] %vm4491, %v4364
  %4525 = vst.msk [vmem:[%s4 + $0x108] sm:$0xff] %vm4491, %v4366
  %4526 = vst.msk [vmem:[%s4 + $0x110] sm:$0xff] %vm4491, %v4368
  %4527 = vst.msk [vmem:[%s4 + $0x118] sm:$0xff] %vm4491, %v4370
  %4528 = vst.msk [vmem:[%s4 + $0x120] sm:$0xff] %vm4491, %v4372
  %4529 = vst.msk [vmem:[%s4 + $0x128] sm:$0xff] %vm4491, %v4374
  %4530 = vst.msk [vmem:[%s4 + $0x130] sm:$0xff] %vm4491, %v4376
  %4531 = vst.msk [vmem:[%s4 + $0x138] sm:$0xff] %vm4491, %v4378
  %4532 = vst.msk [vmem:[%s4 + $0x140] sm:$0xff] %vm4491, %v4380
  %4533 = vst.msk [vmem:[%s4 + $0x148] sm:$0xff] %vm4491, %v4382
  %4534 = vst.msk [vmem:[%s4 + $0x150] sm:$0xff] %vm4491, %v4384
  %4535 = vst.msk [vmem:[%s4 + $0x158] sm:$0xff] %vm4491, %v4386
  %4536 = vst.msk [vmem:[%s4 + $0x160] sm:$0xff] %vm4491, %v4388
  %4537 = vst.msk [vmem:[%s4 + $0x168] sm:$0xff] %vm4491, %v4390
  %4538 = vst.msk [vmem:[%s4 + $0x170] sm:$0xff] %vm4491, %v4392
  %4539 = vst.msk [vmem:[%s4 + $0x178] sm:$0xff] %vm4491, %v4394
  %4540 = vst.msk [vmem:[%s4 + $0x180] sm:$0xff] %vm4491, %v4396
  %4541 = vst.msk [vmem:[%s4 + $0x188] sm:$0xff] %vm4491, %v4398
  %4542 = vst.msk [vmem:[%s4 + $0x190] sm:$0xff] %vm4491, %v4400
  %4543 = vst.msk [vmem:[%s4 + $0x198] sm:$0xff] %vm4491, %v4402
  %4544 = vst.msk [vmem:[%s4 + $0x1a0] sm:$0xff] %vm4491, %v4404
  %4545 = vst.msk [vmem:[%s4 + $0x1a8] sm:$0xff] %vm4491, %v4406
  %4546 = vst.msk [vmem:[%s4 + $0x1b0] sm:$0xff] %vm4491, %v4408
  %4547 = vst.msk [vmem:[%s4 + $0x1b8] sm:$0xff] %vm4491, %v4410
  %4548 = vst.msk [vmem:[%s4 + $0x1c0] sm:$0xff] %vm4491, %v4412
  %4549 = vst.msk [vmem:[%s4 + $0x1c8] sm:$0xff] %vm4491, %v4414
  %4550 = vst.msk [vmem:[%s4 + $0x1d0] sm:$0xff] %vm4491, %v4416
  %4551 = vst.msk [vmem:[%s4 + $0x1d8] sm:$0xff] %vm4491, %v4418
  %4552 = vst.msk [vmem:[%s4 + $0x1e0] sm:$0xff] %vm4491, %v4420
  %4553 = vst.msk [vmem:[%s4 + $0x1e8] sm:$0xff] %vm4491, %v4422
  %4554 = vst.msk [vmem:[%s4 + $0x1f0] sm:$0xff] %vm4491, %v4424
  %4555 = vst.msk [vmem:[%s4 + $0x1f8] sm:$0xff] %vm4491, %v4426
  // Predicated region
  $region18: #{tpu_custom_call.1} parent=0 // pred_check
    _
  $region19: #{tpu_custom_call.1} parent=0 // pred_check_branch
    %4557 = sbr.rel (0) target = $region21
  $region20: #{tpu_custom_call.1} parent=0 // pred_region
    _
  $region21: #{tpu_custom_call.1} parent=0 // pred_fallthru
    _
  // Predicated region
  $region22: #{tpu_custom_call.1} parent=0 // pred_check
    _
  $region23: #{tpu_custom_call.1} parent=0 // pred_check_branch
    %4559 = sbr.rel (0) target = $region25
  $region24: #{tpu_custom_call.1} parent=0 // pred_region
    _
  $region25: #{tpu_custom_call.1} parent=0 // pred_fallthru
    _

</llo_original>
